<compile_context>
chip_gen: v6e
topology: v6e:2x2x1
jax: 0.10.0
libtpu: 0.0.40
codegen_flags: <defaults>
</compile_context>

<pallas_src>
import jax
import jax.numpy as jnp
from jax.experimental import pallas as pl
from jax.experimental.pallas import tpu as pltpu

EPS = 1e-5
VMEM_LIMIT = 48 * 1024 * 1024   # fits v7x's 64 MiB physical VMEM with headroom


def _pick_row_tile(h):
    """Largest divisor of h that is <= min(32, h//2) -> >=2 row tiles when possible."""
    cap = 32 if h >= 64 else max(h // 2, 1)
    th = 1
    for d in range(1, h + 1):
        if h % d == 0 and d <= cap:
            th = d
    return th


# ----------------------------------------------------------------------------
# In-kernel helpers (operate purely on VMEM-resident values)
# ----------------------------------------------------------------------------
def _pad_tile(main, top, bot):
    """main (TH,W,C), top/bot (1,W,C) halo rows -> (TH+2, W+2, C) zero-side-padded."""
    x = jnp.concatenate([top, main, bot], axis=0)
    th2, _, c = x.shape
    zc = jnp.zeros((th2, 1, c), x.dtype)
    return jnp.concatenate([zc, x, zc], axis=1)


def _im2col(xp, th, w):
    """(TH+2, W+2, C) padded tile -> (TH*W, 9*C) deep-K patch matrix."""
    c = xp.shape[-1]
    cols = [xp[dy:dy + th, dx:dx + w, :].reshape(th * w, c)
            for dy in range(3) for dx in range(3)]
    return jnp.concatenate(cols, axis=-1)


# ----------------------------------------------------------------------------
# Pallas kernels
# ----------------------------------------------------------------------------
def _convt_kernel(x_ref, w_ref, b_ref, o_ref):
    # x: (1, TH0, W, Cin) f32   w: (Cin, 4*Co2) bf16   b: (1, 4*Co2) f32
    # o: (TH0, 2, W, 2*Co2) bf16 -- layout-identical to the NHWC output rows.
    th0, _, w_, c2 = o_ref.shape
    cin = x_ref.shape[-1]
    xm = x_ref[0].reshape(th0 * w_, cin).astype(jnp.bfloat16)
    y = jnp.dot(xm, w_ref[...], preferred_element_type=jnp.float32) + b_ref[...]
    y = y.reshape(th0, w_, 2 * c2)                  # columns ordered (dh, dw*Co2+co)
    o_ref[:, 0, :, :] = y[:, :, :c2].astype(o_ref.dtype)    # dh = 0 rows
    o_ref[:, 1, :, :] = y[:, :, c2:].astype(o_ref.dtype)    # dh = 1 rows


def _conv1_kernel(upm, upt, upb, skm, skt, skb, w_ref, y_ref, s_ref, ss_ref):
    # Conv3x3 'same' over the implicit channel-concat (up || skip) for one row
    # tile: a single deep-K bf16 MXU dot, plus BN1 partial statistics.
    # No conv bias (exactly cancelled by training-mode BN).
    _, th, w2, cm = y_ref.shape
    main = jnp.concatenate([upm[0], skm[0]], axis=-1)        # (TH, W2, Cu+Cs) bf16
    top = jnp.concatenate([upt[0], skt[0]], axis=-1)         # (1,  W2, Cu+Cs)
    bot = jnp.concatenate([upb[0], skb[0]], axis=-1)
    patch = _im2col(_pad_tile(main, top, bot), th, w2)        # (TH*W2, 9*(Cu+Cs))
    acc = jnp.dot(patch, w_ref[...], preferred_element_type=jnp.float32)
    y_ref[0] = acc.reshape(th, w2, cm).astype(y_ref.dtype)
    s_ref[0, 0] = jnp.sum(acc, axis=0, keepdims=True)
    ss_ref[0, 0] = jnp.sum(acc * acc, axis=0, keepdims=True)


def _conv2_kernel(ym, yt, yb, sc_ref, sh_ref, w_ref, y_ref, s_ref, ss_ref):
    # Fused: BN1+ReLU applied while reading layer-1's raw output, then Conv3x3
    # 'same' (layer 2) + BN2 partial statistics.  Halo rows (yt/yb) arrive
    # already BN'd (zero rows at the image border stay zero = 'same' padding).
    _, th, w2, co = y_ref.shape
    h = jnp.maximum(ym[0].astype(jnp.float32) * sc_ref[...] + sh_ref[...], 0.0)
    h = h.astype(jnp.bfloat16)
    patch = _im2col(_pad_tile(h, yt[0], yb[0]), th, w2)       # (TH*W2, 9*Cm) bf16
    acc = jnp.dot(patch, w_ref[...], preferred_element_type=jnp.float32)
    y_ref[0] = acc.reshape(th, w2, co).astype(y_ref.dtype)
    s_ref[0, 0] = jnp.sum(acc, axis=0, keepdims=True)
    ss_ref[0, 0] = jnp.sum(acc * acc, axis=0, keepdims=True)


def _bnrelu_kernel(x_ref, sc_ref, sh_ref, o_ref):
    # Final BN2 + ReLU2 pass (needs global batch stats -> one extra pass).
    o_ref[...] = jnp.maximum(
        x_ref[...].astype(jnp.float32) * sc_ref[...] + sh_ref[...], 0.0)


# ----------------------------------------------------------------------------
# pallas_call wrappers
# ----------------------------------------------------------------------------
def conv_transpose_2x2_s2(x_nhwc, w, b):
    """ConvTranspose2d(kernel=2, stride=2) with bias; NHWC f32 in, NHWC bf16 out.

    Output buffer (N*H, 2, W, 2*Co2) has the same row-major layout as NHWC
    (N, 2H, 2W, Co2); the wrapper reshape is a free bitcast.
    """
    n, h, w_, cin = x_nhwc.shape
    co2 = w.shape[1]
    # wt[ci, (dh*2+dw)*Co2 + co] = w[ci, co, dh, dw]
    wt = jnp.transpose(w, (0, 2, 3, 1)).reshape(cin, 4 * co2).astype(jnp.bfloat16)
    bt = jnp.tile(b, 4).reshape(1, 4 * co2).astype(jnp.float32)
    th0 = _pick_row_tile(h)
    r0 = h // th0

    out = pl.pallas_call(
        _convt_kernel,
        out_shape=jax.ShapeDtypeStruct((n * h, 2, w_, 2 * co2), jnp.bfloat16),
        grid_spec=pltpu.PrefetchScalarGridSpec(
            num_scalar_prefetch=0,
            grid=(n, r0),
            in_specs=[
                pl.BlockSpec((1, th0, w_, cin), lambda i, r: (i, r, 0, 0)),
                pl.BlockSpec((cin, 4 * co2), lambda i, r: (0, 0)),
                pl.BlockSpec((1, 4 * co2), lambda i, r: (0, 0)),
            ],
            out_specs=pl.BlockSpec((th0, 2, w_, 2 * co2),
                                   lambda i, r: (i * r0 + r, 0, 0, 0)),
        ),
        compiler_params=pltpu.CompilerParams(
            dimension_semantics=("parallel", "parallel"),
            vmem_limit_bytes=VMEM_LIMIT),
    )(x_nhwc, wt, bt)
    return out.reshape(n, 2 * h, 2 * w_, co2)


def _conv_w_slab(w):
    """PyTorch Conv2d weight (Cout, Cin, 3, 3) -> bf16 im2col slab (9*Cin, Cout)."""
    return jnp.transpose(w, (2, 3, 1, 0)).reshape(-1, w.shape[0]).astype(jnp.bfloat16)


def _make_halos(x, th):
    """Per-row-tile halo rows: top[n,r]=x[n,r*th-1], bot[n,r]=x[n,(r+1)*th];
    rows outside the image are zero (the 'same' padding rows)."""
    n, h, w, c = x.shape
    r = h // th
    z = jnp.zeros((n, 1, w, c), x.dtype)
    if r == 1:
        return z, z
    top = jnp.concatenate([z, x[:, th - 1::th][:, :r - 1]], axis=1)
    bot = jnp.concatenate([x[:, th::th][:, :r - 1], z], axis=1)
    return top, bot


def _bn_halos(y1, th, sc, sh):
    """Conv2 halo rows, already passed through BN1+ReLU (border rows stay zero)."""
    n, h, w, c = y1.shape
    r = h // th
    z = jnp.zeros((n, 1, w, c), jnp.bfloat16)
    if r == 1:
        return z, z
    s4 = sc.reshape(1, 1, 1, -1)
    b4 = sh.reshape(1, 1, 1, -1)

    def bn(v):
        return jnp.maximum(v.astype(jnp.float32) * s4 + b4, 0.0).astype(jnp.bfloat16)

    top = jnp.concatenate([z, bn(y1[:, th - 1::th][:, :r - 1])], axis=1)
    bot = jnp.concatenate([bn(y1[:, th::th][:, :r - 1]), z], axis=1)
    return top, bot


def conv1_cat_stats(up, up_ht, up_hb, sk, sk_ht, sk_hb, w_slab, th):
    n, h2, w2, cu = up.shape
    cs = sk.shape[-1]
    cm = w_slab.shape[-1]
    r = h2 // th
    return pl.pallas_call(
        _conv1_kernel,
        out_shape=(
            jax.ShapeDtypeStruct((n, h2, w2, cm), jnp.bfloat16),
            jax.ShapeDtypeStruct((n, r, 1, cm), jnp.float32),
            jax.ShapeDtypeStruct((n, r, 1, cm), jnp.float32),
        ),
        grid_spec=pltpu.PrefetchScalarGridSpec(
            num_scalar_prefetch=0,
            grid=(n, r),
            in_specs=[
                pl.BlockSpec((1, th, w2, cu), lambda i, j: (i, j, 0, 0)),
                pl.BlockSpec((1, 1, w2, cu), lambda i, j: (i, j, 0, 0)),
                pl.BlockSpec((1, 1, w2, cu), lambda i, j: (i, j, 0, 0)),
                pl.BlockSpec((1, th, w2, cs), lambda i, j: (i, j, 0, 0)),
                pl.BlockSpec((1, 1, w2, cs), lambda i, j: (i, j, 0, 0)),
                pl.BlockSpec((1, 1, w2, cs), lambda i, j: (i, j, 0, 0)),
                pl.BlockSpec((9 * (cu + cs), cm), lambda i, j: (0, 0)),
            ],
            out_specs=(
                pl.BlockSpec((1, th, w2, cm), lambda i, j: (i, j, 0, 0)),
                pl.BlockSpec((1, 1, 1, cm), lambda i, j: (i, j, 0, 0)),
                pl.BlockSpec((1, 1, 1, cm), lambda i, j: (i, j, 0, 0)),
            ),
        ),
        compiler_params=pltpu.CompilerParams(
            dimension_semantics=("parallel", "parallel"),
            vmem_limit_bytes=VMEM_LIMIT),
    )(up, up_ht, up_hb, sk, sk_ht, sk_hb, w_slab)


def bnrelu_conv_stats(y1, y1_ht, y1_hb, sc1, sh1, w_slab, th):
    n, h2, w2, cm = y1.shape
    co = w_slab.shape[-1]
    r = h2 // th
    return pl.pallas_call(
        _conv2_kernel,
        out_shape=(
            jax.ShapeDtypeStruct((n, h2, w2, co), jnp.bfloat16),
            jax.ShapeDtypeStruct((n, r, 1, co), jnp.float32),
            jax.ShapeDtypeStruct((n, r, 1, co), jnp.float32),
        ),
        grid_spec=pltpu.PrefetchScalarGridSpec(
            num_scalar_prefetch=0,
            grid=(n, r),
            in_specs=[
                pl.BlockSpec((1, th, w2, cm), lambda i, j: (i, j, 0, 0)),
                pl.BlockSpec((1, 1, w2, cm), lambda i, j: (i, j, 0, 0)),
                pl.BlockSpec((1, 1, w2, cm), lambda i, j: (i, j, 0, 0)),
                pl.BlockSpec((1, cm), lambda i, j: (0, 0)),
                pl.BlockSpec((1, cm), lambda i, j: (0, 0)),
                pl.BlockSpec((9 * cm, co), lambda i, j: (0, 0)),
            ],
            out_specs=(
                pl.BlockSpec((1, th, w2, co), lambda i, j: (i, j, 0, 0)),
                pl.BlockSpec((1, 1, 1, co), lambda i, j: (i, j, 0, 0)),
                pl.BlockSpec((1, 1, 1, co), lambda i, j: (i, j, 0, 0)),
            ),
        ),
        compiler_params=pltpu.CompilerParams(
            dimension_semantics=("parallel", "parallel"),
            vmem_limit_bytes=VMEM_LIMIT),
    )(y1, y1_ht, y1_hb, sc1, sh1, w_slab)


def bn_relu(x, scale, shift, th):
    n, h2, w2, c = x.shape
    r = h2 // th
    return pl.pallas_call(
        _bnrelu_kernel,
        out_shape=jax.ShapeDtypeStruct((n, h2, w2, c), jnp.float32),
        grid_spec=pltpu.PrefetchScalarGridSpec(
            num_scalar_prefetch=0,
            grid=(n, r),
            in_specs=[
                pl.BlockSpec((1, th, w2, c), lambda i, j: (i, j, 0, 0)),
                pl.BlockSpec((1, c), lambda i, j: (0, 0)),
                pl.BlockSpec((1, c), lambda i, j: (0, 0)),
            ],
            out_specs=pl.BlockSpec((1, th, w2, c), lambda i, j: (i, j, 0, 0)),
        ),
        compiler_params=pltpu.CompilerParams(
            dimension_semantics=("parallel", "parallel"),
            vmem_limit_bytes=VMEM_LIMIT),
    )(x, scale, shift)


# ----------------------------------------------------------------------------
# JAX glue (tiny (1,C) stat math, halo-row extraction, interface transposes)
# ----------------------------------------------------------------------------
def _bn_scale_shift(s, ss, gamma, beta, count):
    # s, ss: (N, R, 1, C) per-tile partial sums -> global train-mode BN affine.
    mean = jnp.sum(s, axis=(0, 1)) / count                 # (1, C)
    ex2 = jnp.sum(ss, axis=(0, 1)) / count
    var = jnp.maximum(ex2 - mean * mean, 0.0)              # biased var, clamped
    scale = gamma.reshape(1, -1) * jax.lax.rsqrt(var + EPS)
    shift = beta.reshape(1, -1) - mean * scale
    return scale, shift


def decoder_block_forward(x_nchw, skip_nchw, params):
    # TODO(synk): fuse these NCHW<->NHWC transposes into the conv-transpose /
    # final BN kernels (requires an in-kernel 3-D transpose).
    x = jnp.transpose(x_nchw, (0, 2, 3, 1)).astype(jnp.float32)        # NHWC
    skip = jnp.transpose(skip_nchw, (0, 2, 3, 1)).astype(jnp.bfloat16)

    # upsample (ConvTranspose2d 2x2 s2) -> NHWC bf16, no HBM re-layout pass
    up = conv_transpose_2x2_s2(x, params["up_w"], params["up_b"])
    n, h2, w2, _ = up.shape
    count = n * h2 * w2
    th = _pick_row_tile(h2)

    # conv1 over the (up || skip) channel concat (never materialized in HBM),
    # single merged deep-K dot, row-tiled with +1-row halos.
    w1 = _conv_w_slab(params["c1_w"])
    up_ht, up_hb = _make_halos(up, th)
    sk_ht, sk_hb = _make_halos(skip, th)
    y1, s1, ss1 = conv1_cat_stats(up, up_ht, up_hb, skip, sk_ht, sk_hb, w1, th)
    sc1, sh1 = _bn_scale_shift(s1, ss1, params["bn1_g"], params["bn1_b"], count)

    # conv2: BN1+ReLU fused into its read; emits BN2 partial statistics.
    w2 = _conv_w_slab(params["c2_w"])
    y1_ht, y1_hb = _bn_halos(y1, th, sc1, sh1)
    y2, s2, ss2 = bnrelu_conv_stats(y1, y1_ht, y1_hb, sc1, sh1, w2, th)
    sc2, sh2 = _bn_scale_shift(s2, ss2, params["bn2_g"], params["bn2_b"], count)

    out = bn_relu(y2, sc2, sh2, th)                                    # f32 NHWC
    return jnp.transpose(out, (0, 3, 1, 2))                            # NCHW


def init_params(key, in_channels, out_channels, mid_channels=None):
    if mid_channels is None:
        mid_channels = out_channels
    co2 = in_channels // 2
    ks = jax.random.split(key, 6)

    def u(k, shape, fan_in):
        bound = 1.0 / (fan_in ** 0.5)
        return jax.random.uniform(k, shape, jnp.float32, -bound, bound)

    return {
        "up_w": u(ks[0], (in_channels, co2, 2, 2), in_channels * 4),
        "up_b": u(ks[1], (co2,), in_channels * 4),
        "c1_w": u(ks[2], (mid_channels, in_channels, 3, 3), in_channels * 9),
        "c1_b": u(ks[3], (mid_channels,), in_channels * 9),   # unused by kernels
        "bn1_g": jnp.ones((mid_channels,), jnp.float32),
        "bn1_b": jnp.zeros((mid_channels,), jnp.float32),
        "c2_w": u(ks[4], (out_channels, mid_channels, 3, 3), mid_channels * 9),
        "c2_b": u(ks[5], (out_channels,), mid_channels * 9),  # unused by kernels
        "bn2_g": jnp.ones((out_channels,), jnp.float32),
        "bn2_b": jnp.zeros((out_channels,), jnp.float32),
    }


# ----------------------------------------------------------------------------
# Pure-JAX f32 reference (includes the conv biases; they cancel under train BN)
# ----------------------------------------------------------------------------
def _reference_forward(x_nchw, skip_nchw, params):
    hp_prec = jax.lax.Precision.HIGHEST
    x = jnp.transpose(x_nchw, (0, 2, 3, 1)).astype(jnp.float32)
    skip = jnp.transpose(skip_nchw, (0, 2, 3, 1)).astype(jnp.float32)
    N, H, W, _ = x.shape
    Co2 = params["up_w"].shape[1]

    up = jnp.einsum("nhwi,iodv->nhdwvo", x, params["up_w"], precision=hp_prec)
    up = up.reshape(N, 2 * H, 2 * W, Co2) + params["up_b"]
    cat = jnp.concatenate([up, skip], axis=-1)

    def conv_bn_relu(h, w, b, g, beta):
        Hh, Ww = h.shape[1], h.shape[2]
        hp = jnp.pad(h, ((0, 0), (1, 1), (1, 1), (0, 0)))
        out = jnp.zeros(h.shape[:3] + (w.shape[0],), jnp.float32)
        for dy in range(3):
            for dx in range(3):
                out = out + jnp.einsum(
                    "nhwc,oc->nhwo",
                    hp[:, dy:dy + Hh, dx:dx + Ww, :],
                    w[:, :, dy, dx],
                    precision=hp_prec,
                )
        out = out + b
        mean = out.mean(axis=(0, 1, 2))
        var = out.var(axis=(0, 1, 2))          # biased (train-mode BN)
        out = (out - mean) * jax.lax.rsqrt(var + EPS) * g + beta
        return jnp.maximum(out, 0.0)

    h = conv_bn_relu(cat, params["c1_w"], params["c1_b"],
                     params["bn1_g"], params["bn1_b"])
    h = conv_bn_relu(h, params["c2_w"], params["c2_b"],
                     params["bn2_g"], params["bn2_b"])
    return jnp.transpose(h, (0, 3, 1, 2))


if __name__ == "__main__":
    key = jax.random.PRNGKey(0)
    kx, ksk, kp = jax.random.split(key, 3)

    in_channels, out_channels = 8, 8
    N, H, W = 2, 8, 8  # x is (N, in_ch, H, W); skip is (N, in_ch//2, 2H, 2W)

    x = jax.random.normal(kx, (N, in_channels, H, W), jnp.float32)
    skip = jax.random.normal(ksk, (N, in_channels // 2, 2 * H, 2 * W), jnp.float32)
    params = init_params(kp, in_channels, out_channels)

    out = jax.jit(decoder_block_forward)(x, skip, params)
    jax.block_until_ready(out)
    assert out.shape == (N, out_channels, 2 * H, 2 * W), out.shape
    assert bool(jnp.all(out >= 0.0))  # final ReLU

    ref = _reference_forward(x, skip, params)
    err = float(jnp.max(jnp.abs(out - ref)))
    # bf16 MXU operands + bf16 HBM intermediates bound abs error to ~1e-2;
    # genuine kernel bugs (halo/BN/layout) produce O(1) errors.
    assert err < 1e-1, f"max abs err vs reference: {err}"
    print("KERNEL_OK")
</pallas_src>

<mosaic_0001>
module attributes {stable_mosaic.version = 11 : i64} {
  func.func @_convt_kernel(%arg0: i32, %arg1: i32, %arg2: memref<1x4x8x8xf32, #tpu.memory_space<vmem>>, %arg3: memref<8x16xbf16, #tpu.memory_space<vmem>>, %arg4: memref<1x16xf32, #tpu.memory_space<vmem>>, %arg5: memref<4x2x8x8xbf16, #tpu.memory_space<vmem>>) attributes {dimension_semantics = [#tpu.dimension_semantics<parallel>, #tpu.dimension_semantics<parallel>], iteration_bounds = array<i64: 2, 2>, scalar_prefetch = 0 : i64, scratch_operands = 0 : i64, tpu.core_type = #tpu.core_type<tc>, window_params = [{transform_indices = @transform_0, window_bounds = array<i64: 1, 4, 8, 8>}, {pipeline_mode = #tpu.pipeline_mode<synchronous>, transform_indices = @transform_1, window_bounds = array<i64: 8, 16>}, {pipeline_mode = #tpu.pipeline_mode<synchronous>, transform_indices = @transform_2, window_bounds = array<i64: 1, 16>}, {transform_indices = @transform_3, window_bounds = array<i64: 4, 2, 8, 8>}]} {
    %c0 = arith.constant 0 : index
    %c0_0 = arith.constant 0 : index
    %c0_1 = arith.constant 0 : index
    %c0_2 = arith.constant 0 : index
    %0 = vector.load %arg2[%c0, %c0_0, %c0_1, %c0_2] : memref<1x4x8x8xf32, #tpu.memory_space<vmem>>, vector<1x4x8x8xf32>
    %1 = vector.shape_cast %0 : vector<1x4x8x8xf32> to vector<4x8x8xf32>
    %2 = vector.shape_cast %1 : vector<4x8x8xf32> to vector<32x8xf32>
    %3 = arith.truncf %2 : vector<32x8xf32> to vector<32x8xbf16>
    %c0_3 = arith.constant 0 : index
    %c0_4 = arith.constant 0 : index
    %4 = vector.load %arg3[%c0_3, %c0_4] : memref<8x16xbf16, #tpu.memory_space<vmem>>, vector<8x16xbf16>
    %cst = arith.constant dense<0.000000e+00> : vector<32x16xf32>
    %5 = tpu.matmul %3, %4, %cst {dimension_numbers = #tpu.dot_dimension_numbers<[1], [0], [0], [1], [0, 0, 1, 1], [], []>} : vector<32x8xbf16>, vector<8x16xbf16>, vector<32x16xf32> -> vector<32x16xf32>
    %c0_5 = arith.constant 0 : index
    %c0_6 = arith.constant 0 : index
    %6 = vector.load %arg4[%c0_5, %c0_6] : memref<1x16xf32, #tpu.memory_space<vmem>>, vector<1x16xf32>
    %7 = vector.broadcast %6 : vector<1x16xf32> to vector<32x16xf32>
    %8 = arith.addf %5, %7 : vector<32x16xf32>
    %9 = vector.shape_cast %8 : vector<32x16xf32> to vector<4x8x16xf32>
    %10 = vector.extract_strided_slice %9 {offsets = [0, 0, 0], sizes = [4, 8, 8], strides = [1, 1, 1]} : vector<4x8x16xf32> to vector<4x8x8xf32>
    %11 = arith.truncf %10 : vector<4x8x8xf32> to vector<4x8x8xbf16>
    %c0_7 = arith.constant 0 : index
    %c0_8 = arith.constant 0 : index
    %c0_9 = arith.constant 0 : index
    %c0_10 = arith.constant 0 : index
    %12 = vector.load %arg5[%c0_7, %c0_8, %c0_9, %c0_10] : memref<4x2x8x8xbf16, #tpu.memory_space<vmem>>, vector<4x1x8x8xbf16>
    %13 = vector.shape_cast %12 : vector<4x1x8x8xbf16> to vector<4x8x8xbf16>
    %14 = vector.shape_cast %11 : vector<4x8x8xbf16> to vector<4x1x8x8xbf16>
    tpu.vector_store %arg5[%c0_7, %c0_8, %c0_9, %c0_10], %14 {strides = array<i32>} : memref<4x2x8x8xbf16, #tpu.memory_space<vmem>>, vector<4x1x8x8xbf16>,
    %15 = vector.extract_strided_slice %9 {offsets = [0, 0, 8], sizes = [4, 8, 8], strides = [1, 1, 1]} : vector<4x8x16xf32> to vector<4x8x8xf32>
    %16 = arith.truncf %15 : vector<4x8x8xf32> to vector<4x8x8xbf16>
    %c0_11 = arith.constant 0 : index
    %c1 = arith.constant 1 : index
    %c0_12 = arith.constant 0 : index
    %c0_13 = arith.constant 0 : index
    %17 = vector.load %arg5[%c0_11, %c1, %c0_12, %c0_13] : memref<4x2x8x8xbf16, #tpu.memory_space<vmem>>, vector<4x1x8x8xbf16>
    %18 = vector.shape_cast %17 : vector<4x1x8x8xbf16> to vector<4x8x8xbf16>
    %19 = vector.shape_cast %16 : vector<4x8x8xbf16> to vector<4x1x8x8xbf16>
    tpu.vector_store %arg5[%c0_11, %c1, %c0_12, %c0_13], %19 {strides = array<i32>} : memref<4x2x8x8xbf16, #tpu.memory_space<vmem>>, vector<4x1x8x8xbf16>,
    return
  }
  func.func @transform_0(%arg0: i32, %arg1: i32) -> (i32, i32, i32, i32) {
    %c0_i32 = arith.constant 0 : i32
    %c0_i32_0 = arith.constant 0 : i32
    %c0_i32_1 = arith.constant 0 : i32
    return %arg0, %arg1, %c0_i32, %c0_i32_0 : i32, i32, i32, i32
  }
  func.func @transform_1(%arg0: i32, %arg1: i32) -> (i32, i32) {
    %c0_i32 = arith.constant 0 : i32
    %c0_i32_0 = arith.constant 0 : i32
    %c0_i32_1 = arith.constant 0 : i32
    return %c0_i32, %c0_i32_0 : i32, i32
  }
  func.func @transform_2(%arg0: i32, %arg1: i32) -> (i32, i32) {
    %c0_i32 = arith.constant 0 : i32
    %c0_i32_0 = arith.constant 0 : i32
    %c0_i32_1 = arith.constant 0 : i32
    return %c0_i32, %c0_i32_0 : i32, i32
  }
  func.func @transform_3(%arg0: i32, %arg1: i32) -> (i32, i32, i32, i32) {
    %c2_i32 = arith.constant 2 : i32
    %0 = arith.muli %arg0, %c2_i32 : i32
    %1 = arith.addi %0, %arg1 : i32
    %c0_i32 = arith.constant 0 : i32
    %c0_i32_0 = arith.constant 0 : i32
    %c0_i32_1 = arith.constant 0 : i32
    %c0_i32_2 = arith.constant 0 : i32
    return %1, %c0_i32, %c0_i32_0, %c0_i32_1 : i32, i32, i32, i32
  }
}

module attributes {stable_mosaic.version = 11 : i64} {
  func.func @_conv1_kernel(%arg0: i32, %arg1: i32, %arg2: memref<1x8x16x4xbf16, #tpu.memory_space<vmem>>, %arg3: memref<1x1x16x4xbf16, #tpu.memory_space<vmem>>, %arg4: memref<1x1x16x4xbf16, #tpu.memory_space<vmem>>, %arg5: memref<1x8x16x4xbf16, #tpu.memory_space<vmem>>, %arg6: memref<1x1x16x4xbf16, #tpu.memory_space<vmem>>, %arg7: memref<1x1x16x4xbf16, #tpu.memory_space<vmem>>, %arg8: memref<72x8xbf16, #tpu.memory_space<vmem>>, %arg9: memref<1x8x16x8xbf16, #tpu.memory_space<vmem>>, %arg10: memref<1x1x1x8xf32, #tpu.memory_space<vmem>>, %arg11: memref<1x1x1x8xf32, #tpu.memory_space<vmem>>) attributes {dimension_semantics = [#tpu.dimension_semantics<parallel>, #tpu.dimension_semantics<parallel>], iteration_bounds = array<i64: 2, 2>, scalar_prefetch = 0 : i64, scratch_operands = 0 : i64, tpu.core_type = #tpu.core_type<tc>, window_params = [{transform_indices = @transform_0, window_bounds = array<i64: 1, 8, 16, 4>}, {transform_indices = @transform_1, window_bounds = array<i64: 1, 1, 16, 4>}, {transform_indices = @transform_2, window_bounds = array<i64: 1, 1, 16, 4>}, {transform_indices = @transform_3, window_bounds = array<i64: 1, 8, 16, 4>}, {transform_indices = @transform_4, window_bounds = array<i64: 1, 1, 16, 4>}, {transform_indices = @transform_5, window_bounds = array<i64: 1, 1, 16, 4>}, {pipeline_mode = #tpu.pipeline_mode<synchronous>, transform_indices = @transform_6, window_bounds = array<i64: 72, 8>}, {transform_indices = @transform_7, window_bounds = array<i64: 1, 8, 16, 8>}, {transform_indices = @transform_8, window_bounds = array<i64: 1, 1, 1, 8>}, {transform_indices = @transform_9, window_bounds = array<i64: 1, 1, 1, 8>}]} {
    %c0 = arith.constant 0 : index
    %c0_0 = arith.constant 0 : index
    %c0_1 = arith.constant 0 : index
    %c0_2 = arith.constant 0 : index
    %0 = vector.load %arg2[%c0, %c0_0, %c0_1, %c0_2] : memref<1x8x16x4xbf16, #tpu.memory_space<vmem>>, vector<1x8x16x4xbf16>
    %1 = vector.shape_cast %0 : vector<1x8x16x4xbf16> to vector<8x16x4xbf16>
    %c0_3 = arith.constant 0 : index
    %c0_4 = arith.constant 0 : index
    %c0_5 = arith.constant 0 : index
    %c0_6 = arith.constant 0 : index
    %2 = vector.load %arg5[%c0_3, %c0_4, %c0_5, %c0_6] : memref<1x8x16x4xbf16, #tpu.memory_space<vmem>>, vector<1x8x16x4xbf16>
    %3 = vector.shape_cast %2 : vector<1x8x16x4xbf16> to vector<8x16x4xbf16>
    %4 = tpu.concatenate %1, %3 in 2 : vector<8x16x4xbf16>, vector<8x16x4xbf16> -> vector<8x16x8xbf16>
    %c0_7 = arith.constant 0 : index
    %c0_8 = arith.constant 0 : index
    %c0_9 = arith.constant 0 : index
    %c0_10 = arith.constant 0 : index
    %5 = vector.load %arg3[%c0_7, %c0_8, %c0_9, %c0_10] : memref<1x1x16x4xbf16, #tpu.memory_space<vmem>>, vector<1x1x16x4xbf16>
    %6 = vector.shape_cast %5 : vector<1x1x16x4xbf16> to vector<1x16x4xbf16>
    %c0_11 = arith.constant 0 : index
    %c0_12 = arith.constant 0 : index
    %c0_13 = arith.constant 0 : index
    %c0_14 = arith.constant 0 : index
    %7 = vector.load %arg6[%c0_11, %c0_12, %c0_13, %c0_14] : memref<1x1x16x4xbf16, #tpu.memory_space<vmem>>, vector<1x1x16x4xbf16>
    %8 = vector.shape_cast %7 : vector<1x1x16x4xbf16> to vector<1x16x4xbf16>
    %9 = tpu.concatenate %6, %8 in 2 : vector<1x16x4xbf16>, vector<1x16x4xbf16> -> vector<1x16x8xbf16>
    %c0_15 = arith.constant 0 : index
    %c0_16 = arith.constant 0 : index
    %c0_17 = arith.constant 0 : index
    %c0_18 = arith.constant 0 : index
    %10 = vector.load %arg4[%c0_15, %c0_16, %c0_17, %c0_18] : memref<1x1x16x4xbf16, #tpu.memory_space<vmem>>, vector<1x1x16x4xbf16>
    %11 = vector.shape_cast %10 : vector<1x1x16x4xbf16> to vector<1x16x4xbf16>
    %c0_19 = arith.constant 0 : index
    %c0_20 = arith.constant 0 : index
    %c0_21 = arith.constant 0 : index
    %c0_22 = arith.constant 0 : index
    %12 = vector.load %arg7[%c0_19, %c0_20, %c0_21, %c0_22] : memref<1x1x16x4xbf16, #tpu.memory_space<vmem>>, vector<1x1x16x4xbf16>
    %13 = vector.shape_cast %12 : vector<1x1x16x4xbf16> to vector<1x16x4xbf16>
    %14 = tpu.concatenate %11, %13 in 2 : vector<1x16x4xbf16>, vector<1x16x4xbf16> -> vector<1x16x8xbf16>
    %15 = tpu.concatenate %9, %4, %14 in 0 : vector<1x16x8xbf16>, vector<8x16x8xbf16>, vector<1x16x8xbf16> -> vector<10x16x8xbf16>
    %cst = arith.constant 0.000000e+00 : bf16
    %16 = vector.broadcast %cst : bf16 to vector<10x1x8xbf16>
    %17 = tpu.concatenate %16, %15, %16 in 1 : vector<10x1x8xbf16>, vector<10x16x8xbf16>, vector<10x1x8xbf16> -> vector<10x18x8xbf16>
    %18 = vector.extract_strided_slice %17 {offsets = [0, 0, 0], sizes = [8, 16, 8], strides = [1, 1, 1]} : vector<10x18x8xbf16> to vector<8x16x8xbf16>
    %19 = vector.shape_cast %18 : vector<8x16x8xbf16> to vector<128x8xbf16>
    %20 = vector.extract_strided_slice %17 {offsets = [0, 1, 0], sizes = [8, 16, 8], strides = [1, 1, 1]} : vector<10x18x8xbf16> to vector<8x16x8xbf16>
    %21 = vector.shape_cast %20 : vector<8x16x8xbf16> to vector<128x8xbf16>
    %22 = vector.extract_strided_slice %17 {offsets = [0, 2, 0], sizes = [8, 16, 8], strides = [1, 1, 1]} : vector<10x18x8xbf16> to vector<8x16x8xbf16>
    %23 = vector.shape_cast %22 : vector<8x16x8xbf16> to vector<128x8xbf16>
    %24 = vector.extract_strided_slice %17 {offsets = [1, 0, 0], sizes = [8, 16, 8], strides = [1, 1, 1]} : vector<10x18x8xbf16> to vector<8x16x8xbf16>
    %25 = vector.shape_cast %24 : vector<8x16x8xbf16> to vector<128x8xbf16>
    %26 = vector.extract_strided_slice %17 {offsets = [1, 1, 0], sizes = [8, 16, 8], strides = [1, 1, 1]} : vector<10x18x8xbf16> to vector<8x16x8xbf16>
    %27 = vector.shape_cast %26 : vector<8x16x8xbf16> to vector<128x8xbf16>
    %28 = vector.extract_strided_slice %17 {offsets = [1, 2, 0], sizes = [8, 16, 8], strides = [1, 1, 1]} : vector<10x18x8xbf16> to vector<8x16x8xbf16>
    %29 = vector.shape_cast %28 : vector<8x16x8xbf16> to vector<128x8xbf16>
    %30 = vector.extract_strided_slice %17 {offsets = [2, 0, 0], sizes = [8, 16, 8], strides = [1, 1, 1]} : vector<10x18x8xbf16> to vector<8x16x8xbf16>
    %31 = vector.shape_cast %30 : vector<8x16x8xbf16> to vector<128x8xbf16>
    %32 = vector.extract_strided_slice %17 {offsets = [2, 1, 0], sizes = [8, 16, 8], strides = [1, 1, 1]} : vector<10x18x8xbf16> to vector<8x16x8xbf16>
    %33 = vector.shape_cast %32 : vector<8x16x8xbf16> to vector<128x8xbf16>
    %34 = vector.extract_strided_slice %17 {offsets = [2, 2, 0], sizes = [8, 16, 8], strides = [1, 1, 1]} : vector<10x18x8xbf16> to vector<8x16x8xbf16>
    %35 = vector.shape_cast %34 : vector<8x16x8xbf16> to vector<128x8xbf16>
    %36 = tpu.concatenate %19, %21, %23, %25, %27, %29, %31, %33, %35 in 1 : vector<128x8xbf16>, vector<128x8xbf16>, vector<128x8xbf16>, vector<128x8xbf16>, vector<128x8xbf16>, vector<128x8xbf16>, vector<128x8xbf16>, vector<128x8xbf16>, vector<128x8xbf16> -> vector<128x72xbf16>
    %c0_23 = arith.constant 0 : index
    %c0_24 = arith.constant 0 : index
    %37 = vector.load %arg8[%c0_23, %c0_24] : memref<72x8xbf16, #tpu.memory_space<vmem>>, vector<72x8xbf16>
    %cst_25 = arith.constant dense<0.000000e+00> : vector<128x8xf32>
    %38 = tpu.matmul %36, %37, %cst_25 {dimension_numbers = #tpu.dot_dimension_numbers<[1], [0], [0], [1], [0, 0, 1, 1], [], []>} : vector<128x72xbf16>, vector<72x8xbf16>, vector<128x8xf32> -> vector<128x8xf32>
    %39 = vector.shape_cast %38 : vector<128x8xf32> to vector<8x16x8xf32>
    %40 = arith.truncf %39 : vector<8x16x8xf32> to vector<8x16x8xbf16>
    %c0_26 = arith.constant 0 : index
    %c0_27 = arith.constant 0 : index
    %c0_28 = arith.constant 0 : index
    %c0_29 = arith.constant 0 : index
    %41 = vector.load %arg9[%c0_26, %c0_27, %c0_28, %c0_29] : memref<1x8x16x8xbf16, #tpu.memory_space<vmem>>, vector<1x8x16x8xbf16>
    %42 = vector.shape_cast %41 : vector<1x8x16x8xbf16> to vector<8x16x8xbf16>
    %43 = vector.shape_cast %40 : vector<8x16x8xbf16> to vector<1x8x16x8xbf16>
    tpu.vector_store %arg9[%c0_26, %c0_27, %c0_28, %c0_29], %43 {strides = array<i32>} : memref<1x8x16x8xbf16, #tpu.memory_space<vmem>>, vector<1x8x16x8xbf16>,
    %cst_30 = arith.constant dense<0.000000e+00> : vector<8xf32>
    %44 = vector.multi_reduction <add>, %38, %cst_30 [0] : vector<128x8xf32> to vector<8xf32>
    %45 = vector.shape_cast %44 : vector<8xf32> to vector<1x8xf32>
    %c0_31 = arith.constant 0 : index
    %c0_32 = arith.constant 0 : index
    %c0_33 = arith.constant 0 : index
    %c0_34 = arith.constant 0 : index
    %46 = vector.load %arg10[%c0_31, %c0_32, %c0_33, %c0_34] : memref<1x1x1x8xf32, #tpu.memory_space<vmem>>, vector<1x1x1x8xf32>
    %47 = vector.shape_cast %46 : vector<1x1x1x8xf32> to vector<1x8xf32>
    %48 = vector.shape_cast %45 : vector<1x8xf32> to vector<1x1x1x8xf32>
    tpu.vector_store %arg10[%c0_31, %c0_32, %c0_33, %c0_34], %48 {strides = array<i32>} : memref<1x1x1x8xf32, #tpu.memory_space<vmem>>, vector<1x1x1x8xf32>,
    %49 = arith.mulf %38, %38 : vector<128x8xf32>
    %cst_35 = arith.constant dense<0.000000e+00> : vector<8xf32>
    %50 = vector.multi_reduction <add>, %49, %cst_35 [0] : vector<128x8xf32> to vector<8xf32>
    %51 = vector.shape_cast %50 : vector<8xf32> to vector<1x8xf32>
    %c0_36 = arith.constant 0 : index
    %c0_37 = arith.constant 0 : index
    %c0_38 = arith.constant 0 : index
    %c0_39 = arith.constant 0 : index
    %52 = vector.load %arg11[%c0_36, %c0_37, %c0_38, %c0_39] : memref<1x1x1x8xf32, #tpu.memory_space<vmem>>, vector<1x1x1x8xf32>
    %53 = vector.shape_cast %52 : vector<1x1x1x8xf32> to vector<1x8xf32>
    %54 = vector.shape_cast %51 : vector<1x8xf32> to vector<1x1x1x8xf32>
    tpu.vector_store %arg11[%c0_36, %c0_37, %c0_38, %c0_39], %54 {strides = array<i32>} : memref<1x1x1x8xf32, #tpu.memory_space<vmem>>, vector<1x1x1x8xf32>,
    return
  }
  func.func @transform_0(%arg0: i32, %arg1: i32) -> (i32, i32, i32, i32) {
    %c0_i32 = arith.constant 0 : i32
    %c0_i32_0 = arith.constant 0 : i32
    %c0_i32_1 = arith.constant 0 : i32
    return %arg0, %arg1, %c0_i32, %c0_i32_0 : i32, i32, i32, i32
  }
  func.func @transform_1(%arg0: i32, %arg1: i32) -> (i32, i32, i32, i32) {
    %c0_i32 = arith.constant 0 : i32
    %c0_i32_0 = arith.constant 0 : i32
    %c0_i32_1 = arith.constant 0 : i32
    return %arg0, %arg1, %c0_i32, %c0_i32_0 : i32, i32, i32, i32
  }
  func.func @transform_2(%arg0: i32, %arg1: i32) -> (i32, i32, i32, i32) {
    %c0_i32 = arith.constant 0 : i32
    %c0_i32_0 = arith.constant 0 : i32
    %c0_i32_1 = arith.constant 0 : i32
    return %arg0, %arg1, %c0_i32, %c0_i32_0 : i32, i32, i32, i32
  }
  func.func @transform_3(%arg0: i32, %arg1: i32) -> (i32, i32, i32, i32) {
    %c0_i32 = arith.constant 0 : i32
    %c0_i32_0 = arith.constant 0 : i32
    %c0_i32_1 = arith.constant 0 : i32
    return %arg0, %arg1, %c0_i32, %c0_i32_0 : i32, i32, i32, i32
  }
  func.func @transform_4(%arg0: i32, %arg1: i32) -> (i32, i32, i32, i32) {
    %c0_i32 = arith.constant 0 : i32
    %c0_i32_0 = arith.constant 0 : i32
    %c0_i32_1 = arith.constant 0 : i32
    return %arg0, %arg1, %c0_i32, %c0_i32_0 : i32, i32, i32, i32
  }
  func.func @transform_5(%arg0: i32, %arg1: i32) -> (i32, i32, i32, i32) {
    %c0_i32 = arith.constant 0 : i32
    %c0_i32_0 = arith.constant 0 : i32
    %c0_i32_1 = arith.constant 0 : i32
    return %arg0, %arg1, %c0_i32, %c0_i32_0 : i32, i32, i32, i32
  }
  func.func @transform_6(%arg0: i32, %arg1: i32) -> (i32, i32) {
    %c0_i32 = arith.constant 0 : i32
    %c0_i32_0 = arith.constant 0 : i32
    %c0_i32_1 = arith.constant 0 : i32
    return %c0_i32, %c0_i32_0 : i32, i32
  }
  func.func @transform_7(%arg0: i32, %arg1: i32) -> (i32, i32, i32, i32) {
    %c0_i32 = arith.constant 0 : i32
    %c0_i32_0 = arith.constant 0 : i32
    %c0_i32_1 = arith.constant 0 : i32
    return %arg0, %arg1, %c0_i32, %c0_i32_0 : i32, i32, i32, i32
  }
  func.func @transform_8(%arg0: i32, %arg1: i32) -> (i32, i32, i32, i32) {
    %c0_i32 = arith.constant 0 : i32
    %c0_i32_0 = arith.constant 0 : i32
    %c0_i32_1 = arith.constant 0 : i32
    return %arg0, %arg1, %c0_i32, %c0_i32_0 : i32, i32, i32, i32
  }
  func.func @transform_9(%arg0: i32, %arg1: i32) -> (i32, i32, i32, i32) {
    %c0_i32 = arith.constant 0 : i32
    %c0_i32_0 = arith.constant 0 : i32
    %c0_i32_1 = arith.constant 0 : i32
    return %arg0, %arg1, %c0_i32, %c0_i32_0 : i32, i32, i32, i32
  }
}

module attributes {stable_mosaic.version = 11 : i64} {
  func.func @_bnrelu_kernel(%arg0: i32, %arg1: i32, %arg2: memref<1x8x16x8xbf16, #tpu.memory_space<vmem>>, %arg3: memref<1x8xf32, #tpu.memory_space<vmem>>, %arg4: memref<1x8xf32, #tpu.memory_space<vmem>>, %arg5: memref<1x8x16x8xf32, #tpu.memory_space<vmem>>) attributes {dimension_semantics = [#tpu.dimension_semantics<parallel>, #tpu.dimension_semantics<parallel>], iteration_bounds = array<i64: 2, 2>, scalar_prefetch = 0 : i64, scratch_operands = 0 : i64, tpu.core_type = #tpu.core_type<tc>, window_params = [{transform_indices = @transform_0, window_bounds = array<i64: 1, 8, 16, 8>}, {pipeline_mode = #tpu.pipeline_mode<synchronous>, transform_indices = @transform_1, window_bounds = array<i64: 1, 8>}, {pipeline_mode = #tpu.pipeline_mode<synchronous>, transform_indices = @transform_2, window_bounds = array<i64: 1, 8>}, {transform_indices = @transform_3, window_bounds = array<i64: 1, 8, 16, 8>}]} {
    %c0 = arith.constant 0 : index
    %c0_0 = arith.constant 0 : index
    %c0_1 = arith.constant 0 : index
    %c0_2 = arith.constant 0 : index
    %0 = vector.load %arg2[%c0, %c0_0, %c0_1, %c0_2] : memref<1x8x16x8xbf16, #tpu.memory_space<vmem>>, vector<1x8x16x8xbf16>
    %1 = arith.extf %0 : vector<1x8x16x8xbf16> to vector<1x8x16x8xf32>
    %c0_3 = arith.constant 0 : index
    %c0_4 = arith.constant 0 : index
    %2 = vector.load %arg3[%c0_3, %c0_4] : memref<1x8xf32, #tpu.memory_space<vmem>>, vector<1x8xf32>
    %3 = vector.shape_cast %2 : vector<1x8xf32> to vector<1x1x1x8xf32>
    %4 = vector.broadcast %3 : vector<1x1x1x8xf32> to vector<1x8x16x8xf32>
    %5 = arith.mulf %1, %4 : vector<1x8x16x8xf32>
    %c0_5 = arith.constant 0 : index
    %c0_6 = arith.constant 0 : index
    %6 = vector.load %arg4[%c0_5, %c0_6] : memref<1x8xf32, #tpu.memory_space<vmem>>, vector<1x8xf32>
    %7 = vector.shape_cast %6 : vector<1x8xf32> to vector<1x1x1x8xf32>
    %8 = vector.broadcast %7 : vector<1x1x1x8xf32> to vector<1x8x16x8xf32>
    %9 = arith.addf %5, %8 : vector<1x8x16x8xf32>
    %cst = arith.constant 0.000000e+00 : f32
    %10 = vector.broadcast %cst : f32 to vector<1x8x16x8xf32>
    %11 = arith.maximumf %9, %10 : vector<1x8x16x8xf32>
    %c0_7 = arith.constant 0 : index
    %c0_8 = arith.constant 0 : index
    %c0_9 = arith.constant 0 : index
    %c0_10 = arith.constant 0 : index
    %12 = vector.load %arg5[%c0_7, %c0_8, %c0_9, %c0_10] : memref<1x8x16x8xf32, #tpu.memory_space<vmem>>, vector<1x8x16x8xf32>
    tpu.vector_store %arg5[%c0_7, %c0_8, %c0_9, %c0_10], %11 {strides = array<i32>} : memref<1x8x16x8xf32, #tpu.memory_space<vmem>>, vector<1x8x16x8xf32>,
    return
  }
  func.func @transform_0(%arg0: i32, %arg1: i32) -> (i32, i32, i32, i32) {
    %c0_i32 = arith.constant 0 : i32
    %c0_i32_0 = arith.constant 0 : i32
    %c0_i32_1 = arith.constant 0 : i32
    return %arg0, %arg1, %c0_i32, %c0_i32_0 : i32, i32, i32, i32
  }
  func.func @transform_1(%arg0: i32, %arg1: i32) -> (i32, i32) {
    %c0_i32 = arith.constant 0 : i32
    %c0_i32_0 = arith.constant 0 : i32
    %c0_i32_1 = arith.constant 0 : i32
    return %c0_i32, %c0_i32_0 : i32, i32
  }
  func.func @transform_2(%arg0: i32, %arg1: i32) -> (i32, i32) {
    %c0_i32 = arith.constant 0 : i32
    %c0_i32_0 = arith.constant 0 : i32
    %c0_i32_1 = arith.constant 0 : i32
    return %c0_i32, %c0_i32_0 : i32, i32
  }
  func.func @transform_3(%arg0: i32, %arg1: i32) -> (i32, i32, i32, i32) {
    %c0_i32 = arith.constant 0 : i32
    %c0_i32_0 = arith.constant 0 : i32
    %c0_i32_1 = arith.constant 0 : i32
    return %arg0, %arg1, %c0_i32, %c0_i32_0 : i32, i32, i32, i32
  }
}

module attributes {stable_mosaic.version = 11 : i64} {
  func.func @_conv2_kernel(%arg0: i32, %arg1: i32, %arg2: memref<1x8x16x8xbf16, #tpu.memory_space<vmem>>, %arg3: memref<1x1x16x8xbf16, #tpu.memory_space<vmem>>, %arg4: memref<1x1x16x8xbf16, #tpu.memory_space<vmem>>, %arg5: memref<1x8xf32, #tpu.memory_space<vmem>>, %arg6: memref<1x8xf32, #tpu.memory_space<vmem>>, %arg7: memref<72x8xbf16, #tpu.memory_space<vmem>>, %arg8: memref<1x8x16x8xbf16, #tpu.memory_space<vmem>>, %arg9: memref<1x1x1x8xf32, #tpu.memory_space<vmem>>, %arg10: memref<1x1x1x8xf32, #tpu.memory_space<vmem>>) attributes {dimension_semantics = [#tpu.dimension_semantics<parallel>, #tpu.dimension_semantics<parallel>], iteration_bounds = array<i64: 2, 2>, scalar_prefetch = 0 : i64, scratch_operands = 0 : i64, tpu.core_type = #tpu.core_type<tc>, window_params = [{transform_indices = @transform_0, window_bounds = array<i64: 1, 8, 16, 8>}, {transform_indices = @transform_1, window_bounds = array<i64: 1, 1, 16, 8>}, {transform_indices = @transform_2, window_bounds = array<i64: 1, 1, 16, 8>}, {pipeline_mode = #tpu.pipeline_mode<synchronous>, transform_indices = @transform_3, window_bounds = array<i64: 1, 8>}, {pipeline_mode = #tpu.pipeline_mode<synchronous>, transform_indices = @transform_4, window_bounds = array<i64: 1, 8>}, {pipeline_mode = #tpu.pipeline_mode<synchronous>, transform_indices = @transform_5, window_bounds = array<i64: 72, 8>}, {transform_indices = @transform_6, window_bounds = array<i64: 1, 8, 16, 8>}, {transform_indices = @transform_7, window_bounds = array<i64: 1, 1, 1, 8>}, {transform_indices = @transform_8, window_bounds = array<i64: 1, 1, 1, 8>}]} {
    %c0 = arith.constant 0 : index
    %c0_0 = arith.constant 0 : index
    %c0_1 = arith.constant 0 : index
    %c0_2 = arith.constant 0 : index
    %0 = vector.load %arg2[%c0, %c0_0, %c0_1, %c0_2] : memref<1x8x16x8xbf16, #tpu.memory_space<vmem>>, vector<1x8x16x8xbf16>
    %1 = vector.shape_cast %0 : vector<1x8x16x8xbf16> to vector<8x16x8xbf16>
    %2 = arith.extf %1 : vector<8x16x8xbf16> to vector<8x16x8xf32>
    %c0_3 = arith.constant 0 : index
    %c0_4 = arith.constant 0 : index
    %3 = vector.load %arg5[%c0_3, %c0_4] : memref<1x8xf32, #tpu.memory_space<vmem>>, vector<1x8xf32>
    %4 = vector.shape_cast %3 : vector<1x8xf32> to vector<1x1x8xf32>
    %5 = vector.broadcast %4 : vector<1x1x8xf32> to vector<8x16x8xf32>
    %6 = arith.mulf %2, %5 : vector<8x16x8xf32>
    %c0_5 = arith.constant 0 : index
    %c0_6 = arith.constant 0 : index
    %7 = vector.load %arg6[%c0_5, %c0_6] : memref<1x8xf32, #tpu.memory_space<vmem>>, vector<1x8xf32>
    %8 = vector.shape_cast %7 : vector<1x8xf32> to vector<1x1x8xf32>
    %9 = vector.broadcast %8 : vector<1x1x8xf32> to vector<8x16x8xf32>
    %10 = arith.addf %6, %9 : vector<8x16x8xf32>
    %cst = arith.constant 0.000000e+00 : f32
    %11 = vector.broadcast %cst : f32 to vector<8x16x8xf32>
    %12 = arith.maximumf %10, %11 : vector<8x16x8xf32>
    %13 = arith.truncf %12 : vector<8x16x8xf32> to vector<8x16x8xbf16>
    %c0_7 = arith.constant 0 : index
    %c0_8 = arith.constant 0 : index
    %c0_9 = arith.constant 0 : index
    %c0_10 = arith.constant 0 : index
    %14 = vector.load %arg3[%c0_7, %c0_8, %c0_9, %c0_10] : memref<1x1x16x8xbf16, #tpu.memory_space<vmem>>, vector<1x1x16x8xbf16>
    %15 = vector.shape_cast %14 : vector<1x1x16x8xbf16> to vector<1x16x8xbf16>
    %c0_11 = arith.constant 0 : index
    %c0_12 = arith.constant 0 : index
    %c0_13 = arith.constant 0 : index
    %c0_14 = arith.constant 0 : index
    %16 = vector.load %arg4[%c0_11, %c0_12, %c0_13, %c0_14] : memref<1x1x16x8xbf16, #tpu.memory_space<vmem>>, vector<1x1x16x8xbf16>
    %17 = vector.shape_cast %16 : vector<1x1x16x8xbf16> to vector<1x16x8xbf16>
    %18 = tpu.concatenate %15, %13, %17 in 0 : vector<1x16x8xbf16>, vector<8x16x8xbf16>, vector<1x16x8xbf16> -> vector<10x16x8xbf16>
    %cst_15 = arith.constant 0.000000e+00 : bf16
    %19 = vector.broadcast %cst_15 : bf16 to vector<10x1x8xbf16>
    %20 = tpu.concatenate %19, %18, %19 in 1 : vector<10x1x8xbf16>, vector<10x16x8xbf16>, vector<10x1x8xbf16> -> vector<10x18x8xbf16>
    %21 = vector.extract_strided_slice %20 {offsets = [0, 0, 0], sizes = [8, 16, 8], strides = [1, 1, 1]} : vector<10x18x8xbf16> to vector<8x16x8xbf16>
    %22 = vector.shape_cast %21 : vector<8x16x8xbf16> to vector<128x8xbf16>
    %23 = vector.extract_strided_slice %20 {offsets = [0, 1, 0], sizes = [8, 16, 8], strides = [1, 1, 1]} : vector<10x18x8xbf16> to vector<8x16x8xbf16>
    %24 = vector.shape_cast %23 : vector<8x16x8xbf16> to vector<128x8xbf16>
    %25 = vector.extract_strided_slice %20 {offsets = [0, 2, 0], sizes = [8, 16, 8], strides = [1, 1, 1]} : vector<10x18x8xbf16> to vector<8x16x8xbf16>
    %26 = vector.shape_cast %25 : vector<8x16x8xbf16> to vector<128x8xbf16>
    %27 = vector.extract_strided_slice %20 {offsets = [1, 0, 0], sizes = [8, 16, 8], strides = [1, 1, 1]} : vector<10x18x8xbf16> to vector<8x16x8xbf16>
    %28 = vector.shape_cast %27 : vector<8x16x8xbf16> to vector<128x8xbf16>
    %29 = vector.extract_strided_slice %20 {offsets = [1, 1, 0], sizes = [8, 16, 8], strides = [1, 1, 1]} : vector<10x18x8xbf16> to vector<8x16x8xbf16>
    %30 = vector.shape_cast %29 : vector<8x16x8xbf16> to vector<128x8xbf16>
    %31 = vector.extract_strided_slice %20 {offsets = [1, 2, 0], sizes = [8, 16, 8], strides = [1, 1, 1]} : vector<10x18x8xbf16> to vector<8x16x8xbf16>
    %32 = vector.shape_cast %31 : vector<8x16x8xbf16> to vector<128x8xbf16>
    %33 = vector.extract_strided_slice %20 {offsets = [2, 0, 0], sizes = [8, 16, 8], strides = [1, 1, 1]} : vector<10x18x8xbf16> to vector<8x16x8xbf16>
    %34 = vector.shape_cast %33 : vector<8x16x8xbf16> to vector<128x8xbf16>
    %35 = vector.extract_strided_slice %20 {offsets = [2, 1, 0], sizes = [8, 16, 8], strides = [1, 1, 1]} : vector<10x18x8xbf16> to vector<8x16x8xbf16>
    %36 = vector.shape_cast %35 : vector<8x16x8xbf16> to vector<128x8xbf16>
    %37 = vector.extract_strided_slice %20 {offsets = [2, 2, 0], sizes = [8, 16, 8], strides = [1, 1, 1]} : vector<10x18x8xbf16> to vector<8x16x8xbf16>
    %38 = vector.shape_cast %37 : vector<8x16x8xbf16> to vector<128x8xbf16>
    %39 = tpu.concatenate %22, %24, %26, %28, %30, %32, %34, %36, %38 in 1 : vector<128x8xbf16>, vector<128x8xbf16>, vector<128x8xbf16>, vector<128x8xbf16>, vector<128x8xbf16>, vector<128x8xbf16>, vector<128x8xbf16>, vector<128x8xbf16>, vector<128x8xbf16> -> vector<128x72xbf16>
    %c0_16 = arith.constant 0 : index
    %c0_17 = arith.constant 0 : index
    %40 = vector.load %arg7[%c0_16, %c0_17] : memref<72x8xbf16, #tpu.memory_space<vmem>>, vector<72x8xbf16>
    %cst_18 = arith.constant dense<0.000000e+00> : vector<128x8xf32>
    %41 = tpu.matmul %39, %40, %cst_18 {dimension_numbers = #tpu.dot_dimension_numbers<[1], [0], [0], [1], [0, 0, 1, 1], [], []>} : vector<128x72xbf16>, vector<72x8xbf16>, vector<128x8xf32> -> vector<128x8xf32>
    %42 = vector.shape_cast %41 : vector<128x8xf32> to vector<8x16x8xf32>
    %43 = arith.truncf %42 : vector<8x16x8xf32> to vector<8x16x8xbf16>
    %c0_19 = arith.constant 0 : index
    %c0_20 = arith.constant 0 : index
    %c0_21 = arith.constant 0 : index
    %c0_22 = arith.constant 0 : index
    %44 = vector.load %arg8[%c0_19, %c0_20, %c0_21, %c0_22] : memref<1x8x16x8xbf16, #tpu.memory_space<vmem>>, vector<1x8x16x8xbf16>
    %45 = vector.shape_cast %44 : vector<1x8x16x8xbf16> to vector<8x16x8xbf16>
    %46 = vector.shape_cast %43 : vector<8x16x8xbf16> to vector<1x8x16x8xbf16>
    tpu.vector_store %arg8[%c0_19, %c0_20, %c0_21, %c0_22], %46 {strides = array<i32>} : memref<1x8x16x8xbf16, #tpu.memory_space<vmem>>, vector<1x8x16x8xbf16>,
    %cst_23 = arith.constant dense<0.000000e+00> : vector<8xf32>
    %47 = vector.multi_reduction <add>, %41, %cst_23 [0] : vector<128x8xf32> to vector<8xf32>
    %48 = vector.shape_cast %47 : vector<8xf32> to vector<1x8xf32>
    %c0_24 = arith.constant 0 : index
    %c0_25 = arith.constant 0 : index
    %c0_26 = arith.constant 0 : index
    %c0_27 = arith.constant 0 : index
    %49 = vector.load %arg9[%c0_24, %c0_25, %c0_26, %c0_27] : memref<1x1x1x8xf32, #tpu.memory_space<vmem>>, vector<1x1x1x8xf32>
    %50 = vector.shape_cast %49 : vector<1x1x1x8xf32> to vector<1x8xf32>
    %51 = vector.shape_cast %48 : vector<1x8xf32> to vector<1x1x1x8xf32>
    tpu.vector_store %arg9[%c0_24, %c0_25, %c0_26, %c0_27], %51 {strides = array<i32>} : memref<1x1x1x8xf32, #tpu.memory_space<vmem>>, vector<1x1x1x8xf32>,
    %52 = arith.mulf %41, %41 : vector<128x8xf32>
    %cst_28 = arith.constant dense<0.000000e+00> : vector<8xf32>
    %53 = vector.multi_reduction <add>, %52, %cst_28 [0] : vector<128x8xf32> to vector<8xf32>
    %54 = vector.shape_cast %53 : vector<8xf32> to vector<1x8xf32>
    %c0_29 = arith.constant 0 : index
    %c0_30 = arith.constant 0 : index
    %c0_31 = arith.constant 0 : index
    %c0_32 = arith.constant 0 : index
    %55 = vector.load %arg10[%c0_29, %c0_30, %c0_31, %c0_32] : memref<1x1x1x8xf32, #tpu.memory_space<vmem>>, vector<1x1x1x8xf32>
    %56 = vector.shape_cast %55 : vector<1x1x1x8xf32> to vector<1x8xf32>
    %57 = vector.shape_cast %54 : vector<1x8xf32> to vector<1x1x1x8xf32>
    tpu.vector_store %arg10[%c0_29, %c0_30, %c0_31, %c0_32], %57 {strides = array<i32>} : memref<1x1x1x8xf32, #tpu.memory_space<vmem>>, vector<1x1x1x8xf32>,
    return
  }
  func.func @transform_0(%arg0: i32, %arg1: i32) -> (i32, i32, i32, i32) {
    %c0_i32 = arith.constant 0 : i32
    %c0_i32_0 = arith.constant 0 : i32
    %c0_i32_1 = arith.constant 0 : i32
    return %arg0, %arg1, %c0_i32, %c0_i32_0 : i32, i32, i32, i32
  }
  func.func @transform_1(%arg0: i32, %arg1: i32) -> (i32, i32, i32, i32) {
    %c0_i32 = arith.constant 0 : i32
    %c0_i32_0 = arith.constant 0 : i32
    %c0_i32_1 = arith.constant 0 : i32
    return %arg0, %arg1, %c0_i32, %c0_i32_0 : i32, i32, i32, i32
  }
  func.func @transform_2(%arg0: i32, %arg1: i32) -> (i32, i32, i32, i32) {
    %c0_i32 = arith.constant 0 : i32
    %c0_i32_0 = arith.constant 0 : i32
    %c0_i32_1 = arith.constant 0 : i32
    return %arg0, %arg1, %c0_i32, %c0_i32_0 : i32, i32, i32, i32
  }
  func.func @transform_3(%arg0: i32, %arg1: i32) -> (i32, i32) {
    %c0_i32 = arith.constant 0 : i32
    %c0_i32_0 = arith.constant 0 : i32
    %c0_i32_1 = arith.constant 0 : i32
    return %c0_i32, %c0_i32_0 : i32, i32
  }
  func.func @transform_4(%arg0: i32, %arg1: i32) -> (i32, i32) {
    %c0_i32 = arith.constant 0 : i32
    %c0_i32_0 = arith.constant 0 : i32
    %c0_i32_1 = arith.constant 0 : i32
    return %c0_i32, %c0_i32_0 : i32, i32
  }
  func.func @transform_5(%arg0: i32, %arg1: i32) -> (i32, i32) {
    %c0_i32 = arith.constant 0 : i32
    %c0_i32_0 = arith.constant 0 : i32
    %c0_i32_1 = arith.constant 0 : i32
    return %c0_i32, %c0_i32_0 : i32, i32
  }
  func.func @transform_6(%arg0: i32, %arg1: i32) -> (i32, i32, i32, i32) {
    %c0_i32 = arith.constant 0 : i32
    %c0_i32_0 = arith.constant 0 : i32
    %c0_i32_1 = arith.constant 0 : i32
    return %arg0, %arg1, %c0_i32, %c0_i32_0 : i32, i32, i32, i32
  }
  func.func @transform_7(%arg0: i32, %arg1: i32) -> (i32, i32, i32, i32) {
    %c0_i32 = arith.constant 0 : i32
    %c0_i32_0 = arith.constant 0 : i32
    %c0_i32_1 = arith.constant 0 : i32
    return %arg0, %arg1, %c0_i32, %c0_i32_0 : i32, i32, i32, i32
  }
  func.func @transform_8(%arg0: i32, %arg1: i32) -> (i32, i32, i32, i32) {
    %c0_i32 = arith.constant 0 : i32
    %c0_i32_0 = arith.constant 0 : i32
    %c0_i32_1 = arith.constant 0 : i32
    return %arg0, %arg1, %c0_i32, %c0_i32_0 : i32, i32, i32, i32
  }
}

</mosaic_0001>

<llo_original>
// kernel: tile.8
$region0: #{tile.8}
  #allocation0 [shape = 's32[1]{0}', space=sflag, size = 0x4, scoped, tag = 'scoped memory for tile.8']
  %s0 = inlined_call_operand.vmem [shape: f32[4], index: 0, kind: input, shape index: {}]
  %s1 = inlined_call_operand.vmem [shape: f32[4,4], index: 1, kind: output, shape index: {}]
  // Predicated region
  $region2: #{tile.8} parent=0 // pred_check
    _
  $region3: #{tile.8} parent=0 // pred_check_branch
    %3 = sbr.rel (0) target = $region5
  $region4: #{tile.8} parent=0 // pred_region
    _
  $region5: #{tile.8} parent=0 // pred_fallthru
    _
  %v4 = vld [vmem:[%s0] ss:$0 sm:$0xff]
  %5 = vst [vmem:[%s1] sm:$0xf] %v4

// kernel: tile.9
$region0: #{tile.9}
  %s0 = inlined_call_operand.vmem [shape: f32[4,4], index: 0, kind: input, shape index: {}]
  %s1 = inlined_call_operand.vmem [shape: f32[1,16], index: 1, kind: output, shape index: {}]
  $region1: #{tile.9} parent=0
    #allocation0 [shape = 'u8[4096]{0}', space=vmem, size = 0x1000, scoped, tag = 'scoped mem for output reshape']
    #allocation1 [shape = 'u8[4096]{0}', space=vmem, size = 0x1000, scoped, tag = 'scoped mem for input reshape']
    %s3 = sshll.u32 1, 4
    %s4 = ssub.s32 %s3, 1
    %v5 = vld [vmem:[%s0] sm:%s4]
    %6 = vst [vmem:[#allocation1] sm:%s4] %v5
    %v7 = vld [vmem:[#allocation1] sm:$0x1]
    %vm8 = vcmask 31744
    %9 = vst.msk [vmem:[#allocation0] sm:$0x1] %vm8, %v7
    %s10 = scalar_lea.vmem [#allocation1], 3
    %v11 = vld [vmem:[%s10] sm:$0x1]
    %12 = vrot.lane.b32.xlu0 %v11, 12
    %v13 = vpop.permute.xlu0 %12
    %vm14 = vcmask 130144
    %15 = vst.msk [vmem:[#allocation0] sm:$0x1] %vm14, %v13
    %s16 = scalar_lea.vmem [#allocation1], 2
    %v17 = vld [vmem:[%s16] sm:$0x1]
    %18 = vrot.lane.b32.xlu0 %v17, 8
    %v19 = vpop.permute.xlu0 %18
    %vm20 = vcmask 97344
    %21 = vst.msk [vmem:[#allocation0] sm:$0x1] %vm20, %v19
    %s22 = scalar_lea.vmem [#allocation1], 1
    %v23 = vld [vmem:[%s22] sm:$0x1]
    %24 = vrot.lane.b32.xlu0 %v23, 4
    %v25 = vpop.permute.xlu0 %24
    %vm26 = vcmask 64544
    %27 = vst.msk [vmem:[#allocation0] sm:$0x1] %vm26, %v25
    %s29 = sshll.u32 1, 1
    %s30 = ssub.s32 %s29, 1
    %v32 = vld [vmem:[#allocation0] sm:%s30]
    %s33 = sshll.u32 1, 1
    %s34 = ssub.s32 %s33, 1
    %35 = vst [vmem:[%s1] sm:%s34] %v32

// kernel: decoder_block_forward.4
$region0: #{decoder_block_forward.4}
  #allocation0 [shape = 'u32[]', space=smem, size = 0x4, offset = 0x4, fixed_abs, tag = 'smem constant byte address 0x4 - core index']
  #allocation1 [shape = 'u32[144,128]{1,0:T(1,128)}', space=vmem, size = 0x12000, scoped, tag = 'internal scratch']
  %s0 = inlined_call_operand.vmem [shape: f32[2,8,8,8], index: 0, kind: input, shape index: {}]
  %s1 = inlined_call_operand.vmem [shape: bf16[8,16], index: 1, kind: input, shape index: {}]
  %s2 = inlined_call_operand.vmem [shape: f32[1,16], index: 2, kind: input, shape index: {}]
  %s3 = inlined_call_operand.vmem [shape: bf16[16,2,8,8], index: 3, kind: output, shape index: {}]
  %s4 = sld [smem:[#allocation0]]
  $region45: #{decoder_block_forward.4} parent=0
    _
  %s6 = ssub.s32 1, %s4
  %s7 = scalar_select 0, %s6, %s4
  loop: start=0, step=1, limit=6
  $region2: #{decoder_block_forward.4} parent=0 // loop_pre_header
    _
  $region3: #{decoder_block_forward.4} parent=0 // loop_header
    %s9 = sphi 0, %s13
    %p10 = scmp.ge.s32.totalorder %s9, 6
    %s16 = sphi 0, %s28
    %s17 = sphi 0, %s24
    %s18 = sphi 0, %s16
    %s19 = sphi 0, %s17
    %s20 = sphi 0, %s18
    %s21 = sphi 0, %s19
    %s33 = sphi 0, %s35
    %s36 = sphi 0, %s33
    %s37 = sphi 0, %s36
    %s53 = sphi 0, %s37
    %s57 = sphi 0, %s57
    %s59 = sphi 0, %s57
    %s60 = sphi 0, %s59
    %s74 = sphi 0, %s60
    %s78 = sphi 0, %s78
    %s80 = sphi 0, %s78
    %s81 = sphi 0, %s80
    %s95 = sphi 0, %s81
    %s105 = sphi 0, %s107
    %s108 = sphi 0, %s105
    %s109 = sphi 0, %s108
    %s125 = sphi 0, %s109
  $region4: #{decoder_block_forward.4} parent=0 // loop_header_branch
    %12 = sbr.rel (%p10) target = $region8
  $region5: #{decoder_block_forward.4} parent=0 // loop_body
    %s14 = ssub.s32 %s9, 1
    %s15 = ssub.s32 %s9, 2
    %s22 = sadd.s32 1, %s17
    %p23 = scmp.ge.s32.totalorder %s22, 2
    %s24 = scalar_select %p23, 0, %s22
    %s25 = sadd.s32 1, %s16
    %s26 = scalar_select %p23, %s25, %s16
    %p27 = scmp.ge.s32.totalorder %s26, 2
    %s28 = scalar_select %p27, 0, %s26
    %s29 = ssub.s32 %s16, %s28
    %s30 = ssub.s32 %s17, %s24
    %s31 = sor.u32 %s29, %s30
    %p32 = scmp.eq.s32.totalorder %s31, 0
    %s34 = sadd.s32 %s33, 1
    %s35 = scalar_select %p32, %s33, %s34
    %p38 = pneg %p32
    %p39 = scmp.eq.s32.totalorder %s9, 3
    %p40 = por %p38, %p39
    %p41 = scmp.ne.s32.totalorder %s33, %s36
    %p42 = scmp.eq.s32.totalorder %s9, 0
    %p43 = por %p41, %p42
    %p44 = scmp.ne.s32.totalorder %s33, %s36
    %p45 = scmp.eq.s32.totalorder %s14, 3
    %p46 = por %p44, %p45
    %p47 = scmp.ne.s32.totalorder %s36, %s37
    %p48 = scmp.eq.s32.totalorder %s14, 0
    %p49 = por %p47, %p48
    %p50 = scmp.ne.s32.totalorder %s36, %s37
    %p51 = scmp.eq.s32.totalorder %s15, 3
    %p52 = por %p50, %p51
    %p54 = scmp.ne.s32.totalorder %s37, %s53
    %p55 = scmp.eq.s32.totalorder %s15, 0
    %p56 = por %p54, %p55
    %s58 = sadd.s32 %s57, 1
    %p61 = scmp.eq.s32.totalorder %s9, 3
    %p62 = scmp.ne.s32.totalorder %s57, %s59
    %p63 = scmp.eq.s32.totalorder %s9, 0
    %p64 = por %p62, %p63
    %p65 = scmp.ne.s32.totalorder %s57, %s59
    %p66 = scmp.eq.s32.totalorder %s14, 3
    %p67 = por %p65, %p66
    %p68 = scmp.ne.s32.totalorder %s59, %s60
    %p69 = scmp.eq.s32.totalorder %s14, 0
    %p70 = por %p68, %p69
    %p71 = scmp.ne.s32.totalorder %s59, %s60
    %p72 = scmp.eq.s32.totalorder %s15, 3
    %p73 = por %p71, %p72
    %p75 = scmp.ne.s32.totalorder %s60, %s74
    %p76 = scmp.eq.s32.totalorder %s15, 0
    %p77 = por %p75, %p76
    %s79 = sadd.s32 %s78, 1
    %p82 = scmp.eq.s32.totalorder %s9, 3
    %p83 = scmp.ne.s32.totalorder %s78, %s80
    %p84 = scmp.eq.s32.totalorder %s9, 0
    %p85 = por %p83, %p84
    %p86 = scmp.ne.s32.totalorder %s78, %s80
    %p87 = scmp.eq.s32.totalorder %s14, 3
    %p88 = por %p86, %p87
    %p89 = scmp.ne.s32.totalorder %s80, %s81
    %p90 = scmp.eq.s32.totalorder %s14, 0
    %p91 = por %p89, %p90
    %p92 = scmp.ne.s32.totalorder %s80, %s81
    %p93 = scmp.eq.s32.totalorder %s15, 3
    %p94 = por %p92, %p93
    %p96 = scmp.ne.s32.totalorder %s81, %s95
    %p97 = scmp.eq.s32.totalorder %s15, 0
    %p98 = por %p96, %p97
    %s99 = smul.u32 %s16, 2
    %s100 = sadd.s32 %s99, %s17
    %s101 = smul.u32 %s28, 2
    %s102 = sadd.s32 %s101, %s24
    %s103 = ssub.s32 %s100, %s102
    %p104 = scmp.eq.s32.totalorder %s103, 0
    %s106 = sadd.s32 %s105, 1
    %s107 = scalar_select %p104, %s105, %s106
    %p110 = pneg %p104
    %p111 = scmp.eq.s32.totalorder %s9, 3
    %p112 = por %p110, %p111
    %p113 = scmp.ne.s32.totalorder %s105, %s108
    %p114 = scmp.eq.s32.totalorder %s9, 0
    %p115 = por %p113, %p114
    %p116 = scmp.ne.s32.totalorder %s105, %s108
    %p117 = scmp.eq.s32.totalorder %s14, 3
    %p118 = por %p116, %p117
    %p119 = scmp.ne.s32.totalorder %s108, %s109
    %p120 = scmp.eq.s32.totalorder %s14, 0
    %p121 = por %p119, %p120
    %p122 = scmp.ne.s32.totalorder %s108, %s109
    %p123 = scmp.eq.s32.totalorder %s15, 3
    %p124 = por %p122, %p123
    %p126 = scmp.ne.s32.totalorder %s109, %s125
    %p127 = scmp.eq.s32.totalorder %s15, 0
    %p128 = por %p126, %p127
    %p129 = scmp.le.s32.totalorder 1, %s9
    %p130 = scmp.lt.s32.totalorder %s9, 5
    %p131 = pnand %p129, %p130
    %p132 = pneg %p131
    // Predicated region
    $region9: #{decoder_block_forward.4} parent=5 // pred_check
      _
    $region10: #{decoder_block_forward.4} parent=5 // pred_check_branch
      %134 = sbr.rel (%p131) target = $region12
    $region11: #{decoder_block_forward.4} parent=5 // pred_region
      %s135 = ssub.s32 %s9, 1
      // Predicated region
      $region13: #{decoder_block_forward.4} parent=11 // pred_check
        %p136 = pneg %p70
      $region14: #{decoder_block_forward.4} parent=11 // pred_check_branch
        %138 = sbr.rel (%p136) target = $region16
      $region15: #{decoder_block_forward.4} parent=11 // pred_region
        _
      $region16: #{decoder_block_forward.4} parent=11 // pred_fallthru
        _
      // Predicated region
      $region17: #{decoder_block_forward.4} parent=11 // pred_check
        %p139 = pneg %p91
      $region18: #{decoder_block_forward.4} parent=11 // pred_check_branch
        %141 = sbr.rel (%p139) target = $region20
      $region19: #{decoder_block_forward.4} parent=11 // pred_region
        _
      $region20: #{decoder_block_forward.4} parent=11 // pred_fallthru
        _
    $region12: #{decoder_block_forward.4} parent=5 // pred_fallthru
      _
    %p142 = scmp.lt.s32.totalorder %s9, 4
    // Predicated region
    $region21: #{decoder_block_forward.4} parent=5 // pred_check
      %p143 = pneg %p142
    $region22: #{decoder_block_forward.4} parent=5 // pred_check_branch
      %145 = sbr.rel (%p143) target = $region24
    $region23: #{decoder_block_forward.4} parent=5 // pred_region
      // Predicated region
      $region25: #{decoder_block_forward.4} parent=23 // pred_check
        %p146 = pneg %p43
      $region26: #{decoder_block_forward.4} parent=23 // pred_check_branch
        %148 = sbr.rel (%p146) target = $region28
      $region27: #{decoder_block_forward.4} parent=23 // pred_region
        %s149 = smul.u32 4, %s17
        %p150 = scmp.lt.s32.totalorder %s16, 1
        %s151 = scalar_select %p150, %s16, 1
        %p152 = scmp.lt.s32.totalorder %s149, 7
        %s153 = scalar_select %p152, %s149, 7
        %s154 = smul.addr %s151, 8
        %s155 = sadd.s32 %s153, %s154
        %s156 = smul.addr %s155, 8
        %s157 = scalar_lea.vmem %s0, %s156
        %s158 = smul.u32 4, %s17
      $region28: #{decoder_block_forward.4} parent=23 // pred_fallthru
        _
    $region24: #{decoder_block_forward.4} parent=5 // pred_fallthru
      _
    %p159 = scmp.le.s32.totalorder 1, %s9
    %p160 = scmp.lt.s32.totalorder %s9, 5
    %p161 = pnand %p159, %p160
    %p162 = pneg %p161
    // Predicated region
    $region29: #{decoder_block_forward.4} parent=5 // pred_check
      _
    $region30: #{decoder_block_forward.4} parent=5 // pred_check_branch
      %164 = sbr.rel (%p161) target = $region32
    $region31: #{decoder_block_forward.4} parent=5 // pred_region
      %s165 = ssub.s32 %s9, 1
      %s166 = smul.u32 4, %s19
      %p167 = scmp.lt.s32.totalorder %s18, 1
      %s168 = scalar_select %p167, %s18, 1
      %p169 = scmp.lt.s32.totalorder %s166, 7
      %s170 = scalar_select %p169, %s166, 7
      %s171 = smul.addr %s168, 8
      %s172 = sadd.s32 %s170, %s171
      %s173 = smul.addr %s172, 8
      %s174 = scalar_lea.vmem %s0, %s173
      %p175 = pneg %p49
      %p176 = pneg %p46
      %p177 = pneg %p70
      %p178 = pneg %p67
      %p179 = pneg %p91
      %p180 = pneg %p88
      %p181 = pneg %p121
      %p182 = pneg %p118
      %s183 = smul.u32 %s18, 2
      %s184 = sadd.s32 %s183, %s19
      %s185 = smul.u32 4, %s184
      %p186 = scmp.lt.s32.totalorder %s185, 15
      %s187 = scalar_select %p186, %s185, 15
      %s188 = smul.addr %s187, 2
      %s189 = smul.addr %s188, 4
      %s190 = scalar_lea.vmem %s3, %s189
      %s191 = smul.u32 4, %s19
      %p192 = scmp.lt.s32.totalorder %s18, 1
      %s193 = scalar_select %p192, %s18, 1
      %p194 = scmp.lt.s32.totalorder %s191, 7
      %s195 = scalar_select %p194, %s191, 7
      %s196 = smul.addr %s193, 8
      %s197 = sadd.s32 %s195, %s196
      %s198 = smul.addr %s197, 8
      %s199 = scalar_lea.vmem %s0, %s198
      %s200 = smul.u32 4, %s19
      %s201 = smul.u32 %s18, 2
      %s202 = sadd.s32 %s201, %s19
      %s203 = smul.u32 4, %s202
      %p204 = scmp.lt.s32.totalorder %s203, 15
      %s205 = scalar_select %p204, %s203, 15
      %s206 = smul.addr %s205, 2
      %s207 = smul.addr %s206, 4
      %s208 = scalar_lea.vmem %s3, %s207
      %s209 = smul.u32 %s18, 2
      %s210 = sadd.s32 %s209, %s19
      %s211 = smul.u32 4, %s210
      %v213 = vld [vmem:[%s199] sm:$0xff]
      %v214 = vld [vmem:[%s199 + $0x8] sm:$0xff]
      %v215 = vld [vmem:[%s199 + $0x10] sm:$0xff]
      %v216 = vld [vmem:[%s199 + $0x18] sm:$0xff]
      %v217 = vpack.c.bf16 %v214, %v213
      %v218 = vpack.c.bf16 %v216, %v215
      %v219 = vld [vmem:[%s1] sm:$0xf]
      %v220 = vld [vmem:[%s2] sm:$0x1]
      %v222 = vlaneseq
      %v223 = vshrl.u32 %v222, 7
      %v224 = vsub.s32 0, %v223
      %v225 = vrot.slane %v220, %v224
      %vm227 = vcmask 64512
      %v229 = vsel %vm227, %v217, 0
      %v232 = vsel %vm227, %v218, 0
      %vm234 = vcmask 1043456
      %v236 = vsel %vm234, %v219, 0
      %238 = vmatprep.subr.bf16.mxu0 0
      %239 = vmatpush1.bf16.msra.mxu0 0
      %240 = vmatprep.subr.bf16.mxu0 0
      %241 = vmatpush1.bf16.msra.mxu0 0
      %242 = vmatprep.subr.bf16.mxu0 0
      %243 = vmatpush1.bf16.msra.mxu0 0
      %244 = vmatprep.subr.bf16.mxu0 0
      %245 = vmatpush1.bf16.msra.mxu0 0
      %246 = vmatprep.subr.bf16.mxu0 0
      %247 = vmatpush1.bf16.msra.mxu0 0
      %248 = vmatprep.subr.bf16.mxu0 0
      %249 = vmatpush1.bf16.msra.mxu0 0
      %250 = vmatprep.subr.bf16.mxu0 0
      %251 = vmatpush1.bf16.msra.mxu0 0
      %252 = vmatprep.subr.bf16.mxu0 0
      %253 = vmatpush1.bf16.msra.mxu0 %v236
      %254 = vmatprep.subr.bf16.mxu0 0
      %255 = vmatpush2.bf16.msra.mxu0 0
      %256 = vmatprep.subr.bf16.mxu0 0
      %257 = vmatpush2.bf16.msra.mxu0 0
      %258 = vmatprep.subr.bf16.mxu0 0
      %259 = vmatpush2.bf16.msra.mxu0 0
      %260 = vmatprep.subr.bf16.mxu0 0
      %261 = vmatpush2.bf16.msra.mxu0 0
      %262 = vmatprep.subr.bf16.mxu0 0
      %263 = vmatpush2.bf16.msra.mxu0 0
      %264 = vmatprep.subr.bf16.mxu0 0
      %265 = vmatpush2.bf16.msra.mxu0 0
      %266 = vmatprep.subr.bf16.mxu0 0
      %267 = vmatpush2.bf16.msra.mxu0 0
      %268 = vmatprep.subr.bf16.mxu0 0
      %269 = vmatpush2.bf16.msra.mxu0 0
      %270 = vmatprep.mubr.bf16.mxu0 0
      %271 = vmatmul.mubr.bf16.gmra.mxu0 %v229
      %v272 = vpop.f32.mrf.mxu0
      %v273 = vadd.f32 %v225, %v272
      %v274 = vpop.f32.mrf.mxu0
      %v275 = vpop.f32.mrf.mxu0
      %v276 = vadd.f32 %v225, %v275
      %v277 = vpop.f32.mrf.mxu0
      %278 = vmatprep.mubr.bf16.mxu0 0
      %279 = vmatmul.mubr.bf16.gmra.mxu0 %v232
      %v280 = vpop.f32.mrf.mxu0
      %v281 = vadd.f32 %v225, %v280
      %v282 = vpop.f32.mrf.mxu0
      %v283 = vpop.f32.mrf.mxu0
      %v284 = vadd.f32 %v225, %v283
      %v285 = vpop.f32.mrf.mxu0
      %286 = vdwg.mxu0
      %v287 = vpack.c.bf16 %v273, %v273
      %v288 = vpack.c.bf16 %v276, %v276
      %v289 = vpack.c.bf16 %v281, %v281
      %v290 = vpack.c.bf16 %v284, %v284
      %vm291 = vcmask 60416
      %292 = vst.msk [vmem:[%s208] sm:$0xf] %vm291, %v287
      %293 = vst.msk [vmem:[%s208 + $0x8] sm:$0xf] %vm291, %v288
      %294 = vst.msk [vmem:[%s208 + $0x10] sm:$0xf] %vm291, %v289
      %295 = vst.msk [vmem:[%s208 + $0x18] sm:$0xf] %vm291, %v290
      %v300 = vunpack.c.l.b16 %v287
      %v301 = vunpack.c.l.b16 %v288
      %v302 = vunpack.c.l.b16 %v289
      %v303 = vunpack.c.l.b16 %v290
      %v304 = vpack.c.b16 %v300, %v300
      %v305 = vpack.c.b16 %v301, %v301
      %v306 = vpack.c.b16 %v302, %v302
      %v307 = vpack.c.b16 %v303, %v303
      %308 = vrot.lane.b32.xlu0 %v304, 120
      %v309 = vpop.permute.xlu0 %308
      %310 = vrot.lane.b32.xlu0 %v305, 120
      %v311 = vpop.permute.xlu0 %310
      %312 = vrot.lane.b32.xlu0 %v306, 120
      %v313 = vpop.permute.xlu0 %312
      %314 = vrot.lane.b32.xlu0 %v307, 120
      %v315 = vpop.permute.xlu0 %314
      %s320 = scalar_lea.vmem %s208, 4
      %321 = vst.msk [vmem:[%s320] sm:$0xf] %vm291, %v309
      %322 = vst.msk [vmem:[%s320 + $0x8] sm:$0xf] %vm291, %v311
      %323 = vst.msk [vmem:[%s320 + $0x10] sm:$0xf] %vm291, %v313
      %324 = vst.msk [vmem:[%s320 + $0x18] sm:$0xf] %vm291, %v315
      %s325 = smul.u32 %s18, 2
      %s326 = sadd.s32 %s325, %s19
      %s327 = smul.u32 4, %s326
      %p328 = scmp.lt.s32.totalorder %s327, 15
      %s329 = scalar_select %p328, %s327, 15
      %s330 = smul.addr %s329, 2
      %s331 = smul.addr %s330, 4
      %s332 = scalar_lea.vmem %s3, %s331
      // Predicated region
      $region33: #{decoder_block_forward.4} parent=31 // pred_check
        %p333 = pneg %p118
      $region34: #{decoder_block_forward.4} parent=31 // pred_check_branch
        %335 = sbr.rel (%p333) target = $region36
      $region35: #{decoder_block_forward.4} parent=31 // pred_region
        %s336 = smul.u32 %s18, 2
        %s337 = sadd.s32 %s336, %s19
        %s338 = smul.u32 4, %s337
      $region36: #{decoder_block_forward.4} parent=31 // pred_fallthru
        _
    $region32: #{decoder_block_forward.4} parent=5 // pred_fallthru
      _
    %p339 = scmp.le.s32.totalorder 2, %s9
    // Predicated region
    $region37: #{decoder_block_forward.4} parent=5 // pred_check
      %p340 = pneg %p339
    $region38: #{decoder_block_forward.4} parent=5 // pred_check_branch
      %342 = sbr.rel (%p340) target = $region40
    $region39: #{decoder_block_forward.4} parent=5 // pred_region
      %s343 = ssub.s32 %s9, 2
      // Predicated region
      $region41: #{decoder_block_forward.4} parent=39 // pred_check
        %p344 = pneg %p124
      $region42: #{decoder_block_forward.4} parent=39 // pred_check_branch
        %346 = sbr.rel (%p344) target = $region44
      $region43: #{decoder_block_forward.4} parent=39 // pred_region
        %s347 = smul.u32 %s20, 2
        %s348 = sadd.s32 %s347, %s21
        %s349 = smul.u32 4, %s348
        %p350 = scmp.lt.s32.totalorder %s349, 15
        %s351 = scalar_select %p350, %s349, 15
        %s352 = smul.addr %s351, 2
        %s353 = smul.addr %s352, 4
        %s354 = scalar_lea.vmem %s3, %s353
      $region44: #{decoder_block_forward.4} parent=39 // pred_fallthru
        _
    $region40: #{decoder_block_forward.4} parent=5 // pred_fallthru
      _
  $region6: #{decoder_block_forward.4} parent=0 // loop_footer
    %s13 = sadd.s32 1, %s9
  $region7: #{decoder_block_forward.4} parent=0 // loop_footer_branch
    %8 = sbr.rel target = $region3
  $region8: #{decoder_block_forward.4} parent=0 // loop_exit
    _

// kernel: decoder_block_forward.7
$region0: #{decoder_block_forward.7}
  #allocation0 [shape = 'u32[]', space=smem, size = 0x4, offset = 0x4, fixed_abs, tag = 'smem constant byte address 0x4 - core index']
  #allocation1 [shape = 'u32[144,128]{1,0:T(1,128)}', space=vmem, size = 0x12000, scoped, tag = 'internal scratch']
  %s0 = inlined_call_operand.vmem [shape: bf16[2,16,16,8], index: 0, kind: input, shape index: {}]
  %s1 = inlined_call_operand.vmem [shape: f32[1,8], index: 1, kind: input, shape index: {}]
  %s2 = inlined_call_operand.vmem [shape: f32[1,8], index: 2, kind: input, shape index: {}]
  %s3 = inlined_call_operand.vmem [shape: f32[2,16,16,8], index: 3, kind: output, shape index: {}]
  %s4 = sld [smem:[#allocation0]]
  $region45: #{decoder_block_forward.7} parent=0
    _
  %s6 = ssub.s32 1, %s4
  %s7 = scalar_select 0, %s6, %s4
  loop: start=0, step=1, limit=6
  $region2: #{decoder_block_forward.7} parent=0 // loop_pre_header
    _
  $region3: #{decoder_block_forward.7} parent=0 // loop_header
    %s9 = sphi 0, %s13
    %p10 = scmp.ge.s32.totalorder %s9, 6
    %s16 = sphi 0, %s28
    %s17 = sphi 0, %s24
    %s18 = sphi 0, %s16
    %s19 = sphi 0, %s17
    %s20 = sphi 0, %s18
    %s21 = sphi 0, %s19
    %s33 = sphi 0, %s35
    %s36 = sphi 0, %s33
    %s37 = sphi 0, %s36
    %s53 = sphi 0, %s37
    %s57 = sphi 0, %s57
    %s59 = sphi 0, %s57
    %s60 = sphi 0, %s59
    %s74 = sphi 0, %s60
    %s78 = sphi 0, %s78
    %s80 = sphi 0, %s78
    %s81 = sphi 0, %s80
    %s95 = sphi 0, %s81
    %s103 = sphi 0, %s105
    %s106 = sphi 0, %s103
    %s107 = sphi 0, %s106
    %s123 = sphi 0, %s107
  $region4: #{decoder_block_forward.7} parent=0 // loop_header_branch
    %12 = sbr.rel (%p10) target = $region8
  $region5: #{decoder_block_forward.7} parent=0 // loop_body
    %s14 = ssub.s32 %s9, 1
    %s15 = ssub.s32 %s9, 2
    %s22 = sadd.s32 1, %s17
    %p23 = scmp.ge.s32.totalorder %s22, 2
    %s24 = scalar_select %p23, 0, %s22
    %s25 = sadd.s32 1, %s16
    %s26 = scalar_select %p23, %s25, %s16
    %p27 = scmp.ge.s32.totalorder %s26, 2
    %s28 = scalar_select %p27, 0, %s26
    %s29 = ssub.s32 %s16, %s28
    %s30 = ssub.s32 %s17, %s24
    %s31 = sor.u32 %s29, %s30
    %p32 = scmp.eq.s32.totalorder %s31, 0
    %s34 = sadd.s32 %s33, 1
    %s35 = scalar_select %p32, %s33, %s34
    %p38 = pneg %p32
    %p39 = scmp.eq.s32.totalorder %s9, 3
    %p40 = por %p38, %p39
    %p41 = scmp.ne.s32.totalorder %s33, %s36
    %p42 = scmp.eq.s32.totalorder %s9, 0
    %p43 = por %p41, %p42
    %p44 = scmp.ne.s32.totalorder %s33, %s36
    %p45 = scmp.eq.s32.totalorder %s14, 3
    %p46 = por %p44, %p45
    %p47 = scmp.ne.s32.totalorder %s36, %s37
    %p48 = scmp.eq.s32.totalorder %s14, 0
    %p49 = por %p47, %p48
    %p50 = scmp.ne.s32.totalorder %s36, %s37
    %p51 = scmp.eq.s32.totalorder %s15, 3
    %p52 = por %p50, %p51
    %p54 = scmp.ne.s32.totalorder %s37, %s53
    %p55 = scmp.eq.s32.totalorder %s15, 0
    %p56 = por %p54, %p55
    %s58 = sadd.s32 %s57, 1
    %p61 = scmp.eq.s32.totalorder %s9, 3
    %p62 = scmp.ne.s32.totalorder %s57, %s59
    %p63 = scmp.eq.s32.totalorder %s9, 0
    %p64 = por %p62, %p63
    %p65 = scmp.ne.s32.totalorder %s57, %s59
    %p66 = scmp.eq.s32.totalorder %s14, 3
    %p67 = por %p65, %p66
    %p68 = scmp.ne.s32.totalorder %s59, %s60
    %p69 = scmp.eq.s32.totalorder %s14, 0
    %p70 = por %p68, %p69
    %p71 = scmp.ne.s32.totalorder %s59, %s60
    %p72 = scmp.eq.s32.totalorder %s15, 3
    %p73 = por %p71, %p72
    %p75 = scmp.ne.s32.totalorder %s60, %s74
    %p76 = scmp.eq.s32.totalorder %s15, 0
    %p77 = por %p75, %p76
    %s79 = sadd.s32 %s78, 1
    %p82 = scmp.eq.s32.totalorder %s9, 3
    %p83 = scmp.ne.s32.totalorder %s78, %s80
    %p84 = scmp.eq.s32.totalorder %s9, 0
    %p85 = por %p83, %p84
    %p86 = scmp.ne.s32.totalorder %s78, %s80
    %p87 = scmp.eq.s32.totalorder %s14, 3
    %p88 = por %p86, %p87
    %p89 = scmp.ne.s32.totalorder %s80, %s81
    %p90 = scmp.eq.s32.totalorder %s14, 0
    %p91 = por %p89, %p90
    %p92 = scmp.ne.s32.totalorder %s80, %s81
    %p93 = scmp.eq.s32.totalorder %s15, 3
    %p94 = por %p92, %p93
    %p96 = scmp.ne.s32.totalorder %s81, %s95
    %p97 = scmp.eq.s32.totalorder %s15, 0
    %p98 = por %p96, %p97
    %s99 = ssub.s32 %s16, %s28
    %s100 = ssub.s32 %s17, %s24
    %s101 = sor.u32 %s99, %s100
    %p102 = scmp.eq.s32.totalorder %s101, 0
    %s104 = sadd.s32 %s103, 1
    %s105 = scalar_select %p102, %s103, %s104
    %p108 = pneg %p102
    %p109 = scmp.eq.s32.totalorder %s9, 3
    %p110 = por %p108, %p109
    %p111 = scmp.ne.s32.totalorder %s103, %s106
    %p112 = scmp.eq.s32.totalorder %s9, 0
    %p113 = por %p111, %p112
    %p114 = scmp.ne.s32.totalorder %s103, %s106
    %p115 = scmp.eq.s32.totalorder %s14, 3
    %p116 = por %p114, %p115
    %p117 = scmp.ne.s32.totalorder %s106, %s107
    %p118 = scmp.eq.s32.totalorder %s14, 0
    %p119 = por %p117, %p118
    %p120 = scmp.ne.s32.totalorder %s106, %s107
    %p121 = scmp.eq.s32.totalorder %s15, 3
    %p122 = por %p120, %p121
    %p124 = scmp.ne.s32.totalorder %s107, %s123
    %p125 = scmp.eq.s32.totalorder %s15, 0
    %p126 = por %p124, %p125
    %p127 = scmp.le.s32.totalorder 1, %s9
    %p128 = scmp.lt.s32.totalorder %s9, 5
    %p129 = pnand %p127, %p128
    %p130 = pneg %p129
    // Predicated region
    $region9: #{decoder_block_forward.7} parent=5 // pred_check
      _
    $region10: #{decoder_block_forward.7} parent=5 // pred_check_branch
      %132 = sbr.rel (%p129) target = $region12
    $region11: #{decoder_block_forward.7} parent=5 // pred_region
      %s133 = ssub.s32 %s9, 1
      // Predicated region
      $region13: #{decoder_block_forward.7} parent=11 // pred_check
        %p134 = pneg %p70
      $region14: #{decoder_block_forward.7} parent=11 // pred_check_branch
        %136 = sbr.rel (%p134) target = $region16
      $region15: #{decoder_block_forward.7} parent=11 // pred_region
        _
      $region16: #{decoder_block_forward.7} parent=11 // pred_fallthru
        _
      // Predicated region
      $region17: #{decoder_block_forward.7} parent=11 // pred_check
        %p137 = pneg %p91
      $region18: #{decoder_block_forward.7} parent=11 // pred_check_branch
        %139 = sbr.rel (%p137) target = $region20
      $region19: #{decoder_block_forward.7} parent=11 // pred_region
        _
      $region20: #{decoder_block_forward.7} parent=11 // pred_fallthru
        _
    $region12: #{decoder_block_forward.7} parent=5 // pred_fallthru
      _
    %p140 = scmp.lt.s32.totalorder %s9, 4
    // Predicated region
    $region21: #{decoder_block_forward.7} parent=5 // pred_check
      %p141 = pneg %p140
    $region22: #{decoder_block_forward.7} parent=5 // pred_check_branch
      %143 = sbr.rel (%p141) target = $region24
    $region23: #{decoder_block_forward.7} parent=5 // pred_region
      // Predicated region
      $region25: #{decoder_block_forward.7} parent=23 // pred_check
        %p144 = pneg %p43
      $region26: #{decoder_block_forward.7} parent=23 // pred_check_branch
        %146 = sbr.rel (%p144) target = $region28
      $region27: #{decoder_block_forward.7} parent=23 // pred_region
        %s147 = smul.u32 8, %s17
        %p148 = scmp.lt.s32.totalorder %s16, 1
        %s149 = scalar_select %p148, %s16, 1
        %p150 = scmp.lt.s32.totalorder %s147, 15
        %s151 = scalar_select %p150, %s147, 15
        %s152 = smul.addr %s151, 2
        %s153 = smul.addr %s149, 32
        %s154 = sadd.s32 %s152, %s153
        %s155 = smul.addr %s154, 4
        %s156 = scalar_lea.vmem %s0, %s155
        %s157 = smul.u32 8, %s17
      $region28: #{decoder_block_forward.7} parent=23 // pred_fallthru
        _
    $region24: #{decoder_block_forward.7} parent=5 // pred_fallthru
      _
    %p158 = scmp.le.s32.totalorder 1, %s9
    %p159 = scmp.lt.s32.totalorder %s9, 5
    %p160 = pnand %p158, %p159
    %p161 = pneg %p160
    // Predicated region
    $region29: #{decoder_block_forward.7} parent=5 // pred_check
      _
    $region30: #{decoder_block_forward.7} parent=5 // pred_check_branch
      %163 = sbr.rel (%p160) target = $region32
    $region31: #{decoder_block_forward.7} parent=5 // pred_region
      %s164 = ssub.s32 %s9, 1
      %s165 = smul.u32 8, %s19
      %p166 = scmp.lt.s32.totalorder %s18, 1
      %s167 = scalar_select %p166, %s18, 1
      %p168 = scmp.lt.s32.totalorder %s165, 15
      %s169 = scalar_select %p168, %s165, 15
      %s170 = smul.addr %s169, 2
      %s171 = smul.addr %s167, 32
      %s172 = sadd.s32 %s170, %s171
      %s173 = smul.addr %s172, 4
      %s174 = scalar_lea.vmem %s0, %s173
      %p175 = pneg %p49
      %p176 = pneg %p46
      %p177 = pneg %p70
      %p178 = pneg %p67
      %p179 = pneg %p91
      %p180 = pneg %p88
      %p181 = pneg %p119
      %p182 = pneg %p116
      %s183 = smul.u32 8, %s19
      %p184 = scmp.lt.s32.totalorder %s18, 1
      %s185 = scalar_select %p184, %s18, 1
      %p186 = scmp.lt.s32.totalorder %s183, 15
      %s187 = scalar_select %p186, %s183, 15
      %s188 = smul.addr %s187, 2
      %s189 = smul.addr %s185, 32
      %s190 = sadd.s32 %s188, %s189
      %s191 = smul.addr %s190, 8
      %s192 = scalar_lea.vmem %s3, %s191
      %s193 = smul.u32 8, %s19
      %p194 = scmp.lt.s32.totalorder %s18, 1
      %s195 = scalar_select %p194, %s18, 1
      %p196 = scmp.lt.s32.totalorder %s193, 15
      %s197 = scalar_select %p196, %s193, 15
      %s198 = smul.addr %s197, 2
      %s199 = smul.addr %s195, 32
      %s200 = sadd.s32 %s198, %s199
      %s201 = smul.addr %s200, 4
      %s202 = scalar_lea.vmem %s0, %s201
      %s203 = smul.u32 8, %s19
      %s204 = smul.u32 8, %s19
      %p205 = scmp.lt.s32.totalorder %s18, 1
      %s206 = scalar_select %p205, %s18, 1
      %p207 = scmp.lt.s32.totalorder %s204, 15
      %s208 = scalar_select %p207, %s204, 15
      %s209 = smul.addr %s208, 2
      %s210 = smul.addr %s206, 32
      %s211 = sadd.s32 %s209, %s210
      %s212 = smul.addr %s211, 8
      %s213 = scalar_lea.vmem %s3, %s212
      %s214 = smul.u32 8, %s19
      %v215 = vld [vmem:[%s202] sm:$0xf]
      %v216 = vld [vmem:[%s202 + $0x4] sm:$0xf]
      %v217 = vld [vmem:[%s202 + $0x8] sm:$0xf]
      %v218 = vld [vmem:[%s202 + $0xc] sm:$0xf]
      %v219 = vld [vmem:[%s202 + $0x10] sm:$0xf]
      %v220 = vld [vmem:[%s202 + $0x14] sm:$0xf]
      %v221 = vld [vmem:[%s202 + $0x18] sm:$0xf]
      %v222 = vld [vmem:[%s202 + $0x1c] sm:$0xf]
      %v223 = vld [vmem:[%s202 + $0x20] sm:$0xf]
      %v224 = vld [vmem:[%s202 + $0x24] sm:$0xf]
      %v225 = vld [vmem:[%s202 + $0x28] sm:$0xf]
      %v226 = vld [vmem:[%s202 + $0x2c] sm:$0xf]
      %v227 = vld [vmem:[%s202 + $0x30] sm:$0xf]
      %v228 = vld [vmem:[%s202 + $0x34] sm:$0xf]
      %v229 = vld [vmem:[%s202 + $0x38] sm:$0xf]
      %v230 = vld [vmem:[%s202 + $0x3c] sm:$0xf]
      %v231 = vunpack.c.l.bf16 %v215
      %v232 = vunpack.c.l.bf16 %v216
      %v233 = vunpack.c.l.bf16 %v217
      %v234 = vunpack.c.l.bf16 %v218
      %v235 = vunpack.c.l.bf16 %v219
      %v236 = vunpack.c.l.bf16 %v220
      %v237 = vunpack.c.l.bf16 %v221
      %v238 = vunpack.c.l.bf16 %v222
      %v239 = vunpack.c.l.bf16 %v223
      %v240 = vunpack.c.l.bf16 %v224
      %v241 = vunpack.c.l.bf16 %v225
      %v242 = vunpack.c.l.bf16 %v226
      %v243 = vunpack.c.l.bf16 %v227
      %v244 = vunpack.c.l.bf16 %v228
      %v245 = vunpack.c.l.bf16 %v229
      %v246 = vunpack.c.l.bf16 %v230
      %v247 = vld [vmem:[%s1] sm:$0x1]
      %v249 = vlaneseq
      %v250 = vshrl.u32 %v249, 7
      %v251 = vsub.s32 0, %v250
      %v252 = vrot.slane %v247, %v251
      %v254 = vmul.f32 %v231, %v252
      %v255 = vmul.f32 %v232, %v252
      %v256 = vmul.f32 %v233, %v252
      %v257 = vmul.f32 %v234, %v252
      %v258 = vmul.f32 %v235, %v252
      %v259 = vmul.f32 %v236, %v252
      %v260 = vmul.f32 %v237, %v252
      %v261 = vmul.f32 %v238, %v252
      %v262 = vmul.f32 %v239, %v252
      %v263 = vmul.f32 %v240, %v252
      %v264 = vmul.f32 %v241, %v252
      %v265 = vmul.f32 %v242, %v252
      %v266 = vmul.f32 %v243, %v252
      %v267 = vmul.f32 %v244, %v252
      %v268 = vmul.f32 %v245, %v252
      %v269 = vmul.f32 %v246, %v252
      %v270 = vld [vmem:[%s2] sm:$0x1]
      %v272 = vlaneseq
      %v273 = vshrl.u32 %v272, 7
      %v274 = vsub.s32 0, %v273
      %v275 = vrot.slane %v270, %v274
      %v277 = vadd.f32 %v254, %v275
      %v278 = vadd.f32 %v255, %v275
      %v279 = vadd.f32 %v256, %v275
      %v280 = vadd.f32 %v257, %v275
      %v281 = vadd.f32 %v258, %v275
      %v282 = vadd.f32 %v259, %v275
      %v283 = vadd.f32 %v260, %v275
      %v284 = vadd.f32 %v261, %v275
      %v285 = vadd.f32 %v262, %v275
      %v286 = vadd.f32 %v263, %v275
      %v287 = vadd.f32 %v264, %v275
      %v288 = vadd.f32 %v265, %v275
      %v289 = vadd.f32 %v266, %v275
      %v290 = vadd.f32 %v267, %v275
      %v291 = vadd.f32 %v268, %v275
      %v292 = vadd.f32 %v269, %v275
      %v293 = vmax.f32 %v277, 0.0
      %v294 = vmax.f32 %v278, 0.0
      %v295 = vmax.f32 %v279, 0.0
      %v296 = vmax.f32 %v280, 0.0
      %v297 = vmax.f32 %v281, 0.0
      %v298 = vmax.f32 %v282, 0.0
      %v299 = vmax.f32 %v283, 0.0
      %v300 = vmax.f32 %v284, 0.0
      %v301 = vmax.f32 %v285, 0.0
      %v302 = vmax.f32 %v286, 0.0
      %v303 = vmax.f32 %v287, 0.0
      %v304 = vmax.f32 %v288, 0.0
      %v305 = vmax.f32 %v289, 0.0
      %v306 = vmax.f32 %v290, 0.0
      %v307 = vmax.f32 %v291, 0.0
      %v308 = vmax.f32 %v292, 0.0
      %vm309 = vcmask 64512
      %310 = vst.msk [vmem:[%s213] sm:$0xff] %vm309, %v293
      %311 = vst.msk [vmem:[%s213 + $0x8] sm:$0xff] %vm309, %v294
      %312 = vst.msk [vmem:[%s213 + $0x10] sm:$0xff] %vm309, %v295
      %313 = vst.msk [vmem:[%s213 + $0x18] sm:$0xff] %vm309, %v296
      %314 = vst.msk [vmem:[%s213 + $0x20] sm:$0xff] %vm309, %v297
      %315 = vst.msk [vmem:[%s213 + $0x28] sm:$0xff] %vm309, %v298
      %316 = vst.msk [vmem:[%s213 + $0x30] sm:$0xff] %vm309, %v299
      %317 = vst.msk [vmem:[%s213 + $0x38] sm:$0xff] %vm309, %v300
      %318 = vst.msk [vmem:[%s213 + $0x40] sm:$0xff] %vm309, %v301
      %319 = vst.msk [vmem:[%s213 + $0x48] sm:$0xff] %vm309, %v302
      %320 = vst.msk [vmem:[%s213 + $0x50] sm:$0xff] %vm309, %v303
      %321 = vst.msk [vmem:[%s213 + $0x58] sm:$0xff] %vm309, %v304
      %322 = vst.msk [vmem:[%s213 + $0x60] sm:$0xff] %vm309, %v305
      %323 = vst.msk [vmem:[%s213 + $0x68] sm:$0xff] %vm309, %v306
      %324 = vst.msk [vmem:[%s213 + $0x70] sm:$0xff] %vm309, %v307
      %325 = vst.msk [vmem:[%s213 + $0x78] sm:$0xff] %vm309, %v308
      %s326 = smul.u32 8, %s19
      %p327 = scmp.lt.s32.totalorder %s18, 1
      %s328 = scalar_select %p327, %s18, 1
      %p329 = scmp.lt.s32.totalorder %s326, 15
      %s330 = scalar_select %p329, %s326, 15
      %s331 = smul.addr %s330, 2
      %s332 = smul.addr %s328, 32
      %s333 = sadd.s32 %s331, %s332
      %s334 = smul.addr %s333, 8
      %s335 = scalar_lea.vmem %s3, %s334
      // Predicated region
      $region33: #{decoder_block_forward.7} parent=31 // pred_check
        %p336 = pneg %p116
      $region34: #{decoder_block_forward.7} parent=31 // pred_check_branch
        %338 = sbr.rel (%p336) target = $region36
      $region35: #{decoder_block_forward.7} parent=31 // pred_region
        %s339 = smul.u32 8, %s19
      $region36: #{decoder_block_forward.7} parent=31 // pred_fallthru
        _
    $region32: #{decoder_block_forward.7} parent=5 // pred_fallthru
      _
    %p340 = scmp.le.s32.totalorder 2, %s9
    // Predicated region
    $region37: #{decoder_block_forward.7} parent=5 // pred_check
      %p341 = pneg %p340
    $region38: #{decoder_block_forward.7} parent=5 // pred_check_branch
      %343 = sbr.rel (%p341) target = $region40
    $region39: #{decoder_block_forward.7} parent=5 // pred_region
      %s344 = ssub.s32 %s9, 2
      // Predicated region
      $region41: #{decoder_block_forward.7} parent=39 // pred_check
        %p345 = pneg %p122
      $region42: #{decoder_block_forward.7} parent=39 // pred_check_branch
        %347 = sbr.rel (%p345) target = $region44
      $region43: #{decoder_block_forward.7} parent=39 // pred_region
        %s348 = smul.u32 8, %s21
        %p349 = scmp.lt.s32.totalorder %s20, 1
        %s350 = scalar_select %p349, %s20, 1
        %p351 = scmp.lt.s32.totalorder %s348, 15
        %s352 = scalar_select %p351, %s348, 15
        %s353 = smul.addr %s352, 2
        %s354 = smul.addr %s350, 32
        %s355 = sadd.s32 %s353, %s354
        %s356 = smul.addr %s355, 8
        %s357 = scalar_lea.vmem %s3, %s356
      $region44: #{decoder_block_forward.7} parent=39 // pred_fallthru
        _
    $region40: #{decoder_block_forward.7} parent=5 // pred_fallthru
      _
  $region6: #{decoder_block_forward.7} parent=0 // loop_footer
    %s13 = sadd.s32 1, %s9
  $region7: #{decoder_block_forward.7} parent=0 // loop_footer_branch
    %8 = sbr.rel target = $region3
  $region8: #{decoder_block_forward.7} parent=0 // loop_exit
    _

// kernel: decoder_block_forward.5
$region0: #{decoder_block_forward.5}
  #allocation0 [shape = 'u32[]', space=smem, size = 0x4, offset = 0x4, fixed_abs, tag = 'smem constant byte address 0x4 - core index']
  #allocation1 [shape = 'u32[144,128]{1,0:T(1,128)}', space=vmem, size = 0x12000, scoped, tag = 'internal scratch']
  %s0 = inlined_call_operand.vmem [shape: bf16[2,16,16,4], index: 0, kind: input, shape index: {}]
  %s1 = inlined_call_operand.vmem [shape: bf16[2,2,16,4], index: 1, kind: input, shape index: {}]
  %s2 = inlined_call_operand.vmem [shape: bf16[2,2,16,4], index: 2, kind: input, shape index: {}]
  %s3 = inlined_call_operand.vmem [shape: bf16[2,16,16,4], index: 3, kind: input, shape index: {}]
  %s4 = inlined_call_operand.vmem [shape: bf16[2,2,16,4], index: 4, kind: input, shape index: {}]
  %s5 = inlined_call_operand.vmem [shape: bf16[2,2,16,4], index: 5, kind: input, shape index: {}]
  %s6 = inlined_call_operand.vmem [shape: bf16[72,8], index: 6, kind: input, shape index: {}]
  %s7 = inlined_call_operand.vmem [shape: bf16[2,16,16,8], index: 7, kind: output, shape index: {0}]
  %s8 = inlined_call_operand.vmem [shape: f32[2,2,1,8], index: 8, kind: output, shape index: {1}]
  %s9 = inlined_call_operand.vmem [shape: f32[2,2,1,8], index: 9, kind: output, shape index: {2}]
  %10 = xla_tuple %s7, %s8, %s9
  %s11 = sld [smem:[#allocation0]]
  $region77: #{decoder_block_forward.5} parent=0
    _
  %s13 = ssub.s32 1, %s11
  %s14 = scalar_select 0, %s13, %s11
  loop: start=0, step=1, limit=6
  $region2: #{decoder_block_forward.5} parent=0 // loop_pre_header
    _
  $region3: #{decoder_block_forward.5} parent=0 // loop_header
    %s16 = sphi 0, %s20
    %p17 = scmp.ge.s32.totalorder %s16, 6
    %s23 = sphi 0, %s35
    %s24 = sphi 0, %s31
    %s25 = sphi 0, %s23
    %s26 = sphi 0, %s24
    %s27 = sphi 0, %s25
    %s28 = sphi 0, %s26
    %s40 = sphi 0, %s42
    %s43 = sphi 0, %s40
    %s44 = sphi 0, %s43
    %s60 = sphi 0, %s44
    %s68 = sphi 0, %s70
    %s71 = sphi 0, %s68
    %s72 = sphi 0, %s71
    %s88 = sphi 0, %s72
    %s96 = sphi 0, %s98
    %s99 = sphi 0, %s96
    %s100 = sphi 0, %s99
    %s116 = sphi 0, %s100
    %s124 = sphi 0, %s126
    %s127 = sphi 0, %s124
    %s128 = sphi 0, %s127
    %s144 = sphi 0, %s128
    %s152 = sphi 0, %s154
    %s155 = sphi 0, %s152
    %s156 = sphi 0, %s155
    %s172 = sphi 0, %s156
    %s180 = sphi 0, %s182
    %s183 = sphi 0, %s180
    %s184 = sphi 0, %s183
    %s200 = sphi 0, %s184
    %s204 = sphi 0, %s204
    %s206 = sphi 0, %s204
    %s207 = sphi 0, %s206
    %s221 = sphi 0, %s207
    %s229 = sphi 0, %s231
    %s232 = sphi 0, %s229
    %s233 = sphi 0, %s232
    %s249 = sphi 0, %s233
    %s257 = sphi 0, %s259
    %s260 = sphi 0, %s257
    %s261 = sphi 0, %s260
    %s277 = sphi 0, %s261
    %s285 = sphi 0, %s287
    %s288 = sphi 0, %s285
    %s289 = sphi 0, %s288
    %s305 = sphi 0, %s289
  $region4: #{decoder_block_forward.5} parent=0 // loop_header_branch
    %19 = sbr.rel (%p17) target = $region8
  $region5: #{decoder_block_forward.5} parent=0 // loop_body
    %s21 = ssub.s32 %s16, 1
    %s22 = ssub.s32 %s16, 2
    %s29 = sadd.s32 1, %s24
    %p30 = scmp.ge.s32.totalorder %s29, 2
    %s31 = scalar_select %p30, 0, %s29
    %s32 = sadd.s32 1, %s23
    %s33 = scalar_select %p30, %s32, %s23
    %p34 = scmp.ge.s32.totalorder %s33, 2
    %s35 = scalar_select %p34, 0, %s33
    %s36 = ssub.s32 %s23, %s35
    %s37 = ssub.s32 %s24, %s31
    %s38 = sor.u32 %s36, %s37
    %p39 = scmp.eq.s32.totalorder %s38, 0
    %s41 = sadd.s32 %s40, 1
    %s42 = scalar_select %p39, %s40, %s41
    %p45 = pneg %p39
    %p46 = scmp.eq.s32.totalorder %s16, 3
    %p47 = por %p45, %p46
    %p48 = scmp.ne.s32.totalorder %s40, %s43
    %p49 = scmp.eq.s32.totalorder %s16, 0
    %p50 = por %p48, %p49
    %p51 = scmp.ne.s32.totalorder %s40, %s43
    %p52 = scmp.eq.s32.totalorder %s21, 3
    %p53 = por %p51, %p52
    %p54 = scmp.ne.s32.totalorder %s43, %s44
    %p55 = scmp.eq.s32.totalorder %s21, 0
    %p56 = por %p54, %p55
    %p57 = scmp.ne.s32.totalorder %s43, %s44
    %p58 = scmp.eq.s32.totalorder %s22, 3
    %p59 = por %p57, %p58
    %p61 = scmp.ne.s32.totalorder %s44, %s60
    %p62 = scmp.eq.s32.totalorder %s22, 0
    %p63 = por %p61, %p62
    %s64 = ssub.s32 %s23, %s35
    %s65 = ssub.s32 %s24, %s31
    %s66 = sor.u32 %s64, %s65
    %p67 = scmp.eq.s32.totalorder %s66, 0
    %s69 = sadd.s32 %s68, 1
    %s70 = scalar_select %p67, %s68, %s69
    %p73 = pneg %p67
    %p74 = scmp.eq.s32.totalorder %s16, 3
    %p75 = por %p73, %p74
    %p76 = scmp.ne.s32.totalorder %s68, %s71
    %p77 = scmp.eq.s32.totalorder %s16, 0
    %p78 = por %p76, %p77
    %p79 = scmp.ne.s32.totalorder %s68, %s71
    %p80 = scmp.eq.s32.totalorder %s21, 3
    %p81 = por %p79, %p80
    %p82 = scmp.ne.s32.totalorder %s71, %s72
    %p83 = scmp.eq.s32.totalorder %s21, 0
    %p84 = por %p82, %p83
    %p85 = scmp.ne.s32.totalorder %s71, %s72
    %p86 = scmp.eq.s32.totalorder %s22, 3
    %p87 = por %p85, %p86
    %p89 = scmp.ne.s32.totalorder %s72, %s88
    %p90 = scmp.eq.s32.totalorder %s22, 0
    %p91 = por %p89, %p90
    %s92 = ssub.s32 %s23, %s35
    %s93 = ssub.s32 %s24, %s31
    %s94 = sor.u32 %s92, %s93
    %p95 = scmp.eq.s32.totalorder %s94, 0
    %s97 = sadd.s32 %s96, 1
    %s98 = scalar_select %p95, %s96, %s97
    %p101 = pneg %p95
    %p102 = scmp.eq.s32.totalorder %s16, 3
    %p103 = por %p101, %p102
    %p104 = scmp.ne.s32.totalorder %s96, %s99
    %p105 = scmp.eq.s32.totalorder %s16, 0
    %p106 = por %p104, %p105
    %p107 = scmp.ne.s32.totalorder %s96, %s99
    %p108 = scmp.eq.s32.totalorder %s21, 3
    %p109 = por %p107, %p108
    %p110 = scmp.ne.s32.totalorder %s99, %s100
    %p111 = scmp.eq.s32.totalorder %s21, 0
    %p112 = por %p110, %p111
    %p113 = scmp.ne.s32.totalorder %s99, %s100
    %p114 = scmp.eq.s32.totalorder %s22, 3
    %p115 = por %p113, %p114
    %p117 = scmp.ne.s32.totalorder %s100, %s116
    %p118 = scmp.eq.s32.totalorder %s22, 0
    %p119 = por %p117, %p118
    %s120 = ssub.s32 %s23, %s35
    %s121 = ssub.s32 %s24, %s31
    %s122 = sor.u32 %s120, %s121
    %p123 = scmp.eq.s32.totalorder %s122, 0
    %s125 = sadd.s32 %s124, 1
    %s126 = scalar_select %p123, %s124, %s125
    %p129 = pneg %p123
    %p130 = scmp.eq.s32.totalorder %s16, 3
    %p131 = por %p129, %p130
    %p132 = scmp.ne.s32.totalorder %s124, %s127
    %p133 = scmp.eq.s32.totalorder %s16, 0
    %p134 = por %p132, %p133
    %p135 = scmp.ne.s32.totalorder %s124, %s127
    %p136 = scmp.eq.s32.totalorder %s21, 3
    %p137 = por %p135, %p136
    %p138 = scmp.ne.s32.totalorder %s127, %s128
    %p139 = scmp.eq.s32.totalorder %s21, 0
    %p140 = por %p138, %p139
    %p141 = scmp.ne.s32.totalorder %s127, %s128
    %p142 = scmp.eq.s32.totalorder %s22, 3
    %p143 = por %p141, %p142
    %p145 = scmp.ne.s32.totalorder %s128, %s144
    %p146 = scmp.eq.s32.totalorder %s22, 0
    %p147 = por %p145, %p146
    %s148 = ssub.s32 %s23, %s35
    %s149 = ssub.s32 %s24, %s31
    %s150 = sor.u32 %s148, %s149
    %p151 = scmp.eq.s32.totalorder %s150, 0
    %s153 = sadd.s32 %s152, 1
    %s154 = scalar_select %p151, %s152, %s153
    %p157 = pneg %p151
    %p158 = scmp.eq.s32.totalorder %s16, 3
    %p159 = por %p157, %p158
    %p160 = scmp.ne.s32.totalorder %s152, %s155
    %p161 = scmp.eq.s32.totalorder %s16, 0
    %p162 = por %p160, %p161
    %p163 = scmp.ne.s32.totalorder %s152, %s155
    %p164 = scmp.eq.s32.totalorder %s21, 3
    %p165 = por %p163, %p164
    %p166 = scmp.ne.s32.totalorder %s155, %s156
    %p167 = scmp.eq.s32.totalorder %s21, 0
    %p168 = por %p166, %p167
    %p169 = scmp.ne.s32.totalorder %s155, %s156
    %p170 = scmp.eq.s32.totalorder %s22, 3
    %p171 = por %p169, %p170
    %p173 = scmp.ne.s32.totalorder %s156, %s172
    %p174 = scmp.eq.s32.totalorder %s22, 0
    %p175 = por %p173, %p174
    %s176 = ssub.s32 %s23, %s35
    %s177 = ssub.s32 %s24, %s31
    %s178 = sor.u32 %s176, %s177
    %p179 = scmp.eq.s32.totalorder %s178, 0
    %s181 = sadd.s32 %s180, 1
    %s182 = scalar_select %p179, %s180, %s181
    %p185 = pneg %p179
    %p186 = scmp.eq.s32.totalorder %s16, 3
    %p187 = por %p185, %p186
    %p188 = scmp.ne.s32.totalorder %s180, %s183
    %p189 = scmp.eq.s32.totalorder %s16, 0
    %p190 = por %p188, %p189
    %p191 = scmp.ne.s32.totalorder %s180, %s183
    %p192 = scmp.eq.s32.totalorder %s21, 3
    %p193 = por %p191, %p192
    %p194 = scmp.ne.s32.totalorder %s183, %s184
    %p195 = scmp.eq.s32.totalorder %s21, 0
    %p196 = por %p194, %p195
    %p197 = scmp.ne.s32.totalorder %s183, %s184
    %p198 = scmp.eq.s32.totalorder %s22, 3
    %p199 = por %p197, %p198
    %p201 = scmp.ne.s32.totalorder %s184, %s200
    %p202 = scmp.eq.s32.totalorder %s22, 0
    %p203 = por %p201, %p202
    %s205 = sadd.s32 %s204, 1
    %p208 = scmp.eq.s32.totalorder %s16, 3
    %p209 = scmp.ne.s32.totalorder %s204, %s206
    %p210 = scmp.eq.s32.totalorder %s16, 0
    %p211 = por %p209, %p210
    %p212 = scmp.ne.s32.totalorder %s204, %s206
    %p213 = scmp.eq.s32.totalorder %s21, 3
    %p214 = por %p212, %p213
    %p215 = scmp.ne.s32.totalorder %s206, %s207
    %p216 = scmp.eq.s32.totalorder %s21, 0
    %p217 = por %p215, %p216
    %p218 = scmp.ne.s32.totalorder %s206, %s207
    %p219 = scmp.eq.s32.totalorder %s22, 3
    %p220 = por %p218, %p219
    %p222 = scmp.ne.s32.totalorder %s207, %s221
    %p223 = scmp.eq.s32.totalorder %s22, 0
    %p224 = por %p222, %p223
    %s225 = ssub.s32 %s23, %s35
    %s226 = ssub.s32 %s24, %s31
    %s227 = sor.u32 %s225, %s226
    %p228 = scmp.eq.s32.totalorder %s227, 0
    %s230 = sadd.s32 %s229, 1
    %s231 = scalar_select %p228, %s229, %s230
    %p234 = pneg %p228
    %p235 = scmp.eq.s32.totalorder %s16, 3
    %p236 = por %p234, %p235
    %p237 = scmp.ne.s32.totalorder %s229, %s232
    %p238 = scmp.eq.s32.totalorder %s16, 0
    %p239 = por %p237, %p238
    %p240 = scmp.ne.s32.totalorder %s229, %s232
    %p241 = scmp.eq.s32.totalorder %s21, 3
    %p242 = por %p240, %p241
    %p243 = scmp.ne.s32.totalorder %s232, %s233
    %p244 = scmp.eq.s32.totalorder %s21, 0
    %p245 = por %p243, %p244
    %p246 = scmp.ne.s32.totalorder %s232, %s233
    %p247 = scmp.eq.s32.totalorder %s22, 3
    %p248 = por %p246, %p247
    %p250 = scmp.ne.s32.totalorder %s233, %s249
    %p251 = scmp.eq.s32.totalorder %s22, 0
    %p252 = por %p250, %p251
    %s253 = ssub.s32 %s23, %s35
    %s254 = ssub.s32 %s24, %s31
    %s255 = sor.u32 %s253, %s254
    %p256 = scmp.eq.s32.totalorder %s255, 0
    %s258 = sadd.s32 %s257, 1
    %s259 = scalar_select %p256, %s257, %s258
    %p262 = pneg %p256
    %p263 = scmp.eq.s32.totalorder %s16, 3
    %p264 = por %p262, %p263
    %p265 = scmp.ne.s32.totalorder %s257, %s260
    %p266 = scmp.eq.s32.totalorder %s16, 0
    %p267 = por %p265, %p266
    %p268 = scmp.ne.s32.totalorder %s257, %s260
    %p269 = scmp.eq.s32.totalorder %s21, 3
    %p270 = por %p268, %p269
    %p271 = scmp.ne.s32.totalorder %s260, %s261
    %p272 = scmp.eq.s32.totalorder %s21, 0
    %p273 = por %p271, %p272
    %p274 = scmp.ne.s32.totalorder %s260, %s261
    %p275 = scmp.eq.s32.totalorder %s22, 3
    %p276 = por %p274, %p275
    %p278 = scmp.ne.s32.totalorder %s261, %s277
    %p279 = scmp.eq.s32.totalorder %s22, 0
    %p280 = por %p278, %p279
    %s281 = ssub.s32 %s23, %s35
    %s282 = ssub.s32 %s24, %s31
    %s283 = sor.u32 %s281, %s282
    %p284 = scmp.eq.s32.totalorder %s283, 0
    %s286 = sadd.s32 %s285, 1
    %s287 = scalar_select %p284, %s285, %s286
    %p290 = pneg %p284
    %p291 = scmp.eq.s32.totalorder %s16, 3
    %p292 = por %p290, %p291
    %p293 = scmp.ne.s32.totalorder %s285, %s288
    %p294 = scmp.eq.s32.totalorder %s16, 0
    %p295 = por %p293, %p294
    %p296 = scmp.ne.s32.totalorder %s285, %s288
    %p297 = scmp.eq.s32.totalorder %s21, 3
    %p298 = por %p296, %p297
    %p299 = scmp.ne.s32.totalorder %s288, %s289
    %p300 = scmp.eq.s32.totalorder %s21, 0
    %p301 = por %p299, %p300
    %p302 = scmp.ne.s32.totalorder %s288, %s289
    %p303 = scmp.eq.s32.totalorder %s22, 3
    %p304 = por %p302, %p303
    %p306 = scmp.ne.s32.totalorder %s289, %s305
    %p307 = scmp.eq.s32.totalorder %s22, 0
    %p308 = por %p306, %p307
    %p309 = scmp.le.s32.totalorder 1, %s16
    %p310 = scmp.lt.s32.totalorder %s16, 5
    %p311 = pnand %p309, %p310
    %p312 = pneg %p311
    // Predicated region
    $region9: #{decoder_block_forward.5} parent=5 // pred_check
      _
    $region10: #{decoder_block_forward.5} parent=5 // pred_check_branch
      %314 = sbr.rel (%p311) target = $region12
    $region11: #{decoder_block_forward.5} parent=5 // pred_region
      %s315 = ssub.s32 %s16, 1
      // Predicated region
      $region13: #{decoder_block_forward.5} parent=11 // pred_check
        %p316 = pneg %p217
      $region14: #{decoder_block_forward.5} parent=11 // pred_check_branch
        %318 = sbr.rel (%p316) target = $region16
      $region15: #{decoder_block_forward.5} parent=11 // pred_region
        _
      $region16: #{decoder_block_forward.5} parent=11 // pred_fallthru
        _
    $region12: #{decoder_block_forward.5} parent=5 // pred_fallthru
      _
    %p319 = scmp.lt.s32.totalorder %s16, 4
    // Predicated region
    $region17: #{decoder_block_forward.5} parent=5 // pred_check
      %p320 = pneg %p319
    $region18: #{decoder_block_forward.5} parent=5 // pred_check_branch
      %322 = sbr.rel (%p320) target = $region20
    $region19: #{decoder_block_forward.5} parent=5 // pred_region
      // Predicated region
      $region21: #{decoder_block_forward.5} parent=19 // pred_check
        %p323 = pneg %p50
      $region22: #{decoder_block_forward.5} parent=19 // pred_check_branch
        %325 = sbr.rel (%p323) target = $region24
      $region23: #{decoder_block_forward.5} parent=19 // pred_region
        %s326 = smul.u32 8, %s24
        %p327 = scmp.lt.s32.totalorder %s23, 1
        %s328 = scalar_select %p327, %s23, 1
        %p329 = scmp.lt.s32.totalorder %s326, 15
        %s330 = scalar_select %p329, %s326, 15
        %s331 = smul.addr %s330, 2
        %s332 = smul.addr %s328, 32
        %s333 = sadd.s32 %s331, %s332
        %s334 = smul.addr %s333, 4
        %s335 = scalar_lea.vmem %s0, %s334
        %s336 = smul.u32 8, %s24
      $region24: #{decoder_block_forward.5} parent=19 // pred_fallthru
        _
      // Predicated region
      $region25: #{decoder_block_forward.5} parent=19 // pred_check
        %p337 = pneg %p78
      $region26: #{decoder_block_forward.5} parent=19 // pred_check_branch
        %339 = sbr.rel (%p337) target = $region28
      $region27: #{decoder_block_forward.5} parent=19 // pred_region
        %p340 = scmp.lt.s32.totalorder %s23, 1
        %s341 = scalar_select %p340, %s23, 1
        %p342 = scmp.lt.s32.totalorder %s24, 1
        %s343 = scalar_select %p342, %s24, 1
        %s344 = smul.addr %s343, 2
        %s345 = smul.addr %s341, 4
        %s346 = sadd.s32 %s344, %s345
        %s347 = smul.addr %s346, 4
        %s348 = scalar_lea.vmem %s1, %s347
      $region28: #{decoder_block_forward.5} parent=19 // pred_fallthru
        _
      // Predicated region
      $region29: #{decoder_block_forward.5} parent=19 // pred_check
        %p349 = pneg %p106
      $region30: #{decoder_block_forward.5} parent=19 // pred_check_branch
        %351 = sbr.rel (%p349) target = $region32
      $region31: #{decoder_block_forward.5} parent=19 // pred_region
        %p352 = scmp.lt.s32.totalorder %s23, 1
        %s353 = scalar_select %p352, %s23, 1
        %p354 = scmp.lt.s32.totalorder %s24, 1
        %s355 = scalar_select %p354, %s24, 1
        %s356 = smul.addr %s355, 2
        %s357 = smul.addr %s353, 4
        %s358 = sadd.s32 %s356, %s357
        %s359 = smul.addr %s358, 4
        %s360 = scalar_lea.vmem %s2, %s359
      $region32: #{decoder_block_forward.5} parent=19 // pred_fallthru
        _
      // Predicated region
      $region33: #{decoder_block_forward.5} parent=19 // pred_check
        %p361 = pneg %p134
      $region34: #{decoder_block_forward.5} parent=19 // pred_check_branch
        %363 = sbr.rel (%p361) target = $region36
      $region35: #{decoder_block_forward.5} parent=19 // pred_region
        %s364 = smul.u32 8, %s24
        %p365 = scmp.lt.s32.totalorder %s23, 1
        %s366 = scalar_select %p365, %s23, 1
        %p367 = scmp.lt.s32.totalorder %s364, 15
        %s368 = scalar_select %p367, %s364, 15
        %s369 = smul.addr %s368, 2
        %s370 = smul.addr %s366, 32
        %s371 = sadd.s32 %s369, %s370
        %s372 = smul.addr %s371, 4
        %s373 = scalar_lea.vmem %s3, %s372
        %s374 = smul.u32 8, %s24
      $region36: #{decoder_block_forward.5} parent=19 // pred_fallthru
        _
      // Predicated region
      $region37: #{decoder_block_forward.5} parent=19 // pred_check
        %p375 = pneg %p162
      $region38: #{decoder_block_forward.5} parent=19 // pred_check_branch
        %377 = sbr.rel (%p375) target = $region40
      $region39: #{decoder_block_forward.5} parent=19 // pred_region
        %p378 = scmp.lt.s32.totalorder %s23, 1
        %s379 = scalar_select %p378, %s23, 1
        %p380 = scmp.lt.s32.totalorder %s24, 1
        %s381 = scalar_select %p380, %s24, 1
        %s382 = smul.addr %s381, 2
        %s383 = smul.addr %s379, 4
        %s384 = sadd.s32 %s382, %s383
        %s385 = smul.addr %s384, 4
        %s386 = scalar_lea.vmem %s4, %s385
      $region40: #{decoder_block_forward.5} parent=19 // pred_fallthru
        _
      // Predicated region
      $region41: #{decoder_block_forward.5} parent=19 // pred_check
        %p387 = pneg %p190
      $region42: #{decoder_block_forward.5} parent=19 // pred_check_branch
        %389 = sbr.rel (%p387) target = $region44
      $region43: #{decoder_block_forward.5} parent=19 // pred_region
        %p390 = scmp.lt.s32.totalorder %s23, 1
        %s391 = scalar_select %p390, %s23, 1
        %p392 = scmp.lt.s32.totalorder %s24, 1
        %s393 = scalar_select %p392, %s24, 1
        %s394 = smul.addr %s393, 2
        %s395 = smul.addr %s391, 4
        %s396 = sadd.s32 %s394, %s395
        %s397 = smul.addr %s396, 4
        %s398 = scalar_lea.vmem %s5, %s397
      $region44: #{decoder_block_forward.5} parent=19 // pred_fallthru
        _
    $region20: #{decoder_block_forward.5} parent=5 // pred_fallthru
      _
    %p399 = scmp.le.s32.totalorder 1, %s16
    %p400 = scmp.lt.s32.totalorder %s16, 5
    %p401 = pnand %p399, %p400
    %p402 = pneg %p401
    // Predicated region
    $region45: #{decoder_block_forward.5} parent=5 // pred_check
      _
    $region46: #{decoder_block_forward.5} parent=5 // pred_check_branch
      %404 = sbr.rel (%p401) target = $region48
    $region47: #{decoder_block_forward.5} parent=5 // pred_region
      %s405 = ssub.s32 %s16, 1
      %s406 = smul.u32 8, %s26
      %p407 = scmp.lt.s32.totalorder %s25, 1
      %s408 = scalar_select %p407, %s25, 1
      %p409 = scmp.lt.s32.totalorder %s406, 15
      %s410 = scalar_select %p409, %s406, 15
      %s411 = smul.addr %s410, 2
      %s412 = smul.addr %s408, 32
      %s413 = sadd.s32 %s411, %s412
      %s414 = smul.addr %s413, 4
      %s415 = scalar_lea.vmem %s0, %s414
      %p416 = pneg %p56
      %p417 = pneg %p53
      %p418 = scmp.lt.s32.totalorder %s25, 1
      %s419 = scalar_select %p418, %s25, 1
      %p420 = scmp.lt.s32.totalorder %s26, 1
      %s421 = scalar_select %p420, %s26, 1
      %s422 = smul.addr %s421, 2
      %s423 = smul.addr %s419, 4
      %s424 = sadd.s32 %s422, %s423
      %s425 = smul.addr %s424, 4
      %s426 = scalar_lea.vmem %s1, %s425
      %p427 = pneg %p84
      %p428 = pneg %p81
      %p429 = scmp.lt.s32.totalorder %s25, 1
      %s430 = scalar_select %p429, %s25, 1
      %p431 = scmp.lt.s32.totalorder %s26, 1
      %s432 = scalar_select %p431, %s26, 1
      %s433 = smul.addr %s432, 2
      %s434 = smul.addr %s430, 4
      %s435 = sadd.s32 %s433, %s434
      %s436 = smul.addr %s435, 4
      %s437 = scalar_lea.vmem %s2, %s436
      %p438 = pneg %p112
      %p439 = pneg %p109
      %s440 = smul.u32 8, %s26
      %p441 = scmp.lt.s32.totalorder %s25, 1
      %s442 = scalar_select %p441, %s25, 1
      %p443 = scmp.lt.s32.totalorder %s440, 15
      %s444 = scalar_select %p443, %s440, 15
      %s445 = smul.addr %s444, 2
      %s446 = smul.addr %s442, 32
      %s447 = sadd.s32 %s445, %s446
      %s448 = smul.addr %s447, 4
      %s449 = scalar_lea.vmem %s3, %s448
      %p450 = pneg %p140
      %p451 = pneg %p137
      %p452 = scmp.lt.s32.totalorder %s25, 1
      %s453 = scalar_select %p452, %s25, 1
      %p454 = scmp.lt.s32.totalorder %s26, 1
      %s455 = scalar_select %p454, %s26, 1
      %s456 = smul.addr %s455, 2
      %s457 = smul.addr %s453, 4
      %s458 = sadd.s32 %s456, %s457
      %s459 = smul.addr %s458, 4
      %s460 = scalar_lea.vmem %s4, %s459
      %p461 = pneg %p168
      %p462 = pneg %p165
      %p463 = scmp.lt.s32.totalorder %s25, 1
      %s464 = scalar_select %p463, %s25, 1
      %p465 = scmp.lt.s32.totalorder %s26, 1
      %s466 = scalar_select %p465, %s26, 1
      %s467 = smul.addr %s466, 2
      %s468 = smul.addr %s464, 4
      %s469 = sadd.s32 %s467, %s468
      %s470 = smul.addr %s469, 4
      %s471 = scalar_lea.vmem %s5, %s470
      %p472 = pneg %p196
      %p473 = pneg %p193
      %p474 = pneg %p217
      %p475 = pneg %p214
      %p476 = pneg %p245
      %p477 = pneg %p242
      %s478 = smul.u32 8, %s26
      %p479 = scmp.lt.s32.totalorder %s25, 1
      %s480 = scalar_select %p479, %s25, 1
      %p481 = scmp.lt.s32.totalorder %s478, 15
      %s482 = scalar_select %p481, %s478, 15
      %s483 = smul.addr %s482, 2
      %s484 = smul.addr %s480, 32
      %s485 = sadd.s32 %s483, %s484
      %s486 = smul.addr %s485, 4
      %s487 = scalar_lea.vmem %s7, %s486
      %p488 = pneg %p273
      %p489 = pneg %p270
      %p490 = scmp.lt.s32.totalorder %s25, 1
      %s491 = scalar_select %p490, %s25, 1
      %p492 = scmp.lt.s32.totalorder %s26, 1
      %s493 = scalar_select %p492, %s26, 1
      %s494 = smul.addr %s491, 2
      %s495 = sadd.s32 %s493, %s494
      %s496 = scalar_lea.vmem %s8, %s495
      %p497 = pneg %p301
      %p498 = pneg %p298
      %p499 = scmp.lt.s32.totalorder %s25, 1
      %s500 = scalar_select %p499, %s25, 1
      %p501 = scmp.lt.s32.totalorder %s26, 1
      %s502 = scalar_select %p501, %s26, 1
      %s503 = smul.addr %s500, 2
      %s504 = sadd.s32 %s502, %s503
      %s505 = scalar_lea.vmem %s9, %s504
      %s506 = smul.u32 8, %s26
      %p507 = scmp.lt.s32.totalorder %s25, 1
      %s508 = scalar_select %p507, %s25, 1
      %p509 = scmp.lt.s32.totalorder %s506, 15
      %s510 = scalar_select %p509, %s506, 15
      %s511 = smul.addr %s510, 2
      %s512 = smul.addr %s508, 32
      %s513 = sadd.s32 %s511, %s512
      %s514 = smul.addr %s513, 4
      %s515 = scalar_lea.vmem %s0, %s514
      %s516 = smul.u32 8, %s26
      %p517 = scmp.lt.s32.totalorder %s25, 1
      %s518 = scalar_select %p517, %s25, 1
      %p519 = scmp.lt.s32.totalorder %s26, 1
      %s520 = scalar_select %p519, %s26, 1
      %s521 = smul.addr %s520, 2
      %s522 = smul.addr %s518, 4
      %s523 = sadd.s32 %s521, %s522
      %s524 = smul.addr %s523, 4
      %s525 = scalar_lea.vmem %s1, %s524
      %p526 = scmp.lt.s32.totalorder %s25, 1
      %s527 = scalar_select %p526, %s25, 1
      %p528 = scmp.lt.s32.totalorder %s26, 1
      %s529 = scalar_select %p528, %s26, 1
      %s530 = smul.addr %s529, 2
      %s531 = smul.addr %s527, 4
      %s532 = sadd.s32 %s530, %s531
      %s533 = smul.addr %s532, 4
      %s534 = scalar_lea.vmem %s2, %s533
      %s535 = smul.u32 8, %s26
      %p536 = scmp.lt.s32.totalorder %s25, 1
      %s537 = scalar_select %p536, %s25, 1
      %p538 = scmp.lt.s32.totalorder %s535, 15
      %s539 = scalar_select %p538, %s535, 15
      %s540 = smul.addr %s539, 2
      %s541 = smul.addr %s537, 32
      %s542 = sadd.s32 %s540, %s541
      %s543 = smul.addr %s542, 4
      %s544 = scalar_lea.vmem %s3, %s543
      %s545 = smul.u32 8, %s26
      %p546 = scmp.lt.s32.totalorder %s25, 1
      %s547 = scalar_select %p546, %s25, 1
      %p548 = scmp.lt.s32.totalorder %s26, 1
      %s549 = scalar_select %p548, %s26, 1
      %s550 = smul.addr %s549, 2
      %s551 = smul.addr %s547, 4
      %s552 = sadd.s32 %s550, %s551
      %s553 = smul.addr %s552, 4
      %s554 = scalar_lea.vmem %s4, %s553
      %p555 = scmp.lt.s32.totalorder %s25, 1
      %s556 = scalar_select %p555, %s25, 1
      %p557 = scmp.lt.s32.totalorder %s26, 1
      %s558 = scalar_select %p557, %s26, 1
      %s559 = smul.addr %s558, 2
      %s560 = smul.addr %s556, 4
      %s561 = sadd.s32 %s559, %s560
      %s562 = smul.addr %s561, 4
      %s563 = scalar_lea.vmem %s5, %s562
      %s564 = smul.u32 8, %s26
      %p565 = scmp.lt.s32.totalorder %s25, 1
      %s566 = scalar_select %p565, %s25, 1
      %p567 = scmp.lt.s32.totalorder %s564, 15
      %s568 = scalar_select %p567, %s564, 15
      %s569 = smul.addr %s568, 2
      %s570 = smul.addr %s566, 32
      %s571 = sadd.s32 %s569, %s570
      %s572 = smul.addr %s571, 4
      %s573 = scalar_lea.vmem %s7, %s572
      %s574 = smul.u32 8, %s26
      %p575 = scmp.lt.s32.totalorder %s25, 1
      %s576 = scalar_select %p575, %s25, 1
      %p577 = scmp.lt.s32.totalorder %s26, 1
      %s578 = scalar_select %p577, %s26, 1
      %s579 = smul.addr %s576, 2
      %s580 = sadd.s32 %s578, %s579
      %s581 = scalar_lea.vmem %s8, %s580
      %p582 = scmp.lt.s32.totalorder %s25, 1
      %s583 = scalar_select %p582, %s25, 1
      %p584 = scmp.lt.s32.totalorder %s26, 1
      %s585 = scalar_select %p584, %s26, 1
      %s586 = smul.addr %s583, 2
      %s587 = sadd.s32 %s585, %s586
      %s588 = scalar_lea.vmem %s9, %s587
      %v590 = vld [vmem:[%s515] sm:$0xf]
      %v591 = vld [vmem:[%s515 + $0x4] sm:$0xf]
      %v592 = vld [vmem:[%s515 + $0x8] sm:$0xf]
      %v593 = vld [vmem:[%s515 + $0xc] sm:$0xf]
      %v594 = vld [vmem:[%s515 + $0x10] sm:$0xf]
      %v595 = vld [vmem:[%s515 + $0x14] sm:$0xf]
      %v596 = vld [vmem:[%s515 + $0x18] sm:$0xf]
      %v597 = vld [vmem:[%s515 + $0x1c] sm:$0xf]
      %v598 = vld [vmem:[%s515 + $0x20] sm:$0xf]
      %v599 = vld [vmem:[%s515 + $0x24] sm:$0xf]
      %v600 = vld [vmem:[%s515 + $0x28] sm:$0xf]
      %v601 = vld [vmem:[%s515 + $0x2c] sm:$0xf]
      %v602 = vld [vmem:[%s515 + $0x30] sm:$0xf]
      %v603 = vld [vmem:[%s515 + $0x34] sm:$0xf]
      %v604 = vld [vmem:[%s515 + $0x38] sm:$0xf]
      %v605 = vld [vmem:[%s515 + $0x3c] sm:$0xf]
      %v606 = vld [vmem:[%s544] sm:$0xf]
      %v607 = vld [vmem:[%s544 + $0x4] sm:$0xf]
      %v608 = vld [vmem:[%s544 + $0x8] sm:$0xf]
      %v609 = vld [vmem:[%s544 + $0xc] sm:$0xf]
      %v610 = vld [vmem:[%s544 + $0x10] sm:$0xf]
      %v611 = vld [vmem:[%s544 + $0x14] sm:$0xf]
      %v612 = vld [vmem:[%s544 + $0x18] sm:$0xf]
      %v613 = vld [vmem:[%s544 + $0x1c] sm:$0xf]
      %v614 = vld [vmem:[%s544 + $0x20] sm:$0xf]
      %v615 = vld [vmem:[%s544 + $0x24] sm:$0xf]
      %v616 = vld [vmem:[%s544 + $0x28] sm:$0xf]
      %v617 = vld [vmem:[%s544 + $0x2c] sm:$0xf]
      %v618 = vld [vmem:[%s544 + $0x30] sm:$0xf]
      %v619 = vld [vmem:[%s544 + $0x34] sm:$0xf]
      %v620 = vld [vmem:[%s544 + $0x38] sm:$0xf]
      %v621 = vld [vmem:[%s544 + $0x3c] sm:$0xf]
      %v638 = vunpack.c.l.b16 %v590
      %v639 = vunpack.c.l.b16 %v591
      %v640 = vunpack.c.l.b16 %v592
      %v641 = vunpack.c.l.b16 %v593
      %v642 = vunpack.c.l.b16 %v594
      %v643 = vunpack.c.l.b16 %v595
      %v644 = vunpack.c.l.b16 %v596
      %v645 = vunpack.c.l.b16 %v597
      %v646 = vunpack.c.l.b16 %v598
      %v647 = vunpack.c.l.b16 %v599
      %v648 = vunpack.c.l.b16 %v600
      %v649 = vunpack.c.l.b16 %v601
      %v650 = vunpack.c.l.b16 %v602
      %v651 = vunpack.c.l.b16 %v603
      %v652 = vunpack.c.l.b16 %v604
      %v653 = vunpack.c.l.b16 %v605
      %v654 = vpack.c.b16 %v639, %v638
      %v655 = vpack.c.b16 %v641, %v640
      %v656 = vpack.c.b16 %v643, %v642
      %v657 = vpack.c.b16 %v645, %v644
      %v658 = vpack.c.b16 %v647, %v646
      %v659 = vpack.c.b16 %v649, %v648
      %v660 = vpack.c.b16 %v651, %v650
      %v661 = vpack.c.b16 %v653, %v652
      %v678 = vunpack.c.l.b16 %v606
      %v679 = vunpack.c.l.b16 %v607
      %v680 = vunpack.c.l.b16 %v608
      %v681 = vunpack.c.l.b16 %v609
      %v682 = vunpack.c.l.b16 %v610
      %v683 = vunpack.c.l.b16 %v611
      %v684 = vunpack.c.l.b16 %v612
      %v685 = vunpack.c.l.b16 %v613
      %v686 = vunpack.c.l.b16 %v614
      %v687 = vunpack.c.l.b16 %v615
      %v688 = vunpack.c.l.b16 %v616
      %v689 = vunpack.c.l.b16 %v617
      %v690 = vunpack.c.l.b16 %v618
      %v691 = vunpack.c.l.b16 %v619
      %v692 = vunpack.c.l.b16 %v620
      %v693 = vunpack.c.l.b16 %v621
      %v694 = vpack.c.b16 %v679, %v678
      %v695 = vpack.c.b16 %v681, %v680
      %v696 = vpack.c.b16 %v683, %v682
      %v697 = vpack.c.b16 %v685, %v684
      %v698 = vpack.c.b16 %v687, %v686
      %v699 = vpack.c.b16 %v689, %v688
      %v700 = vpack.c.b16 %v691, %v690
      %v701 = vpack.c.b16 %v693, %v692
      %702 = vrot.lane.b32.xlu0 %v694, 4
      %v703 = vpop.permute.xlu0 %702
      %704 = vrot.lane.b32.xlu0 %v695, 4
      %v705 = vpop.permute.xlu0 %704
      %706 = vrot.lane.b32.xlu0 %v696, 4
      %v707 = vpop.permute.xlu0 %706
      %708 = vrot.lane.b32.xlu0 %v697, 4
      %v709 = vpop.permute.xlu0 %708
      %710 = vrot.lane.b32.xlu0 %v698, 4
      %v711 = vpop.permute.xlu0 %710
      %712 = vrot.lane.b32.xlu0 %v699, 4
      %v713 = vpop.permute.xlu0 %712
      %714 = vrot.lane.b32.xlu0 %v700, 4
      %v715 = vpop.permute.xlu0 %714
      %716 = vrot.lane.b32.xlu0 %v701, 4
      %v717 = vpop.permute.xlu0 %716
      %vm718 = vcmask 31744
      %v721 = vsel %vm718, %v654, %v703
      %v724 = vsel %vm718, %v655, %v705
      %v727 = vsel %vm718, %v656, %v707
      %v730 = vsel %vm718, %v657, %v709
      %v733 = vsel %vm718, %v658, %v711
      %v736 = vsel %vm718, %v659, %v713
      %v739 = vsel %vm718, %v660, %v715
      %v742 = vsel %vm718, %v661, %v717
      %v743 = vld [vmem:[%s525] sm:$0xf]
      %v744 = vld [vmem:[%s525 + $0x4] sm:$0xf]
      %v745 = vld [vmem:[%s554] sm:$0xf]
      %v746 = vld [vmem:[%s554 + $0x4] sm:$0xf]
      %v749 = vunpack.c.l.b16 %v743
      %v750 = vunpack.c.l.b16 %v744
      %v751 = vpack.c.b16 %v750, %v749
      %v754 = vunpack.c.l.b16 %v745
      %v755 = vunpack.c.l.b16 %v746
      %v756 = vpack.c.b16 %v755, %v754
      %757 = vrot.lane.b32.xlu0 %v756, 4
      %v758 = vpop.permute.xlu0 %757
      %v761 = vsel %vm718, %v751, %v758
      %v762 = vld [vmem:[%s534] sm:$0xf]
      %v763 = vld [vmem:[%s534 + $0x4] sm:$0xf]
      %v764 = vld [vmem:[%s563] sm:$0xf]
      %v765 = vld [vmem:[%s563 + $0x4] sm:$0xf]
      %v768 = vunpack.c.l.b16 %v762
      %v769 = vunpack.c.l.b16 %v763
      %v770 = vpack.c.b16 %v769, %v768
      %v773 = vunpack.c.l.b16 %v764
      %v774 = vunpack.c.l.b16 %v765
      %v775 = vpack.c.b16 %v774, %v773
      %776 = vrot.lane.b32.xlu0 %v775, 4
      %v777 = vpop.permute.xlu0 %776
      %v780 = vsel %vm718, %v770, %v777
      %v781 = vshrl.u32 %v761, 16
      %v783 = vrot.slane %v781, 7
      %v784 = vshll.u32 %v761, 16
      %v786 = vor.u32 %v783, %v784
      %v787 = vshrl.u32 %v721, 16
      %v789 = vrot.slane %v787, 7
      %v790 = vshll.u32 %v721, 16
      %v792 = vor.u32 %v789, %v790
      %v793 = vshrl.u32 %v724, 16
      %v795 = vrot.slane %v793, 7
      %v796 = vshll.u32 %v724, 16
      %v798 = vor.u32 %v795, %v796
      %v799 = vshrl.u32 %v727, 16
      %v801 = vrot.slane %v799, 7
      %v802 = vshll.u32 %v727, 16
      %v804 = vor.u32 %v801, %v802
      %v805 = vshrl.u32 %v730, 16
      %v807 = vrot.slane %v805, 7
      %v808 = vshll.u32 %v730, 16
      %v810 = vor.u32 %v807, %v808
      %v811 = vshrl.u32 %v733, 16
      %v813 = vrot.slane %v811, 7
      %v814 = vshll.u32 %v733, 16
      %v816 = vor.u32 %v813, %v814
      %v817 = vshrl.u32 %v736, 16
      %v819 = vrot.slane %v817, 7
      %v820 = vshll.u32 %v736, 16
      %v822 = vor.u32 %v819, %v820
      %v823 = vshrl.u32 %v739, 16
      %v825 = vrot.slane %v823, 7
      %v826 = vshll.u32 %v739, 16
      %v828 = vor.u32 %v825, %v826
      %v829 = vshrl.u32 %v742, 16
      %v831 = vrot.slane %v829, 7
      %v832 = vshll.u32 %v742, 16
      %v834 = vor.u32 %v831, %v832
      %v835 = vshrl.u32 %v780, 16
      %v837 = vrot.slane %v835, 7
      %v838 = vshll.u32 %v780, 16
      %v840 = vor.u32 %v837, %v838
      %vm861 = vcmask 1040384
      %vm862 = vsmask.f32 256
      %vm863 = vmand %vm861, %vm862
      %v864 = vsel %vm863, 0, %v786
      %v865 = vsel %vm863, 0, %v792
      %v866 = vsel %vm863, 0, %v798
      %v867 = vsel %vm863, 0, %v804
      %v868 = vsel %vm863, 0, %v810
      %v869 = vsel %vm863, 0, %v816
      %v870 = vsel %vm863, 0, %v822
      %v871 = vsel %vm863, 0, %v828
      %v872 = vsel %vm863, 0, %v834
      %v873 = vsel %vm863, 0, %v840
      %v874 = vsel %vm863, %v783, 0
      %v875 = vsel %vm863, %v789, 0
      %v876 = vsel %vm863, %v795, 0
      %v877 = vsel %vm863, %v801, 0
      %v878 = vsel %vm863, %v807, 0
      %v879 = vsel %vm863, %v813, 0
      %v880 = vsel %vm863, %v819, 0
      %v881 = vsel %vm863, %v825, 0
      %v882 = vsel %vm863, %v831, 0
      %v883 = vsel %vm863, %v837, 0
      %vm884 = vsmask.f32 7424
      %v886 = vshrl.u32 %v864, 16
      %v888 = vshll.u32 %v864, 16
      %v890 = vrot.slane %v888, 1
      %v891 = vor.u32 %v886, %v890
      %v893 = vshll.u32 %v874, 16
      %v895 = vrot.slane %v893, 1
      %v896 = vsel %vm884, %v891, %v895
      %v898 = vshrl.u32 %v865, 16
      %v900 = vshll.u32 %v865, 16
      %v902 = vrot.slane %v900, 1
      %v903 = vor.u32 %v898, %v902
      %v905 = vshll.u32 %v875, 16
      %v907 = vrot.slane %v905, 1
      %v908 = vsel %vm884, %v903, %v907
      %v910 = vshrl.u32 %v866, 16
      %v912 = vshll.u32 %v866, 16
      %v914 = vrot.slane %v912, 1
      %v915 = vor.u32 %v910, %v914
      %v917 = vshll.u32 %v876, 16
      %v919 = vrot.slane %v917, 1
      %v920 = vsel %vm884, %v915, %v919
      %v922 = vshrl.u32 %v867, 16
      %v924 = vshll.u32 %v867, 16
      %v926 = vrot.slane %v924, 1
      %v927 = vor.u32 %v922, %v926
      %v929 = vshll.u32 %v877, 16
      %v931 = vrot.slane %v929, 1
      %v932 = vsel %vm884, %v927, %v931
      %v934 = vshrl.u32 %v868, 16
      %v936 = vshll.u32 %v868, 16
      %v938 = vrot.slane %v936, 1
      %v939 = vor.u32 %v934, %v938
      %v941 = vshll.u32 %v878, 16
      %v943 = vrot.slane %v941, 1
      %v944 = vsel %vm884, %v939, %v943
      %v946 = vshrl.u32 %v869, 16
      %v948 = vshll.u32 %v869, 16
      %v950 = vrot.slane %v948, 1
      %v951 = vor.u32 %v946, %v950
      %v953 = vshll.u32 %v879, 16
      %v955 = vrot.slane %v953, 1
      %v956 = vsel %vm884, %v951, %v955
      %v958 = vshrl.u32 %v870, 16
      %v960 = vshll.u32 %v870, 16
      %v962 = vrot.slane %v960, 1
      %v963 = vor.u32 %v958, %v962
      %v965 = vshll.u32 %v880, 16
      %v967 = vrot.slane %v965, 1
      %v968 = vsel %vm884, %v963, %v967
      %v970 = vshrl.u32 %v871, 16
      %v972 = vshll.u32 %v871, 16
      %v974 = vrot.slane %v972, 1
      %v975 = vor.u32 %v970, %v974
      %v977 = vshll.u32 %v881, 16
      %v979 = vrot.slane %v977, 1
      %v980 = vsel %vm884, %v975, %v979
      %vm997 = vcmask 1046528
      %v998 = vrot.slane %v864, 1
      %v999 = vrot.slane %v874, 1
      %v1000 = vsel %vm997, %v998, %v999
      %v1001 = vrot.slane %v865, 1
      %v1002 = vrot.slane %v875, 1
      %v1003 = vsel %vm997, %v1001, %v1002
      %v1004 = vrot.slane %v866, 1
      %v1005 = vrot.slane %v876, 1
      %v1006 = vsel %vm997, %v1004, %v1005
      %v1007 = vrot.slane %v867, 1
      %v1008 = vrot.slane %v877, 1
      %v1009 = vsel %vm997, %v1007, %v1008
      %v1010 = vrot.slane %v868, 1
      %v1011 = vrot.slane %v878, 1
      %v1012 = vsel %vm997, %v1010, %v1011
      %v1013 = vrot.slane %v869, 1
      %v1014 = vrot.slane %v879, 1
      %v1015 = vsel %vm997, %v1013, %v1014
      %v1016 = vrot.slane %v870, 1
      %v1017 = vrot.slane %v880, 1
      %v1018 = vsel %vm997, %v1016, %v1017
      %v1019 = vrot.slane %v871, 1
      %v1020 = vrot.slane %v881, 1
      %v1021 = vsel %vm997, %v1019, %v1020
      %v1023 = vshrl.u32 %v872, 16
      %v1025 = vshll.u32 %v872, 16
      %v1027 = vrot.slane %v1025, 1
      %v1028 = vor.u32 %v1023, %v1027
      %v1030 = vshll.u32 %v882, 16
      %v1032 = vrot.slane %v1030, 1
      %v1033 = vsel %vm884, %v1028, %v1032
      %v1036 = vrot.slane %v872, 1
      %v1037 = vrot.slane %v882, 1
      %v1038 = vsel %vm997, %v1036, %v1037
      %v1040 = vshrl.u32 %v873, 16
      %v1042 = vshll.u32 %v873, 16
      %v1044 = vrot.slane %v1042, 1
      %v1045 = vor.u32 %v1040, %v1044
      %v1047 = vshll.u32 %v883, 16
      %v1049 = vrot.slane %v1047, 1
      %v1050 = vsel %vm884, %v1045, %v1049
      %v1053 = vrot.slane %v873, 1
      %v1054 = vrot.slane %v883, 1
      %v1055 = vsel %vm997, %v1053, %v1054
      %1056 = vrot.lane.b32.xlu0 %v896, 8
      %v1057 = vpop.permute.xlu0 %1056
      %1058 = vrot.lane.b32.xlu0 %v908, 8
      %v1059 = vpop.permute.xlu0 %1058
      %1060 = vrot.lane.b32.xlu0 %v920, 8
      %v1061 = vpop.permute.xlu0 %1060
      %1062 = vrot.lane.b32.xlu0 %v932, 8
      %v1063 = vpop.permute.xlu0 %1062
      %1064 = vrot.lane.b32.xlu0 %v944, 8
      %v1065 = vpop.permute.xlu0 %1064
      %1066 = vrot.lane.b32.xlu0 %v956, 8
      %v1067 = vpop.permute.xlu0 %1066
      %1068 = vrot.lane.b32.xlu0 %v968, 8
      %v1069 = vpop.permute.xlu0 %1068
      %1070 = vrot.lane.b32.xlu0 %v980, 8
      %v1071 = vpop.permute.xlu0 %1070
      %1072 = vrot.lane.b32.xlu0 %v1000, 16
      %v1073 = vpop.permute.xlu0 %1072
      %1074 = vrot.lane.b32.xlu0 %v1003, 16
      %v1075 = vpop.permute.xlu0 %1074
      %1076 = vrot.lane.b32.xlu0 %v1006, 16
      %v1077 = vpop.permute.xlu0 %1076
      %1078 = vrot.lane.b32.xlu0 %v1009, 16
      %v1079 = vpop.permute.xlu0 %1078
      %1080 = vrot.lane.b32.xlu0 %v1012, 16
      %v1081 = vpop.permute.xlu0 %1080
      %1082 = vrot.lane.b32.xlu0 %v1015, 16
      %v1083 = vpop.permute.xlu0 %1082
      %1084 = vrot.lane.b32.xlu0 %v1018, 16
      %v1085 = vpop.permute.xlu0 %1084
      %1086 = vrot.lane.b32.xlu0 %v1021, 16
      %v1087 = vpop.permute.xlu0 %1086
      %1088 = vrot.lane.b32.xlu0 %v865, 24
      %v1089 = vpop.permute.xlu0 %1088
      %1090 = vrot.lane.b32.xlu0 %v866, 24
      %v1091 = vpop.permute.xlu0 %1090
      %1092 = vrot.lane.b32.xlu0 %v867, 24
      %v1093 = vpop.permute.xlu0 %1092
      %1094 = vrot.lane.b32.xlu0 %v868, 24
      %v1095 = vpop.permute.xlu0 %1094
      %1096 = vrot.lane.b32.xlu0 %v869, 24
      %v1097 = vpop.permute.xlu0 %1096
      %1098 = vrot.lane.b32.xlu0 %v870, 24
      %v1099 = vpop.permute.xlu0 %1098
      %1100 = vrot.lane.b32.xlu0 %v871, 24
      %v1101 = vpop.permute.xlu0 %1100
      %1102 = vrot.lane.b32.xlu0 %v872, 24
      %v1103 = vpop.permute.xlu0 %1102
      %1104 = vrot.lane.b32.xlu0 %v908, 32
      %v1105 = vpop.permute.xlu0 %1104
      %1106 = vrot.lane.b32.xlu0 %v920, 32
      %v1107 = vpop.permute.xlu0 %1106
      %1108 = vrot.lane.b32.xlu0 %v932, 32
      %v1109 = vpop.permute.xlu0 %1108
      %1110 = vrot.lane.b32.xlu0 %v944, 32
      %v1111 = vpop.permute.xlu0 %1110
      %1112 = vrot.lane.b32.xlu0 %v956, 32
      %v1113 = vpop.permute.xlu0 %1112
      %1114 = vrot.lane.b32.xlu0 %v968, 32
      %v1115 = vpop.permute.xlu0 %1114
      %1116 = vrot.lane.b32.xlu0 %v980, 32
      %v1117 = vpop.permute.xlu0 %1116
      %1118 = vrot.lane.b32.xlu0 %v1033, 32
      %v1119 = vpop.permute.xlu0 %1118
      %1120 = vrot.lane.b32.xlu0 %v1003, 40
      %v1121 = vpop.permute.xlu0 %1120
      %1122 = vrot.lane.b32.xlu0 %v1006, 40
      %v1123 = vpop.permute.xlu0 %1122
      %1124 = vrot.lane.b32.xlu0 %v1009, 40
      %v1125 = vpop.permute.xlu0 %1124
      %1126 = vrot.lane.b32.xlu0 %v1012, 40
      %v1127 = vpop.permute.xlu0 %1126
      %1128 = vrot.lane.b32.xlu0 %v1015, 40
      %v1129 = vpop.permute.xlu0 %1128
      %1130 = vrot.lane.b32.xlu0 %v1018, 40
      %v1131 = vpop.permute.xlu0 %1130
      %1132 = vrot.lane.b32.xlu0 %v1021, 40
      %v1133 = vpop.permute.xlu0 %1132
      %1134 = vrot.lane.b32.xlu0 %v1038, 40
      %v1135 = vpop.permute.xlu0 %1134
      %1136 = vrot.lane.b32.xlu0 %v866, 48
      %v1137 = vpop.permute.xlu0 %1136
      %1138 = vrot.lane.b32.xlu0 %v867, 48
      %v1139 = vpop.permute.xlu0 %1138
      %1140 = vrot.lane.b32.xlu0 %v868, 48
      %v1141 = vpop.permute.xlu0 %1140
      %1142 = vrot.lane.b32.xlu0 %v869, 48
      %v1143 = vpop.permute.xlu0 %1142
      %1144 = vrot.lane.b32.xlu0 %v870, 48
      %v1145 = vpop.permute.xlu0 %1144
      %1146 = vrot.lane.b32.xlu0 %v871, 48
      %v1147 = vpop.permute.xlu0 %1146
      %1148 = vrot.lane.b32.xlu0 %v872, 48
      %v1149 = vpop.permute.xlu0 %1148
      %1150 = vrot.lane.b32.xlu0 %v873, 48
      %v1151 = vpop.permute.xlu0 %1150
      %1152 = vrot.lane.b32.xlu0 %v920, 56
      %v1153 = vpop.permute.xlu0 %1152
      %1154 = vrot.lane.b32.xlu0 %v932, 56
      %v1155 = vpop.permute.xlu0 %1154
      %1156 = vrot.lane.b32.xlu0 %v944, 56
      %v1157 = vpop.permute.xlu0 %1156
      %1158 = vrot.lane.b32.xlu0 %v956, 56
      %v1159 = vpop.permute.xlu0 %1158
      %1160 = vrot.lane.b32.xlu0 %v968, 56
      %v1161 = vpop.permute.xlu0 %1160
      %1162 = vrot.lane.b32.xlu0 %v980, 56
      %v1163 = vpop.permute.xlu0 %1162
      %1164 = vrot.lane.b32.xlu0 %v1033, 56
      %v1165 = vpop.permute.xlu0 %1164
      %1166 = vrot.lane.b32.xlu0 %v1050, 56
      %v1167 = vpop.permute.xlu0 %1166
      %1168 = vrot.lane.b32.xlu0 %v1006, 64
      %v1169 = vpop.permute.xlu0 %1168
      %1170 = vrot.lane.b32.xlu0 %v1009, 64
      %v1171 = vpop.permute.xlu0 %1170
      %1172 = vrot.lane.b32.xlu0 %v1012, 64
      %v1173 = vpop.permute.xlu0 %1172
      %1174 = vrot.lane.b32.xlu0 %v1015, 64
      %v1175 = vpop.permute.xlu0 %1174
      %1176 = vrot.lane.b32.xlu0 %v1018, 64
      %v1177 = vpop.permute.xlu0 %1176
      %1178 = vrot.lane.b32.xlu0 %v1021, 64
      %v1179 = vpop.permute.xlu0 %1178
      %1180 = vrot.lane.b32.xlu0 %v1038, 64
      %v1181 = vpop.permute.xlu0 %1180
      %1182 = vrot.lane.b32.xlu0 %v1055, 64
      %v1183 = vpop.permute.xlu0 %1182
      %vm1184 = vcmask 64512
      %v1186 = vsel %vm1184, %v864, %v1057
      %v1188 = vsel %vm1184, %v865, %v1059
      %v1190 = vsel %vm1184, %v866, %v1061
      %v1192 = vsel %vm1184, %v867, %v1063
      %v1194 = vsel %vm1184, %v868, %v1065
      %v1196 = vsel %vm1184, %v869, %v1067
      %v1198 = vsel %vm1184, %v870, %v1069
      %v1200 = vsel %vm1184, %v871, %v1071
      %vm1201 = vcmask 130048
      %v1203 = vsel %vm1201, %v1186, %v1073
      %v1205 = vsel %vm1201, %v1188, %v1075
      %v1207 = vsel %vm1201, %v1190, %v1077
      %v1209 = vsel %vm1201, %v1192, %v1079
      %v1211 = vsel %vm1201, %v1194, %v1081
      %v1213 = vsel %vm1201, %v1196, %v1083
      %v1215 = vsel %vm1201, %v1198, %v1085
      %v1217 = vsel %vm1201, %v1200, %v1087
      %vm1218 = vcmask 195584
      %v1220 = vsel %vm1218, %v1203, %v1089
      %v1222 = vsel %vm1218, %v1205, %v1091
      %v1224 = vsel %vm1218, %v1207, %v1093
      %v1226 = vsel %vm1218, %v1209, %v1095
      %v1228 = vsel %vm1218, %v1211, %v1097
      %v1230 = vsel %vm1218, %v1213, %v1099
      %v1232 = vsel %vm1218, %v1215, %v1101
      %v1234 = vsel %vm1218, %v1217, %v1103
      %vm1235 = vcmask 261120
      %v1237 = vsel %vm1235, %v1220, %v1105
      %v1239 = vsel %vm1235, %v1222, %v1107
      %v1241 = vsel %vm1235, %v1224, %v1109
      %v1243 = vsel %vm1235, %v1226, %v1111
      %v1245 = vsel %vm1235, %v1228, %v1113
      %v1247 = vsel %vm1235, %v1230, %v1115
      %v1249 = vsel %vm1235, %v1232, %v1117
      %v1251 = vsel %vm1235, %v1234, %v1119
      %vm1252 = vcmask 326656
      %v1254 = vsel %vm1252, %v1237, %v1121
      %v1256 = vsel %vm1252, %v1239, %v1123
      %v1258 = vsel %vm1252, %v1241, %v1125
      %v1260 = vsel %vm1252, %v1243, %v1127
      %v1262 = vsel %vm1252, %v1245, %v1129
      %v1264 = vsel %vm1252, %v1247, %v1131
      %v1266 = vsel %vm1252, %v1249, %v1133
      %v1268 = vsel %vm1252, %v1251, %v1135
      %vm1269 = vcmask 392192
      %v1271 = vsel %vm1269, %v1254, %v1137
      %v1273 = vsel %vm1269, %v1256, %v1139
      %v1275 = vsel %vm1269, %v1258, %v1141
      %v1277 = vsel %vm1269, %v1260, %v1143
      %v1279 = vsel %vm1269, %v1262, %v1145
      %v1281 = vsel %vm1269, %v1264, %v1147
      %v1283 = vsel %vm1269, %v1266, %v1149
      %v1285 = vsel %vm1269, %v1268, %v1151
      %vm1286 = vcmask 457728
      %v1288 = vsel %vm1286, %v1271, %v1153
      %v1290 = vsel %vm1286, %v1273, %v1155
      %v1292 = vsel %vm1286, %v1275, %v1157
      %v1294 = vsel %vm1286, %v1277, %v1159
      %v1296 = vsel %vm1286, %v1279, %v1161
      %v1298 = vsel %vm1286, %v1281, %v1163
      %v1300 = vsel %vm1286, %v1283, %v1165
      %v1302 = vsel %vm1286, %v1285, %v1167
      %vm1303 = vcmask 523264
      %v1305 = vsel %vm1303, %v1288, %v1169
      %v1307 = vsel %vm1303, %v1290, %v1171
      %v1309 = vsel %vm1303, %v1292, %v1173
      %v1311 = vsel %vm1303, %v1294, %v1175
      %v1313 = vsel %vm1303, %v1296, %v1177
      %v1315 = vsel %vm1303, %v1298, %v1179
      %v1317 = vsel %vm1303, %v1300, %v1181
      %v1319 = vsel %vm1303, %v1302, %v1183
      %v1320 = vld [vmem:[%s6] sm:$0xf]
      %v1321 = vld [vmem:[%s6 + $0x4] sm:$0xf]
      %v1322 = vld [vmem:[%s6 + $0x8] sm:$0xf]
      %v1323 = vld [vmem:[%s6 + $0xc] sm:$0xf]
      %v1324 = vld [vmem:[%s6 + $0x10] sm:$0xf]
      %v1325 = vld [vmem:[%s6 + $0x14] sm:$0xf]
      %v1326 = vld [vmem:[%s6 + $0x18] sm:$0xf]
      %v1327 = vld [vmem:[%s6 + $0x1c] sm:$0xf]
      %v1328 = vld [vmem:[%s6 + $0x20] sm:$0xf]
      %v1338 = vunpack.c.l.b16 %v1320
      %v1339 = vunpack.c.l.b16 %v1321
      %v1340 = vunpack.c.l.b16 %v1322
      %v1341 = vunpack.c.l.b16 %v1323
      %v1342 = vunpack.c.l.b16 %v1324
      %v1343 = vunpack.c.l.b16 %v1325
      %v1344 = vunpack.c.l.b16 %v1326
      %v1345 = vunpack.c.l.b16 %v1327
      %v1346 = vunpack.c.l.b16 %v1328
      %v1347 = vpack.c.b16 %v1339, %v1338
      %v1348 = vpack.c.b16 %v1341, %v1340
      %v1349 = vpack.c.b16 %v1343, %v1342
      %v1350 = vpack.c.b16 %v1345, %v1344
      %v1351 = vpack.c.b16 %v1346, %v1346
      %vm1356 = vcmask 588800
      %v1357 = vsel %vm1356, %v1305, 0
      %v1359 = vsel %vm1356, %v1307, 0
      %v1361 = vsel %vm1356, %v1309, 0
      %v1363 = vsel %vm1356, %v1311, 0
      %v1365 = vsel %vm1356, %v1313, 0
      %v1367 = vsel %vm1356, %v1315, 0
      %v1369 = vsel %vm1356, %v1317, 0
      %v1371 = vsel %vm1356, %v1319, 0
      %vm1373 = vcmask 1043456
      %v1375 = vsel %vm1373, %v1351, 0
      %1377 = vmatprep.subr.bf16.mxu0 0
      %1378 = vmatpush1.bf16.msra.mxu0 0
      %1379 = vmatprep.subr.bf16.mxu0 0
      %1380 = vmatpush1.bf16.msra.mxu0 0
      %1381 = vmatprep.subr.bf16.mxu0 0
      %1382 = vmatpush1.bf16.msra.mxu0 0
      %1383 = vmatprep.subr.bf16.mxu0 0
      %1384 = vmatpush1.bf16.msra.mxu0 %v1375
      %1385 = vmatprep.subr.bf16.mxu0 0
      %1386 = vmatpush1.bf16.msra.mxu0 %v1350
      %1387 = vmatprep.subr.bf16.mxu0 0
      %1388 = vmatpush1.bf16.msra.mxu0 %v1349
      %1389 = vmatprep.subr.bf16.mxu0 0
      %1390 = vmatpush1.bf16.msra.mxu0 %v1348
      %1391 = vmatprep.subr.bf16.mxu0 0
      %1392 = vmatpush1.bf16.msra.mxu0 %v1347
      %1393 = vmatprep.subr.bf16.mxu0 0
      %1394 = vmatpush2.bf16.msra.mxu0 0
      %1395 = vmatprep.subr.bf16.mxu0 0
      %1396 = vmatpush2.bf16.msra.mxu0 0
      %1397 = vmatprep.subr.bf16.mxu0 0
      %1398 = vmatpush2.bf16.msra.mxu0 0
      %1399 = vmatprep.subr.bf16.mxu0 0
      %1400 = vmatpush2.bf16.msra.mxu0 0
      %1401 = vmatprep.subr.bf16.mxu0 0
      %1402 = vmatpush2.bf16.msra.mxu0 0
      %1403 = vmatprep.subr.bf16.mxu0 0
      %1404 = vmatpush2.bf16.msra.mxu0 0
      %1405 = vmatprep.subr.bf16.mxu0 0
      %1406 = vmatpush2.bf16.msra.mxu0 0
      %1407 = vmatprep.subr.bf16.mxu0 0
      %1408 = vmatpush2.bf16.msra.mxu0 0
      %1409 = vmatprep.mubr.bf16.mxu0 0
      %1410 = vmatmul.mubr.bf16.gmra.mxu0 %v1357
      %v1411 = vpop.f32.mrf.mxu0
      %v1412 = vadd.f32 0.0, %v1411
      %v1413 = vpop.f32.mrf.mxu0
      %v1414 = vpop.f32.mrf.mxu0
      %v1415 = vadd.f32 0.0, %v1414
      %v1416 = vpop.f32.mrf.mxu0
      %1417 = vmatprep.mubr.bf16.mxu0 0
      %1418 = vmatmul.mubr.bf16.gmra.mxu0 %v1359
      %v1419 = vpop.f32.mrf.mxu0
      %v1420 = vadd.f32 0.0, %v1419
      %v1421 = vpop.f32.mrf.mxu0
      %v1422 = vpop.f32.mrf.mxu0
      %v1423 = vadd.f32 0.0, %v1422
      %v1424 = vpop.f32.mrf.mxu0
      %1425 = vmatprep.mubr.bf16.mxu0 0
      %1426 = vmatmul.mubr.bf16.gmra.mxu0 %v1361
      %v1427 = vpop.f32.mrf.mxu0
      %v1428 = vadd.f32 0.0, %v1427
      %v1429 = vpop.f32.mrf.mxu0
      %v1430 = vpop.f32.mrf.mxu0
      %v1431 = vadd.f32 0.0, %v1430
      %v1432 = vpop.f32.mrf.mxu0
      %1433 = vmatprep.mubr.bf16.mxu0 0
      %1434 = vmatmul.mubr.bf16.gmra.mxu0 %v1363
      %v1435 = vpop.f32.mrf.mxu0
      %v1436 = vadd.f32 0.0, %v1435
      %v1437 = vpop.f32.mrf.mxu0
      %v1438 = vpop.f32.mrf.mxu0
      %v1439 = vadd.f32 0.0, %v1438
      %v1440 = vpop.f32.mrf.mxu0
      %1441 = vmatprep.mubr.bf16.mxu0 0
      %1442 = vmatmul.mubr.bf16.gmra.mxu0 %v1365
      %v1443 = vpop.f32.mrf.mxu0
      %v1444 = vadd.f32 0.0, %v1443
      %v1445 = vpop.f32.mrf.mxu0
      %v1446 = vpop.f32.mrf.mxu0
      %v1447 = vadd.f32 0.0, %v1446
      %v1448 = vpop.f32.mrf.mxu0
      %1449 = vmatprep.mubr.bf16.mxu0 0
      %1450 = vmatmul.mubr.bf16.gmra.mxu0 %v1367
      %v1451 = vpop.f32.mrf.mxu0
      %v1452 = vadd.f32 0.0, %v1451
      %v1453 = vpop.f32.mrf.mxu0
      %v1454 = vpop.f32.mrf.mxu0
      %v1455 = vadd.f32 0.0, %v1454
      %v1456 = vpop.f32.mrf.mxu0
      %1457 = vmatprep.mubr.bf16.mxu0 0
      %1458 = vmatmul.mubr.bf16.gmra.mxu0 %v1369
      %v1459 = vpop.f32.mrf.mxu0
      %v1460 = vadd.f32 0.0, %v1459
      %v1461 = vpop.f32.mrf.mxu0
      %v1462 = vpop.f32.mrf.mxu0
      %v1463 = vadd.f32 0.0, %v1462
      %v1464 = vpop.f32.mrf.mxu0
      %1465 = vmatprep.mubr.bf16.mxu0 0
      %1466 = vmatmul.mubr.bf16.gmra.mxu0 %v1371
      %v1467 = vpop.f32.mrf.mxu0
      %v1468 = vadd.f32 0.0, %v1467
      %v1469 = vpop.f32.mrf.mxu0
      %v1470 = vpop.f32.mrf.mxu0
      %v1471 = vadd.f32 0.0, %v1470
      %v1472 = vpop.f32.mrf.mxu0
      %1473 = vdwg.mxu0
      %v1474 = vpack.c.bf16 %v1415, %v1412
      %v1475 = vpack.c.bf16 %v1423, %v1420
      %v1476 = vpack.c.bf16 %v1431, %v1428
      %v1477 = vpack.c.bf16 %v1439, %v1436
      %v1478 = vpack.c.bf16 %v1447, %v1444
      %v1479 = vpack.c.bf16 %v1455, %v1452
      %v1480 = vpack.c.bf16 %v1463, %v1460
      %v1481 = vpack.c.bf16 %v1471, %v1468
      %v1490 = vunpack.c.l.b16 %v1474
      %v1491 = vunpack.c.h.b16 %v1474
      %v1492 = vunpack.c.l.b16 %v1475
      %v1493 = vunpack.c.h.b16 %v1475
      %v1494 = vunpack.c.l.b16 %v1476
      %v1495 = vunpack.c.h.b16 %v1476
      %v1496 = vunpack.c.l.b16 %v1477
      %v1497 = vunpack.c.h.b16 %v1477
      %v1498 = vunpack.c.l.b16 %v1478
      %v1499 = vunpack.c.h.b16 %v1478
      %v1500 = vunpack.c.l.b16 %v1479
      %v1501 = vunpack.c.h.b16 %v1479
      %v1502 = vunpack.c.l.b16 %v1480
      %v1503 = vunpack.c.h.b16 %v1480
      %v1504 = vunpack.c.l.b16 %v1481
      %v1505 = vunpack.c.h.b16 %v1481
      %v1506 = vpack.c.b16 %v1490, %v1490
      %v1507 = vpack.c.b16 %v1491, %v1491
      %v1508 = vpack.c.b16 %v1492, %v1492
      %v1509 = vpack.c.b16 %v1493, %v1493
      %v1510 = vpack.c.b16 %v1494, %v1494
      %v1511 = vpack.c.b16 %v1495, %v1495
      %v1512 = vpack.c.b16 %v1496, %v1496
      %v1513 = vpack.c.b16 %v1497, %v1497
      %v1514 = vpack.c.b16 %v1498, %v1498
      %v1515 = vpack.c.b16 %v1499, %v1499
      %v1516 = vpack.c.b16 %v1500, %v1500
      %v1517 = vpack.c.b16 %v1501, %v1501
      %v1518 = vpack.c.b16 %v1502, %v1502
      %v1519 = vpack.c.b16 %v1503, %v1503
      %v1520 = vpack.c.b16 %v1504, %v1504
      %v1521 = vpack.c.b16 %v1505, %v1505
      %vm1538 = vcmask 60416
      %1539 = vst.msk [vmem:[%s573] sm:$0xf] %vm1538, %v1506
      %1540 = vst.msk [vmem:[%s573 + $0x4] sm:$0xf] %vm1538, %v1507
      %1541 = vst.msk [vmem:[%s573 + $0x8] sm:$0xf] %vm1538, %v1508
      %1542 = vst.msk [vmem:[%s573 + $0xc] sm:$0xf] %vm1538, %v1509
      %1543 = vst.msk [vmem:[%s573 + $0x10] sm:$0xf] %vm1538, %v1510
      %1544 = vst.msk [vmem:[%s573 + $0x14] sm:$0xf] %vm1538, %v1511
      %1545 = vst.msk [vmem:[%s573 + $0x18] sm:$0xf] %vm1538, %v1512
      %1546 = vst.msk [vmem:[%s573 + $0x1c] sm:$0xf] %vm1538, %v1513
      %1547 = vst.msk [vmem:[%s573 + $0x20] sm:$0xf] %vm1538, %v1514
      %1548 = vst.msk [vmem:[%s573 + $0x24] sm:$0xf] %vm1538, %v1515
      %1549 = vst.msk [vmem:[%s573 + $0x28] sm:$0xf] %vm1538, %v1516
      %1550 = vst.msk [vmem:[%s573 + $0x2c] sm:$0xf] %vm1538, %v1517
      %1551 = vst.msk [vmem:[%s573 + $0x30] sm:$0xf] %vm1538, %v1518
      %1552 = vst.msk [vmem:[%s573 + $0x34] sm:$0xf] %vm1538, %v1519
      %1553 = vst.msk [vmem:[%s573 + $0x38] sm:$0xf] %vm1538, %v1520
      %1554 = vst.msk [vmem:[%s573 + $0x3c] sm:$0xf] %vm1538, %v1521
      %v1555 = vsel %vm1184, %v1412, 0.0
      %v1556 = vsel %vm1184, %v1415, 0.0
      %v1557 = vadd.f32 %v1555, %v1556
      %v1558 = vsel %vm1184, %v1420, 0.0
      %v1559 = vadd.f32 %v1557, %v1558
      %v1560 = vsel %vm1184, %v1423, 0.0
      %v1561 = vadd.f32 %v1559, %v1560
      %v1562 = vsel %vm1184, %v1428, 0.0
      %v1563 = vadd.f32 %v1561, %v1562
      %v1564 = vsel %vm1184, %v1431, 0.0
      %v1565 = vadd.f32 %v1563, %v1564
      %v1566 = vsel %vm1184, %v1436, 0.0
      %v1567 = vadd.f32 %v1565, %v1566
      %v1568 = vsel %vm1184, %v1439, 0.0
      %v1569 = vadd.f32 %v1567, %v1568
      %v1570 = vsel %vm1184, %v1444, 0.0
      %v1571 = vadd.f32 %v1569, %v1570
      %v1572 = vsel %vm1184, %v1447, 0.0
      %v1573 = vadd.f32 %v1571, %v1572
      %v1574 = vsel %vm1184, %v1452, 0.0
      %v1575 = vadd.f32 %v1573, %v1574
      %v1576 = vsel %vm1184, %v1455, 0.0
      %v1577 = vadd.f32 %v1575, %v1576
      %v1578 = vsel %vm1184, %v1460, 0.0
      %v1579 = vadd.f32 %v1577, %v1578
      %v1580 = vsel %vm1184, %v1463, 0.0
      %v1581 = vadd.f32 %v1579, %v1580
      %v1582 = vsel %vm1184, %v1468, 0.0
      %v1583 = vadd.f32 %v1581, %v1582
      %v1584 = vsel %vm1184, %v1471, 0.0
      %v1585 = vadd.f32 %v1583, %v1584
      %v1586 = vrot.slane %v1585, 4
      %v1587 = vadd.f32 %v1585, %v1586
      %v1588 = vrot.slane %v1587, 2
      %v1589 = vadd.f32 %v1587, %v1588
      %v1590 = vrot.slane %v1589, 1
      %v1591 = vadd.f32 %v1589, %v1590
      %vm1592 = vcmask 57344
      %1593 = vst.msk [vmem:[%s581] sm:$0x1] %vm1592, %v1591
      %v1594 = vmul.f32 %v1412, %v1412
      %v1595 = vmul.f32 %v1415, %v1415
      %v1596 = vmul.f32 %v1420, %v1420
      %v1597 = vmul.f32 %v1423, %v1423
      %v1598 = vmul.f32 %v1428, %v1428
      %v1599 = vmul.f32 %v1431, %v1431
      %v1600 = vmul.f32 %v1436, %v1436
      %v1601 = vmul.f32 %v1439, %v1439
      %v1602 = vmul.f32 %v1444, %v1444
      %v1603 = vmul.f32 %v1447, %v1447
      %v1604 = vmul.f32 %v1452, %v1452
      %v1605 = vmul.f32 %v1455, %v1455
      %v1606 = vmul.f32 %v1460, %v1460
      %v1607 = vmul.f32 %v1463, %v1463
      %v1608 = vmul.f32 %v1468, %v1468
      %v1609 = vmul.f32 %v1471, %v1471
      %v1610 = vsel %vm1184, %v1594, 0.0
      %v1611 = vsel %vm1184, %v1595, 0.0
      %v1612 = vadd.f32 %v1610, %v1611
      %v1613 = vsel %vm1184, %v1596, 0.0
      %v1614 = vadd.f32 %v1612, %v1613
      %v1615 = vsel %vm1184, %v1597, 0.0
      %v1616 = vadd.f32 %v1614, %v1615
      %v1617 = vsel %vm1184, %v1598, 0.0
      %v1618 = vadd.f32 %v1616, %v1617
      %v1619 = vsel %vm1184, %v1599, 0.0
      %v1620 = vadd.f32 %v1618, %v1619
      %v1621 = vsel %vm1184, %v1600, 0.0
      %v1622 = vadd.f32 %v1620, %v1621
      %v1623 = vsel %vm1184, %v1601, 0.0
      %v1624 = vadd.f32 %v1622, %v1623
      %v1625 = vsel %vm1184, %v1602, 0.0
      %v1626 = vadd.f32 %v1624, %v1625
      %v1627 = vsel %vm1184, %v1603, 0.0
      %v1628 = vadd.f32 %v1626, %v1627
      %v1629 = vsel %vm1184, %v1604, 0.0
      %v1630 = vadd.f32 %v1628, %v1629
      %v1631 = vsel %vm1184, %v1605, 0.0
      %v1632 = vadd.f32 %v1630, %v1631
      %v1633 = vsel %vm1184, %v1606, 0.0
      %v1634 = vadd.f32 %v1632, %v1633
      %v1635 = vsel %vm1184, %v1607, 0.0
      %v1636 = vadd.f32 %v1634, %v1635
      %v1637 = vsel %vm1184, %v1608, 0.0
      %v1638 = vadd.f32 %v1636, %v1637
      %v1639 = vsel %vm1184, %v1609, 0.0
      %v1640 = vadd.f32 %v1638, %v1639
      %v1641 = vrot.slane %v1640, 4
      %v1642 = vadd.f32 %v1640, %v1641
      %v1643 = vrot.slane %v1642, 2
      %v1644 = vadd.f32 %v1642, %v1643
      %v1645 = vrot.slane %v1644, 1
      %v1646 = vadd.f32 %v1644, %v1645
      %1647 = vst.msk [vmem:[%s588] sm:$0x1] %vm1592, %v1646
      %s1648 = smul.u32 8, %s26
      %p1649 = scmp.lt.s32.totalorder %s25, 1
      %s1650 = scalar_select %p1649, %s25, 1
      %p1651 = scmp.lt.s32.totalorder %s1648, 15
      %s1652 = scalar_select %p1651, %s1648, 15
      %s1653 = smul.addr %s1652, 2
      %s1654 = smul.addr %s1650, 32
      %s1655 = sadd.s32 %s1653, %s1654
      %s1656 = smul.addr %s1655, 4
      %s1657 = scalar_lea.vmem %s7, %s1656
      %p1658 = scmp.lt.s32.totalorder %s25, 1
      %s1659 = scalar_select %p1658, %s25, 1
      %p1660 = scmp.lt.s32.totalorder %s26, 1
      %s1661 = scalar_select %p1660, %s26, 1
      %s1662 = smul.addr %s1659, 2
      %s1663 = sadd.s32 %s1661, %s1662
      %s1664 = scalar_lea.vmem %s8, %s1663
      %p1665 = scmp.lt.s32.totalorder %s25, 1
      %s1666 = scalar_select %p1665, %s25, 1
      %p1667 = scmp.lt.s32.totalorder %s26, 1
      %s1668 = scalar_select %p1667, %s26, 1
      %s1669 = smul.addr %s1666, 2
      %s1670 = sadd.s32 %s1668, %s1669
      %s1671 = scalar_lea.vmem %s9, %s1670
      // Predicated region
      $region49: #{decoder_block_forward.5} parent=47 // pred_check
        %p1672 = pneg %p242
      $region50: #{decoder_block_forward.5} parent=47 // pred_check_branch
        %1674 = sbr.rel (%p1672) target = $region52
      $region51: #{decoder_block_forward.5} parent=47 // pred_region
        %s1675 = smul.u32 8, %s26
      $region52: #{decoder_block_forward.5} parent=47 // pred_fallthru
        _
      // Predicated region
      $region53: #{decoder_block_forward.5} parent=47 // pred_check
        %p1676 = pneg %p270
      $region54: #{decoder_block_forward.5} parent=47 // pred_check_branch
        %1678 = sbr.rel (%p1676) target = $region56
      $region55: #{decoder_block_forward.5} parent=47 // pred_region
        _
      $region56: #{decoder_block_forward.5} parent=47 // pred_fallthru
        _
      // Predicated region
      $region57: #{decoder_block_forward.5} parent=47 // pred_check
        %p1679 = pneg %p298
      $region58: #{decoder_block_forward.5} parent=47 // pred_check_branch
        %1681 = sbr.rel (%p1679) target = $region60
      $region59: #{decoder_block_forward.5} parent=47 // pred_region
        _
      $region60: #{decoder_block_forward.5} parent=47 // pred_fallthru
        _
    $region48: #{decoder_block_forward.5} parent=5 // pred_fallthru
      _
    %p1682 = scmp.le.s32.totalorder 2, %s16
    // Predicated region
    $region61: #{decoder_block_forward.5} parent=5 // pred_check
      %p1683 = pneg %p1682
    $region62: #{decoder_block_forward.5} parent=5 // pred_check_branch
      %1685 = sbr.rel (%p1683) target = $region64
    $region63: #{decoder_block_forward.5} parent=5 // pred_region
      %s1686 = ssub.s32 %s16, 2
      // Predicated region
      $region65: #{decoder_block_forward.5} parent=63 // pred_check
        %p1687 = pneg %p248
      $region66: #{decoder_block_forward.5} parent=63 // pred_check_branch
        %1689 = sbr.rel (%p1687) target = $region68
      $region67: #{decoder_block_forward.5} parent=63 // pred_region
        %s1690 = smul.u32 8, %s28
        %p1691 = scmp.lt.s32.totalorder %s27, 1
        %s1692 = scalar_select %p1691, %s27, 1
        %p1693 = scmp.lt.s32.totalorder %s1690, 15
        %s1694 = scalar_select %p1693, %s1690, 15
        %s1695 = smul.addr %s1694, 2
        %s1696 = smul.addr %s1692, 32
        %s1697 = sadd.s32 %s1695, %s1696
        %s1698 = smul.addr %s1697, 4
        %s1699 = scalar_lea.vmem %s7, %s1698
      $region68: #{decoder_block_forward.5} parent=63 // pred_fallthru
        _
      // Predicated region
      $region69: #{decoder_block_forward.5} parent=63 // pred_check
        %p1700 = pneg %p276
      $region70: #{decoder_block_forward.5} parent=63 // pred_check_branch
        %1702 = sbr.rel (%p1700) target = $region72
      $region71: #{decoder_block_forward.5} parent=63 // pred_region
        %p1703 = scmp.lt.s32.totalorder %s27, 1
        %s1704 = scalar_select %p1703, %s27, 1
        %p1705 = scmp.lt.s32.totalorder %s28, 1
        %s1706 = scalar_select %p1705, %s28, 1
        %s1707 = smul.addr %s1704, 2
        %s1708 = sadd.s32 %s1706, %s1707
        %s1709 = scalar_lea.vmem %s8, %s1708
      $region72: #{decoder_block_forward.5} parent=63 // pred_fallthru
        _
      // Predicated region
      $region73: #{decoder_block_forward.5} parent=63 // pred_check
        %p1710 = pneg %p304
      $region74: #{decoder_block_forward.5} parent=63 // pred_check_branch
        %1712 = sbr.rel (%p1710) target = $region76
      $region75: #{decoder_block_forward.5} parent=63 // pred_region
        %p1713 = scmp.lt.s32.totalorder %s27, 1
        %s1714 = scalar_select %p1713, %s27, 1
        %p1715 = scmp.lt.s32.totalorder %s28, 1
        %s1716 = scalar_select %p1715, %s28, 1
        %s1717 = smul.addr %s1714, 2
        %s1718 = sadd.s32 %s1716, %s1717
        %s1719 = scalar_lea.vmem %s9, %s1718
      $region76: #{decoder_block_forward.5} parent=63 // pred_fallthru
        _
    $region64: #{decoder_block_forward.5} parent=5 // pred_fallthru
      _
  $region6: #{decoder_block_forward.5} parent=0 // loop_footer
    %s20 = sadd.s32 1, %s16
  $region7: #{decoder_block_forward.5} parent=0 // loop_footer_branch
    %15 = sbr.rel target = $region3
  $region8: #{decoder_block_forward.5} parent=0 // loop_exit
    _

// kernel: decoder_block_forward.6
$region0: #{decoder_block_forward.6}
  #allocation0 [shape = 'u32[]', space=smem, size = 0x4, offset = 0x4, fixed_abs, tag = 'smem constant byte address 0x4 - core index']
  #allocation1 [shape = 'u32[144,128]{1,0:T(1,128)}', space=vmem, size = 0x12000, scoped, tag = 'internal scratch']
  %s0 = inlined_call_operand.vmem [shape: bf16[2,16,16,8], index: 0, kind: input, shape index: {}]
  %s1 = inlined_call_operand.vmem [shape: bf16[2,2,16,8], index: 1, kind: input, shape index: {}]
  %s2 = inlined_call_operand.vmem [shape: bf16[2,2,16,8], index: 2, kind: input, shape index: {}]
  %s3 = inlined_call_operand.vmem [shape: f32[1,8], index: 3, kind: input, shape index: {}]
  %s4 = inlined_call_operand.vmem [shape: f32[1,8], index: 4, kind: input, shape index: {}]
  %s5 = inlined_call_operand.vmem [shape: bf16[72,8], index: 5, kind: input, shape index: {}]
  %s6 = inlined_call_operand.vmem [shape: bf16[2,16,16,8], index: 6, kind: output, shape index: {0}]
  %s7 = inlined_call_operand.vmem [shape: f32[2,2,1,8], index: 7, kind: output, shape index: {1}]
  %s8 = inlined_call_operand.vmem [shape: f32[2,2,1,8], index: 8, kind: output, shape index: {2}]
  %9 = xla_tuple %s6, %s7, %s8
  %s10 = sld [smem:[#allocation0]]
  $region73: #{decoder_block_forward.6} parent=0
    _
  %s12 = ssub.s32 1, %s10
  %s13 = scalar_select 0, %s12, %s10
  loop: start=0, step=1, limit=6
  $region2: #{decoder_block_forward.6} parent=0 // loop_pre_header
    _
  $region3: #{decoder_block_forward.6} parent=0 // loop_header
    %s15 = sphi 0, %s19
    %p16 = scmp.ge.s32.totalorder %s15, 6
    %s22 = sphi 0, %s34
    %s23 = sphi 0, %s30
    %s24 = sphi 0, %s22
    %s25 = sphi 0, %s23
    %s26 = sphi 0, %s24
    %s27 = sphi 0, %s25
    %s39 = sphi 0, %s41
    %s42 = sphi 0, %s39
    %s43 = sphi 0, %s42
    %s59 = sphi 0, %s43
    %s67 = sphi 0, %s69
    %s70 = sphi 0, %s67
    %s71 = sphi 0, %s70
    %s87 = sphi 0, %s71
    %s95 = sphi 0, %s97
    %s98 = sphi 0, %s95
    %s99 = sphi 0, %s98
    %s115 = sphi 0, %s99
    %s119 = sphi 0, %s119
    %s121 = sphi 0, %s119
    %s122 = sphi 0, %s121
    %s136 = sphi 0, %s122
    %s140 = sphi 0, %s140
    %s142 = sphi 0, %s140
    %s143 = sphi 0, %s142
    %s157 = sphi 0, %s143
    %s161 = sphi 0, %s161
    %s163 = sphi 0, %s161
    %s164 = sphi 0, %s163
    %s178 = sphi 0, %s164
    %s186 = sphi 0, %s188
    %s189 = sphi 0, %s186
    %s190 = sphi 0, %s189
    %s206 = sphi 0, %s190
    %s214 = sphi 0, %s216
    %s217 = sphi 0, %s214
    %s218 = sphi 0, %s217
    %s234 = sphi 0, %s218
    %s242 = sphi 0, %s244
    %s245 = sphi 0, %s242
    %s246 = sphi 0, %s245
    %s262 = sphi 0, %s246
  $region4: #{decoder_block_forward.6} parent=0 // loop_header_branch
    %18 = sbr.rel (%p16) target = $region8
  $region5: #{decoder_block_forward.6} parent=0 // loop_body
    %s20 = ssub.s32 %s15, 1
    %s21 = ssub.s32 %s15, 2
    %s28 = sadd.s32 1, %s23
    %p29 = scmp.ge.s32.totalorder %s28, 2
    %s30 = scalar_select %p29, 0, %s28
    %s31 = sadd.s32 1, %s22
    %s32 = scalar_select %p29, %s31, %s22
    %p33 = scmp.ge.s32.totalorder %s32, 2
    %s34 = scalar_select %p33, 0, %s32
    %s35 = ssub.s32 %s22, %s34
    %s36 = ssub.s32 %s23, %s30
    %s37 = sor.u32 %s35, %s36
    %p38 = scmp.eq.s32.totalorder %s37, 0
    %s40 = sadd.s32 %s39, 1
    %s41 = scalar_select %p38, %s39, %s40
    %p44 = pneg %p38
    %p45 = scmp.eq.s32.totalorder %s15, 3
    %p46 = por %p44, %p45
    %p47 = scmp.ne.s32.totalorder %s39, %s42
    %p48 = scmp.eq.s32.totalorder %s15, 0
    %p49 = por %p47, %p48
    %p50 = scmp.ne.s32.totalorder %s39, %s42
    %p51 = scmp.eq.s32.totalorder %s20, 3
    %p52 = por %p50, %p51
    %p53 = scmp.ne.s32.totalorder %s42, %s43
    %p54 = scmp.eq.s32.totalorder %s20, 0
    %p55 = por %p53, %p54
    %p56 = scmp.ne.s32.totalorder %s42, %s43
    %p57 = scmp.eq.s32.totalorder %s21, 3
    %p58 = por %p56, %p57
    %p60 = scmp.ne.s32.totalorder %s43, %s59
    %p61 = scmp.eq.s32.totalorder %s21, 0
    %p62 = por %p60, %p61
    %s63 = ssub.s32 %s22, %s34
    %s64 = ssub.s32 %s23, %s30
    %s65 = sor.u32 %s63, %s64
    %p66 = scmp.eq.s32.totalorder %s65, 0
    %s68 = sadd.s32 %s67, 1
    %s69 = scalar_select %p66, %s67, %s68
    %p72 = pneg %p66
    %p73 = scmp.eq.s32.totalorder %s15, 3
    %p74 = por %p72, %p73
    %p75 = scmp.ne.s32.totalorder %s67, %s70
    %p76 = scmp.eq.s32.totalorder %s15, 0
    %p77 = por %p75, %p76
    %p78 = scmp.ne.s32.totalorder %s67, %s70
    %p79 = scmp.eq.s32.totalorder %s20, 3
    %p80 = por %p78, %p79
    %p81 = scmp.ne.s32.totalorder %s70, %s71
    %p82 = scmp.eq.s32.totalorder %s20, 0
    %p83 = por %p81, %p82
    %p84 = scmp.ne.s32.totalorder %s70, %s71
    %p85 = scmp.eq.s32.totalorder %s21, 3
    %p86 = por %p84, %p85
    %p88 = scmp.ne.s32.totalorder %s71, %s87
    %p89 = scmp.eq.s32.totalorder %s21, 0
    %p90 = por %p88, %p89
    %s91 = ssub.s32 %s22, %s34
    %s92 = ssub.s32 %s23, %s30
    %s93 = sor.u32 %s91, %s92
    %p94 = scmp.eq.s32.totalorder %s93, 0
    %s96 = sadd.s32 %s95, 1
    %s97 = scalar_select %p94, %s95, %s96
    %p100 = pneg %p94
    %p101 = scmp.eq.s32.totalorder %s15, 3
    %p102 = por %p100, %p101
    %p103 = scmp.ne.s32.totalorder %s95, %s98
    %p104 = scmp.eq.s32.totalorder %s15, 0
    %p105 = por %p103, %p104
    %p106 = scmp.ne.s32.totalorder %s95, %s98
    %p107 = scmp.eq.s32.totalorder %s20, 3
    %p108 = por %p106, %p107
    %p109 = scmp.ne.s32.totalorder %s98, %s99
    %p110 = scmp.eq.s32.totalorder %s20, 0
    %p111 = por %p109, %p110
    %p112 = scmp.ne.s32.totalorder %s98, %s99
    %p113 = scmp.eq.s32.totalorder %s21, 3
    %p114 = por %p112, %p113
    %p116 = scmp.ne.s32.totalorder %s99, %s115
    %p117 = scmp.eq.s32.totalorder %s21, 0
    %p118 = por %p116, %p117
    %s120 = sadd.s32 %s119, 1
    %p123 = scmp.eq.s32.totalorder %s15, 3
    %p124 = scmp.ne.s32.totalorder %s119, %s121
    %p125 = scmp.eq.s32.totalorder %s15, 0
    %p126 = por %p124, %p125
    %p127 = scmp.ne.s32.totalorder %s119, %s121
    %p128 = scmp.eq.s32.totalorder %s20, 3
    %p129 = por %p127, %p128
    %p130 = scmp.ne.s32.totalorder %s121, %s122
    %p131 = scmp.eq.s32.totalorder %s20, 0
    %p132 = por %p130, %p131
    %p133 = scmp.ne.s32.totalorder %s121, %s122
    %p134 = scmp.eq.s32.totalorder %s21, 3
    %p135 = por %p133, %p134
    %p137 = scmp.ne.s32.totalorder %s122, %s136
    %p138 = scmp.eq.s32.totalorder %s21, 0
    %p139 = por %p137, %p138
    %s141 = sadd.s32 %s140, 1
    %p144 = scmp.eq.s32.totalorder %s15, 3
    %p145 = scmp.ne.s32.totalorder %s140, %s142
    %p146 = scmp.eq.s32.totalorder %s15, 0
    %p147 = por %p145, %p146
    %p148 = scmp.ne.s32.totalorder %s140, %s142
    %p149 = scmp.eq.s32.totalorder %s20, 3
    %p150 = por %p148, %p149
    %p151 = scmp.ne.s32.totalorder %s142, %s143
    %p152 = scmp.eq.s32.totalorder %s20, 0
    %p153 = por %p151, %p152
    %p154 = scmp.ne.s32.totalorder %s142, %s143
    %p155 = scmp.eq.s32.totalorder %s21, 3
    %p156 = por %p154, %p155
    %p158 = scmp.ne.s32.totalorder %s143, %s157
    %p159 = scmp.eq.s32.totalorder %s21, 0
    %p160 = por %p158, %p159
    %s162 = sadd.s32 %s161, 1
    %p165 = scmp.eq.s32.totalorder %s15, 3
    %p166 = scmp.ne.s32.totalorder %s161, %s163
    %p167 = scmp.eq.s32.totalorder %s15, 0
    %p168 = por %p166, %p167
    %p169 = scmp.ne.s32.totalorder %s161, %s163
    %p170 = scmp.eq.s32.totalorder %s20, 3
    %p171 = por %p169, %p170
    %p172 = scmp.ne.s32.totalorder %s163, %s164
    %p173 = scmp.eq.s32.totalorder %s20, 0
    %p174 = por %p172, %p173
    %p175 = scmp.ne.s32.totalorder %s163, %s164
    %p176 = scmp.eq.s32.totalorder %s21, 3
    %p177 = por %p175, %p176
    %p179 = scmp.ne.s32.totalorder %s164, %s178
    %p180 = scmp.eq.s32.totalorder %s21, 0
    %p181 = por %p179, %p180
    %s182 = ssub.s32 %s22, %s34
    %s183 = ssub.s32 %s23, %s30
    %s184 = sor.u32 %s182, %s183
    %p185 = scmp.eq.s32.totalorder %s184, 0
    %s187 = sadd.s32 %s186, 1
    %s188 = scalar_select %p185, %s186, %s187
    %p191 = pneg %p185
    %p192 = scmp.eq.s32.totalorder %s15, 3
    %p193 = por %p191, %p192
    %p194 = scmp.ne.s32.totalorder %s186, %s189
    %p195 = scmp.eq.s32.totalorder %s15, 0
    %p196 = por %p194, %p195
    %p197 = scmp.ne.s32.totalorder %s186, %s189
    %p198 = scmp.eq.s32.totalorder %s20, 3
    %p199 = por %p197, %p198
    %p200 = scmp.ne.s32.totalorder %s189, %s190
    %p201 = scmp.eq.s32.totalorder %s20, 0
    %p202 = por %p200, %p201
    %p203 = scmp.ne.s32.totalorder %s189, %s190
    %p204 = scmp.eq.s32.totalorder %s21, 3
    %p205 = por %p203, %p204
    %p207 = scmp.ne.s32.totalorder %s190, %s206
    %p208 = scmp.eq.s32.totalorder %s21, 0
    %p209 = por %p207, %p208
    %s210 = ssub.s32 %s22, %s34
    %s211 = ssub.s32 %s23, %s30
    %s212 = sor.u32 %s210, %s211
    %p213 = scmp.eq.s32.totalorder %s212, 0
    %s215 = sadd.s32 %s214, 1
    %s216 = scalar_select %p213, %s214, %s215
    %p219 = pneg %p213
    %p220 = scmp.eq.s32.totalorder %s15, 3
    %p221 = por %p219, %p220
    %p222 = scmp.ne.s32.totalorder %s214, %s217
    %p223 = scmp.eq.s32.totalorder %s15, 0
    %p224 = por %p222, %p223
    %p225 = scmp.ne.s32.totalorder %s214, %s217
    %p226 = scmp.eq.s32.totalorder %s20, 3
    %p227 = por %p225, %p226
    %p228 = scmp.ne.s32.totalorder %s217, %s218
    %p229 = scmp.eq.s32.totalorder %s20, 0
    %p230 = por %p228, %p229
    %p231 = scmp.ne.s32.totalorder %s217, %s218
    %p232 = scmp.eq.s32.totalorder %s21, 3
    %p233 = por %p231, %p232
    %p235 = scmp.ne.s32.totalorder %s218, %s234
    %p236 = scmp.eq.s32.totalorder %s21, 0
    %p237 = por %p235, %p236
    %s238 = ssub.s32 %s22, %s34
    %s239 = ssub.s32 %s23, %s30
    %s240 = sor.u32 %s238, %s239
    %p241 = scmp.eq.s32.totalorder %s240, 0
    %s243 = sadd.s32 %s242, 1
    %s244 = scalar_select %p241, %s242, %s243
    %p247 = pneg %p241
    %p248 = scmp.eq.s32.totalorder %s15, 3
    %p249 = por %p247, %p248
    %p250 = scmp.ne.s32.totalorder %s242, %s245
    %p251 = scmp.eq.s32.totalorder %s15, 0
    %p252 = por %p250, %p251
    %p253 = scmp.ne.s32.totalorder %s242, %s245
    %p254 = scmp.eq.s32.totalorder %s20, 3
    %p255 = por %p253, %p254
    %p256 = scmp.ne.s32.totalorder %s245, %s246
    %p257 = scmp.eq.s32.totalorder %s20, 0
    %p258 = por %p256, %p257
    %p259 = scmp.ne.s32.totalorder %s245, %s246
    %p260 = scmp.eq.s32.totalorder %s21, 3
    %p261 = por %p259, %p260
    %p263 = scmp.ne.s32.totalorder %s246, %s262
    %p264 = scmp.eq.s32.totalorder %s21, 0
    %p265 = por %p263, %p264
    %p266 = scmp.le.s32.totalorder 1, %s15
    %p267 = scmp.lt.s32.totalorder %s15, 5
    %p268 = pnand %p266, %p267
    %p269 = pneg %p268
    // Predicated region
    $region9: #{decoder_block_forward.6} parent=5 // pred_check
      _
    $region10: #{decoder_block_forward.6} parent=5 // pred_check_branch
      %271 = sbr.rel (%p268) target = $region12
    $region11: #{decoder_block_forward.6} parent=5 // pred_region
      %s272 = ssub.s32 %s15, 1
      // Predicated region
      $region13: #{decoder_block_forward.6} parent=11 // pred_check
        %p273 = pneg %p132
      $region14: #{decoder_block_forward.6} parent=11 // pred_check_branch
        %275 = sbr.rel (%p273) target = $region16
      $region15: #{decoder_block_forward.6} parent=11 // pred_region
        _
      $region16: #{decoder_block_forward.6} parent=11 // pred_fallthru
        _
      // Predicated region
      $region17: #{decoder_block_forward.6} parent=11 // pred_check
        %p276 = pneg %p153
      $region18: #{decoder_block_forward.6} parent=11 // pred_check_branch
        %278 = sbr.rel (%p276) target = $region20
      $region19: #{decoder_block_forward.6} parent=11 // pred_region
        _
      $region20: #{decoder_block_forward.6} parent=11 // pred_fallthru
        _
      // Predicated region
      $region21: #{decoder_block_forward.6} parent=11 // pred_check
        %p279 = pneg %p174
      $region22: #{decoder_block_forward.6} parent=11 // pred_check_branch
        %281 = sbr.rel (%p279) target = $region24
      $region23: #{decoder_block_forward.6} parent=11 // pred_region
        _
      $region24: #{decoder_block_forward.6} parent=11 // pred_fallthru
        _
    $region12: #{decoder_block_forward.6} parent=5 // pred_fallthru
      _
    %p282 = scmp.lt.s32.totalorder %s15, 4
    // Predicated region
    $region25: #{decoder_block_forward.6} parent=5 // pred_check
      %p283 = pneg %p282
    $region26: #{decoder_block_forward.6} parent=5 // pred_check_branch
      %285 = sbr.rel (%p283) target = $region28
    $region27: #{decoder_block_forward.6} parent=5 // pred_region
      // Predicated region
      $region29: #{decoder_block_forward.6} parent=27 // pred_check
        %p286 = pneg %p49
      $region30: #{decoder_block_forward.6} parent=27 // pred_check_branch
        %288 = sbr.rel (%p286) target = $region32
      $region31: #{decoder_block_forward.6} parent=27 // pred_region
        %s289 = smul.u32 8, %s23
        %p290 = scmp.lt.s32.totalorder %s22, 1
        %s291 = scalar_select %p290, %s22, 1
        %p292 = scmp.lt.s32.totalorder %s289, 15
        %s293 = scalar_select %p292, %s289, 15
        %s294 = smul.addr %s293, 2
        %s295 = smul.addr %s291, 32
        %s296 = sadd.s32 %s294, %s295
        %s297 = smul.addr %s296, 4
        %s298 = scalar_lea.vmem %s0, %s297
        %s299 = smul.u32 8, %s23
      $region32: #{decoder_block_forward.6} parent=27 // pred_fallthru
        _
      // Predicated region
      $region33: #{decoder_block_forward.6} parent=27 // pred_check
        %p300 = pneg %p77
      $region34: #{decoder_block_forward.6} parent=27 // pred_check_branch
        %302 = sbr.rel (%p300) target = $region36
      $region35: #{decoder_block_forward.6} parent=27 // pred_region
        %p303 = scmp.lt.s32.totalorder %s22, 1
        %s304 = scalar_select %p303, %s22, 1
        %p305 = scmp.lt.s32.totalorder %s23, 1
        %s306 = scalar_select %p305, %s23, 1
        %s307 = smul.addr %s306, 2
        %s308 = smul.addr %s304, 4
        %s309 = sadd.s32 %s307, %s308
        %s310 = smul.addr %s309, 4
        %s311 = scalar_lea.vmem %s1, %s310
      $region36: #{decoder_block_forward.6} parent=27 // pred_fallthru
        _
      // Predicated region
      $region37: #{decoder_block_forward.6} parent=27 // pred_check
        %p312 = pneg %p105
      $region38: #{decoder_block_forward.6} parent=27 // pred_check_branch
        %314 = sbr.rel (%p312) target = $region40
      $region39: #{decoder_block_forward.6} parent=27 // pred_region
        %p315 = scmp.lt.s32.totalorder %s22, 1
        %s316 = scalar_select %p315, %s22, 1
        %p317 = scmp.lt.s32.totalorder %s23, 1
        %s318 = scalar_select %p317, %s23, 1
        %s319 = smul.addr %s318, 2
        %s320 = smul.addr %s316, 4
        %s321 = sadd.s32 %s319, %s320
        %s322 = smul.addr %s321, 4
        %s323 = scalar_lea.vmem %s2, %s322
      $region40: #{decoder_block_forward.6} parent=27 // pred_fallthru
        _
    $region28: #{decoder_block_forward.6} parent=5 // pred_fallthru
      _
    %p324 = scmp.le.s32.totalorder 1, %s15
    %p325 = scmp.lt.s32.totalorder %s15, 5
    %p326 = pnand %p324, %p325
    %p327 = pneg %p326
    // Predicated region
    $region41: #{decoder_block_forward.6} parent=5 // pred_check
      _
    $region42: #{decoder_block_forward.6} parent=5 // pred_check_branch
      %329 = sbr.rel (%p326) target = $region44
    $region43: #{decoder_block_forward.6} parent=5 // pred_region
      %s330 = ssub.s32 %s15, 1
      %s331 = smul.u32 8, %s25
      %p332 = scmp.lt.s32.totalorder %s24, 1
      %s333 = scalar_select %p332, %s24, 1
      %p334 = scmp.lt.s32.totalorder %s331, 15
      %s335 = scalar_select %p334, %s331, 15
      %s336 = smul.addr %s335, 2
      %s337 = smul.addr %s333, 32
      %s338 = sadd.s32 %s336, %s337
      %s339 = smul.addr %s338, 4
      %s340 = scalar_lea.vmem %s0, %s339
      %p341 = pneg %p55
      %p342 = pneg %p52
      %p343 = scmp.lt.s32.totalorder %s24, 1
      %s344 = scalar_select %p343, %s24, 1
      %p345 = scmp.lt.s32.totalorder %s25, 1
      %s346 = scalar_select %p345, %s25, 1
      %s347 = smul.addr %s346, 2
      %s348 = smul.addr %s344, 4
      %s349 = sadd.s32 %s347, %s348
      %s350 = smul.addr %s349, 4
      %s351 = scalar_lea.vmem %s1, %s350
      %p352 = pneg %p83
      %p353 = pneg %p80
      %p354 = scmp.lt.s32.totalorder %s24, 1
      %s355 = scalar_select %p354, %s24, 1
      %p356 = scmp.lt.s32.totalorder %s25, 1
      %s357 = scalar_select %p356, %s25, 1
      %s358 = smul.addr %s357, 2
      %s359 = smul.addr %s355, 4
      %s360 = sadd.s32 %s358, %s359
      %s361 = smul.addr %s360, 4
      %s362 = scalar_lea.vmem %s2, %s361
      %p363 = pneg %p111
      %p364 = pneg %p108
      %p365 = pneg %p132
      %p366 = pneg %p129
      %p367 = pneg %p153
      %p368 = pneg %p150
      %p369 = pneg %p174
      %p370 = pneg %p171
      %p371 = pneg %p202
      %p372 = pneg %p199
      %s373 = smul.u32 8, %s25
      %p374 = scmp.lt.s32.totalorder %s24, 1
      %s375 = scalar_select %p374, %s24, 1
      %p376 = scmp.lt.s32.totalorder %s373, 15
      %s377 = scalar_select %p376, %s373, 15
      %s378 = smul.addr %s377, 2
      %s379 = smul.addr %s375, 32
      %s380 = sadd.s32 %s378, %s379
      %s381 = smul.addr %s380, 4
      %s382 = scalar_lea.vmem %s6, %s381
      %p383 = pneg %p230
      %p384 = pneg %p227
      %p385 = scmp.lt.s32.totalorder %s24, 1
      %s386 = scalar_select %p385, %s24, 1
      %p387 = scmp.lt.s32.totalorder %s25, 1
      %s388 = scalar_select %p387, %s25, 1
      %s389 = smul.addr %s386, 2
      %s390 = sadd.s32 %s388, %s389
      %s391 = scalar_lea.vmem %s7, %s390
      %p392 = pneg %p258
      %p393 = pneg %p255
      %p394 = scmp.lt.s32.totalorder %s24, 1
      %s395 = scalar_select %p394, %s24, 1
      %p396 = scmp.lt.s32.totalorder %s25, 1
      %s397 = scalar_select %p396, %s25, 1
      %s398 = smul.addr %s395, 2
      %s399 = sadd.s32 %s397, %s398
      %s400 = scalar_lea.vmem %s8, %s399
      %s401 = smul.u32 8, %s25
      %p402 = scmp.lt.s32.totalorder %s24, 1
      %s403 = scalar_select %p402, %s24, 1
      %p404 = scmp.lt.s32.totalorder %s401, 15
      %s405 = scalar_select %p404, %s401, 15
      %s406 = smul.addr %s405, 2
      %s407 = smul.addr %s403, 32
      %s408 = sadd.s32 %s406, %s407
      %s409 = smul.addr %s408, 4
      %s410 = scalar_lea.vmem %s0, %s409
      %s411 = smul.u32 8, %s25
      %p412 = scmp.lt.s32.totalorder %s24, 1
      %s413 = scalar_select %p412, %s24, 1
      %p414 = scmp.lt.s32.totalorder %s25, 1
      %s415 = scalar_select %p414, %s25, 1
      %s416 = smul.addr %s415, 2
      %s417 = smul.addr %s413, 4
      %s418 = sadd.s32 %s416, %s417
      %s419 = smul.addr %s418, 4
      %s420 = scalar_lea.vmem %s1, %s419
      %p421 = scmp.lt.s32.totalorder %s24, 1
      %s422 = scalar_select %p421, %s24, 1
      %p423 = scmp.lt.s32.totalorder %s25, 1
      %s424 = scalar_select %p423, %s25, 1
      %s425 = smul.addr %s424, 2
      %s426 = smul.addr %s422, 4
      %s427 = sadd.s32 %s425, %s426
      %s428 = smul.addr %s427, 4
      %s429 = scalar_lea.vmem %s2, %s428
      %s430 = smul.u32 8, %s25
      %p431 = scmp.lt.s32.totalorder %s24, 1
      %s432 = scalar_select %p431, %s24, 1
      %p433 = scmp.lt.s32.totalorder %s430, 15
      %s434 = scalar_select %p433, %s430, 15
      %s435 = smul.addr %s434, 2
      %s436 = smul.addr %s432, 32
      %s437 = sadd.s32 %s435, %s436
      %s438 = smul.addr %s437, 4
      %s439 = scalar_lea.vmem %s6, %s438
      %s440 = smul.u32 8, %s25
      %p441 = scmp.lt.s32.totalorder %s24, 1
      %s442 = scalar_select %p441, %s24, 1
      %p443 = scmp.lt.s32.totalorder %s25, 1
      %s444 = scalar_select %p443, %s25, 1
      %s445 = smul.addr %s442, 2
      %s446 = sadd.s32 %s444, %s445
      %s447 = scalar_lea.vmem %s7, %s446
      %p448 = scmp.lt.s32.totalorder %s24, 1
      %s449 = scalar_select %p448, %s24, 1
      %p450 = scmp.lt.s32.totalorder %s25, 1
      %s451 = scalar_select %p450, %s25, 1
      %s452 = smul.addr %s449, 2
      %s453 = sadd.s32 %s451, %s452
      %s454 = scalar_lea.vmem %s8, %s453
      %v456 = vld [vmem:[%s410] sm:$0xf]
      %v457 = vld [vmem:[%s410 + $0x4] sm:$0xf]
      %v458 = vld [vmem:[%s410 + $0x8] sm:$0xf]
      %v459 = vld [vmem:[%s410 + $0xc] sm:$0xf]
      %v460 = vld [vmem:[%s410 + $0x10] sm:$0xf]
      %v461 = vld [vmem:[%s410 + $0x14] sm:$0xf]
      %v462 = vld [vmem:[%s410 + $0x18] sm:$0xf]
      %v463 = vld [vmem:[%s410 + $0x1c] sm:$0xf]
      %v464 = vld [vmem:[%s410 + $0x20] sm:$0xf]
      %v465 = vld [vmem:[%s410 + $0x24] sm:$0xf]
      %v466 = vld [vmem:[%s410 + $0x28] sm:$0xf]
      %v467 = vld [vmem:[%s410 + $0x2c] sm:$0xf]
      %v468 = vld [vmem:[%s410 + $0x30] sm:$0xf]
      %v469 = vld [vmem:[%s410 + $0x34] sm:$0xf]
      %v470 = vld [vmem:[%s410 + $0x38] sm:$0xf]
      %v471 = vld [vmem:[%s410 + $0x3c] sm:$0xf]
      %v472 = vunpack.c.l.bf16 %v456
      %v473 = vunpack.c.l.bf16 %v457
      %v474 = vunpack.c.l.bf16 %v458
      %v475 = vunpack.c.l.bf16 %v459
      %v476 = vunpack.c.l.bf16 %v460
      %v477 = vunpack.c.l.bf16 %v461
      %v478 = vunpack.c.l.bf16 %v462
      %v479 = vunpack.c.l.bf16 %v463
      %v480 = vunpack.c.l.bf16 %v464
      %v481 = vunpack.c.l.bf16 %v465
      %v482 = vunpack.c.l.bf16 %v466
      %v483 = vunpack.c.l.bf16 %v467
      %v484 = vunpack.c.l.bf16 %v468
      %v485 = vunpack.c.l.bf16 %v469
      %v486 = vunpack.c.l.bf16 %v470
      %v487 = vunpack.c.l.bf16 %v471
      %v488 = vld [vmem:[%s3] sm:$0x1]
      %v490 = vlaneseq
      %v491 = vshrl.u32 %v490, 7
      %v492 = vsub.s32 0, %v491
      %v493 = vrot.slane %v488, %v492
      %v495 = vmul.f32 %v472, %v493
      %v496 = vmul.f32 %v473, %v493
      %v497 = vmul.f32 %v474, %v493
      %v498 = vmul.f32 %v475, %v493
      %v499 = vmul.f32 %v476, %v493
      %v500 = vmul.f32 %v477, %v493
      %v501 = vmul.f32 %v478, %v493
      %v502 = vmul.f32 %v479, %v493
      %v503 = vmul.f32 %v480, %v493
      %v504 = vmul.f32 %v481, %v493
      %v505 = vmul.f32 %v482, %v493
      %v506 = vmul.f32 %v483, %v493
      %v507 = vmul.f32 %v484, %v493
      %v508 = vmul.f32 %v485, %v493
      %v509 = vmul.f32 %v486, %v493
      %v510 = vmul.f32 %v487, %v493
      %v511 = vld [vmem:[%s4] sm:$0x1]
      %v513 = vlaneseq
      %v514 = vshrl.u32 %v513, 7
      %v515 = vsub.s32 0, %v514
      %v516 = vrot.slane %v511, %v515
      %v518 = vadd.f32 %v495, %v516
      %v519 = vadd.f32 %v496, %v516
      %v520 = vadd.f32 %v497, %v516
      %v521 = vadd.f32 %v498, %v516
      %v522 = vadd.f32 %v499, %v516
      %v523 = vadd.f32 %v500, %v516
      %v524 = vadd.f32 %v501, %v516
      %v525 = vadd.f32 %v502, %v516
      %v526 = vadd.f32 %v503, %v516
      %v527 = vadd.f32 %v504, %v516
      %v528 = vadd.f32 %v505, %v516
      %v529 = vadd.f32 %v506, %v516
      %v530 = vadd.f32 %v507, %v516
      %v531 = vadd.f32 %v508, %v516
      %v532 = vadd.f32 %v509, %v516
      %v533 = vadd.f32 %v510, %v516
      %v534 = vmax.f32 %v518, 0.0
      %v535 = vmax.f32 %v519, 0.0
      %v536 = vmax.f32 %v520, 0.0
      %v537 = vmax.f32 %v521, 0.0
      %v538 = vmax.f32 %v522, 0.0
      %v539 = vmax.f32 %v523, 0.0
      %v540 = vmax.f32 %v524, 0.0
      %v541 = vmax.f32 %v525, 0.0
      %v542 = vmax.f32 %v526, 0.0
      %v543 = vmax.f32 %v527, 0.0
      %v544 = vmax.f32 %v528, 0.0
      %v545 = vmax.f32 %v529, 0.0
      %v546 = vmax.f32 %v530, 0.0
      %v547 = vmax.f32 %v531, 0.0
      %v548 = vmax.f32 %v532, 0.0
      %v549 = vmax.f32 %v533, 0.0
      %v550 = vpack.c.bf16 %v535, %v534
      %v551 = vpack.c.bf16 %v537, %v536
      %v552 = vpack.c.bf16 %v539, %v538
      %v553 = vpack.c.bf16 %v541, %v540
      %v554 = vpack.c.bf16 %v543, %v542
      %v555 = vpack.c.bf16 %v545, %v544
      %v556 = vpack.c.bf16 %v547, %v546
      %v557 = vpack.c.bf16 %v549, %v548
      %v558 = vld [vmem:[%s420] sm:$0xf]
      %v559 = vld [vmem:[%s420 + $0x4] sm:$0xf]
      %v560 = vld [vmem:[%s429] sm:$0xf]
      %v561 = vld [vmem:[%s429 + $0x4] sm:$0xf]
      %v570 = vunpack.c.l.b16 %v550
      %v571 = vunpack.c.h.b16 %v550
      %v572 = vunpack.c.l.b16 %v551
      %v573 = vunpack.c.h.b16 %v551
      %v574 = vunpack.c.l.b16 %v552
      %v575 = vunpack.c.h.b16 %v552
      %v576 = vunpack.c.l.b16 %v553
      %v577 = vunpack.c.h.b16 %v553
      %v578 = vunpack.c.l.b16 %v554
      %v579 = vunpack.c.h.b16 %v554
      %v580 = vunpack.c.l.b16 %v555
      %v581 = vunpack.c.h.b16 %v555
      %v582 = vunpack.c.l.b16 %v556
      %v583 = vunpack.c.h.b16 %v556
      %v584 = vunpack.c.l.b16 %v557
      %v585 = vunpack.c.h.b16 %v557
      %v590 = vunpack.c.l.b16 %v558
      %v591 = vunpack.c.l.b16 %v559
      %v592 = vunpack.c.l.b16 %v560
      %v593 = vunpack.c.l.b16 %v561
      %v594 = vpack.c.b16 %v591, %v590
      %v595 = vpack.c.b16 %v571, %v570
      %v596 = vpack.c.b16 %v573, %v572
      %v597 = vpack.c.b16 %v575, %v574
      %v598 = vpack.c.b16 %v577, %v576
      %v599 = vpack.c.b16 %v579, %v578
      %v600 = vpack.c.b16 %v581, %v580
      %v601 = vpack.c.b16 %v583, %v582
      %v602 = vpack.c.b16 %v585, %v584
      %v603 = vpack.c.b16 %v593, %v592
      %v605 = vshrl.u32 %v594, 16
      %v607 = vrot.slane %v605, 7
      %v608 = vshll.u32 %v594, 16
      %v610 = vor.u32 %v607, %v608
      %v612 = vshrl.u32 %v595, 16
      %v614 = vrot.slane %v612, 7
      %v615 = vshll.u32 %v595, 16
      %v617 = vor.u32 %v614, %v615
      %v619 = vshrl.u32 %v596, 16
      %v621 = vrot.slane %v619, 7
      %v622 = vshll.u32 %v596, 16
      %v624 = vor.u32 %v621, %v622
      %v626 = vshrl.u32 %v597, 16
      %v628 = vrot.slane %v626, 7
      %v629 = vshll.u32 %v597, 16
      %v631 = vor.u32 %v628, %v629
      %v633 = vshrl.u32 %v598, 16
      %v635 = vrot.slane %v633, 7
      %v636 = vshll.u32 %v598, 16
      %v638 = vor.u32 %v635, %v636
      %v640 = vshrl.u32 %v599, 16
      %v642 = vrot.slane %v640, 7
      %v643 = vshll.u32 %v599, 16
      %v645 = vor.u32 %v642, %v643
      %v647 = vshrl.u32 %v600, 16
      %v649 = vrot.slane %v647, 7
      %v650 = vshll.u32 %v600, 16
      %v652 = vor.u32 %v649, %v650
      %v654 = vshrl.u32 %v601, 16
      %v656 = vrot.slane %v654, 7
      %v657 = vshll.u32 %v601, 16
      %v659 = vor.u32 %v656, %v657
      %v661 = vshrl.u32 %v602, 16
      %v663 = vrot.slane %v661, 7
      %v664 = vshll.u32 %v602, 16
      %v666 = vor.u32 %v663, %v664
      %v668 = vshrl.u32 %v603, 16
      %v670 = vrot.slane %v668, 7
      %v671 = vshll.u32 %v603, 16
      %v673 = vor.u32 %v670, %v671
      %vm694 = vcmask 1040384
      %vm695 = vsmask.f32 256
      %vm696 = vmand %vm694, %vm695
      %v697 = vsel %vm696, 0, %v610
      %v698 = vsel %vm696, 0, %v617
      %v699 = vsel %vm696, 0, %v624
      %v700 = vsel %vm696, 0, %v631
      %v701 = vsel %vm696, 0, %v638
      %v702 = vsel %vm696, 0, %v645
      %v703 = vsel %vm696, 0, %v652
      %v704 = vsel %vm696, 0, %v659
      %v705 = vsel %vm696, 0, %v666
      %v706 = vsel %vm696, 0, %v673
      %v707 = vsel %vm696, %v607, 0
      %v708 = vsel %vm696, %v614, 0
      %v709 = vsel %vm696, %v621, 0
      %v710 = vsel %vm696, %v628, 0
      %v711 = vsel %vm696, %v635, 0
      %v712 = vsel %vm696, %v642, 0
      %v713 = vsel %vm696, %v649, 0
      %v714 = vsel %vm696, %v656, 0
      %v715 = vsel %vm696, %v663, 0
      %v716 = vsel %vm696, %v670, 0
      %vm717 = vsmask.f32 7424
      %v719 = vshrl.u32 %v697, 16
      %v721 = vshll.u32 %v697, 16
      %v723 = vrot.slane %v721, 1
      %v724 = vor.u32 %v719, %v723
      %v726 = vshll.u32 %v707, 16
      %v728 = vrot.slane %v726, 1
      %v729 = vsel %vm717, %v724, %v728
      %v731 = vshrl.u32 %v698, 16
      %v733 = vshll.u32 %v698, 16
      %v735 = vrot.slane %v733, 1
      %v736 = vor.u32 %v731, %v735
      %v738 = vshll.u32 %v708, 16
      %v740 = vrot.slane %v738, 1
      %v741 = vsel %vm717, %v736, %v740
      %v743 = vshrl.u32 %v699, 16
      %v745 = vshll.u32 %v699, 16
      %v747 = vrot.slane %v745, 1
      %v748 = vor.u32 %v743, %v747
      %v750 = vshll.u32 %v709, 16
      %v752 = vrot.slane %v750, 1
      %v753 = vsel %vm717, %v748, %v752
      %v755 = vshrl.u32 %v700, 16
      %v757 = vshll.u32 %v700, 16
      %v759 = vrot.slane %v757, 1
      %v760 = vor.u32 %v755, %v759
      %v762 = vshll.u32 %v710, 16
      %v764 = vrot.slane %v762, 1
      %v765 = vsel %vm717, %v760, %v764
      %v767 = vshrl.u32 %v701, 16
      %v769 = vshll.u32 %v701, 16
      %v771 = vrot.slane %v769, 1
      %v772 = vor.u32 %v767, %v771
      %v774 = vshll.u32 %v711, 16
      %v776 = vrot.slane %v774, 1
      %v777 = vsel %vm717, %v772, %v776
      %v779 = vshrl.u32 %v702, 16
      %v781 = vshll.u32 %v702, 16
      %v783 = vrot.slane %v781, 1
      %v784 = vor.u32 %v779, %v783
      %v786 = vshll.u32 %v712, 16
      %v788 = vrot.slane %v786, 1
      %v789 = vsel %vm717, %v784, %v788
      %v791 = vshrl.u32 %v703, 16
      %v793 = vshll.u32 %v703, 16
      %v795 = vrot.slane %v793, 1
      %v796 = vor.u32 %v791, %v795
      %v798 = vshll.u32 %v713, 16
      %v800 = vrot.slane %v798, 1
      %v801 = vsel %vm717, %v796, %v800
      %v803 = vshrl.u32 %v704, 16
      %v805 = vshll.u32 %v704, 16
      %v807 = vrot.slane %v805, 1
      %v808 = vor.u32 %v803, %v807
      %v810 = vshll.u32 %v714, 16
      %v812 = vrot.slane %v810, 1
      %v813 = vsel %vm717, %v808, %v812
      %vm830 = vcmask 1046528
      %v831 = vrot.slane %v697, 1
      %v832 = vrot.slane %v707, 1
      %v833 = vsel %vm830, %v831, %v832
      %v834 = vrot.slane %v698, 1
      %v835 = vrot.slane %v708, 1
      %v836 = vsel %vm830, %v834, %v835
      %v837 = vrot.slane %v699, 1
      %v838 = vrot.slane %v709, 1
      %v839 = vsel %vm830, %v837, %v838
      %v840 = vrot.slane %v700, 1
      %v841 = vrot.slane %v710, 1
      %v842 = vsel %vm830, %v840, %v841
      %v843 = vrot.slane %v701, 1
      %v844 = vrot.slane %v711, 1
      %v845 = vsel %vm830, %v843, %v844
      %v846 = vrot.slane %v702, 1
      %v847 = vrot.slane %v712, 1
      %v848 = vsel %vm830, %v846, %v847
      %v849 = vrot.slane %v703, 1
      %v850 = vrot.slane %v713, 1
      %v851 = vsel %vm830, %v849, %v850
      %v852 = vrot.slane %v704, 1
      %v853 = vrot.slane %v714, 1
      %v854 = vsel %vm830, %v852, %v853
      %v856 = vshrl.u32 %v705, 16
      %v858 = vshll.u32 %v705, 16
      %v860 = vrot.slane %v858, 1
      %v861 = vor.u32 %v856, %v860
      %v863 = vshll.u32 %v715, 16
      %v865 = vrot.slane %v863, 1
      %v866 = vsel %vm717, %v861, %v865
      %v869 = vrot.slane %v705, 1
      %v870 = vrot.slane %v715, 1
      %v871 = vsel %vm830, %v869, %v870
      %v873 = vshrl.u32 %v706, 16
      %v875 = vshll.u32 %v706, 16
      %v877 = vrot.slane %v875, 1
      %v878 = vor.u32 %v873, %v877
      %v880 = vshll.u32 %v716, 16
      %v882 = vrot.slane %v880, 1
      %v883 = vsel %vm717, %v878, %v882
      %v886 = vrot.slane %v706, 1
      %v887 = vrot.slane %v716, 1
      %v888 = vsel %vm830, %v886, %v887
      %889 = vrot.lane.b32.xlu0 %v729, 8
      %v890 = vpop.permute.xlu0 %889
      %891 = vrot.lane.b32.xlu0 %v741, 8
      %v892 = vpop.permute.xlu0 %891
      %893 = vrot.lane.b32.xlu0 %v753, 8
      %v894 = vpop.permute.xlu0 %893
      %895 = vrot.lane.b32.xlu0 %v765, 8
      %v896 = vpop.permute.xlu0 %895
      %897 = vrot.lane.b32.xlu0 %v777, 8
      %v898 = vpop.permute.xlu0 %897
      %899 = vrot.lane.b32.xlu0 %v789, 8
      %v900 = vpop.permute.xlu0 %899
      %901 = vrot.lane.b32.xlu0 %v801, 8
      %v902 = vpop.permute.xlu0 %901
      %903 = vrot.lane.b32.xlu0 %v813, 8
      %v904 = vpop.permute.xlu0 %903
      %905 = vrot.lane.b32.xlu0 %v833, 16
      %v906 = vpop.permute.xlu0 %905
      %907 = vrot.lane.b32.xlu0 %v836, 16
      %v908 = vpop.permute.xlu0 %907
      %909 = vrot.lane.b32.xlu0 %v839, 16
      %v910 = vpop.permute.xlu0 %909
      %911 = vrot.lane.b32.xlu0 %v842, 16
      %v912 = vpop.permute.xlu0 %911
      %913 = vrot.lane.b32.xlu0 %v845, 16
      %v914 = vpop.permute.xlu0 %913
      %915 = vrot.lane.b32.xlu0 %v848, 16
      %v916 = vpop.permute.xlu0 %915
      %917 = vrot.lane.b32.xlu0 %v851, 16
      %v918 = vpop.permute.xlu0 %917
      %919 = vrot.lane.b32.xlu0 %v854, 16
      %v920 = vpop.permute.xlu0 %919
      %921 = vrot.lane.b32.xlu0 %v698, 24
      %v922 = vpop.permute.xlu0 %921
      %923 = vrot.lane.b32.xlu0 %v699, 24
      %v924 = vpop.permute.xlu0 %923
      %925 = vrot.lane.b32.xlu0 %v700, 24
      %v926 = vpop.permute.xlu0 %925
      %927 = vrot.lane.b32.xlu0 %v701, 24
      %v928 = vpop.permute.xlu0 %927
      %929 = vrot.lane.b32.xlu0 %v702, 24
      %v930 = vpop.permute.xlu0 %929
      %931 = vrot.lane.b32.xlu0 %v703, 24
      %v932 = vpop.permute.xlu0 %931
      %933 = vrot.lane.b32.xlu0 %v704, 24
      %v934 = vpop.permute.xlu0 %933
      %935 = vrot.lane.b32.xlu0 %v705, 24
      %v936 = vpop.permute.xlu0 %935
      %937 = vrot.lane.b32.xlu0 %v741, 32
      %v938 = vpop.permute.xlu0 %937
      %939 = vrot.lane.b32.xlu0 %v753, 32
      %v940 = vpop.permute.xlu0 %939
      %941 = vrot.lane.b32.xlu0 %v765, 32
      %v942 = vpop.permute.xlu0 %941
      %943 = vrot.lane.b32.xlu0 %v777, 32
      %v944 = vpop.permute.xlu0 %943
      %945 = vrot.lane.b32.xlu0 %v789, 32
      %v946 = vpop.permute.xlu0 %945
      %947 = vrot.lane.b32.xlu0 %v801, 32
      %v948 = vpop.permute.xlu0 %947
      %949 = vrot.lane.b32.xlu0 %v813, 32
      %v950 = vpop.permute.xlu0 %949
      %951 = vrot.lane.b32.xlu0 %v866, 32
      %v952 = vpop.permute.xlu0 %951
      %953 = vrot.lane.b32.xlu0 %v836, 40
      %v954 = vpop.permute.xlu0 %953
      %955 = vrot.lane.b32.xlu0 %v839, 40
      %v956 = vpop.permute.xlu0 %955
      %957 = vrot.lane.b32.xlu0 %v842, 40
      %v958 = vpop.permute.xlu0 %957
      %959 = vrot.lane.b32.xlu0 %v845, 40
      %v960 = vpop.permute.xlu0 %959
      %961 = vrot.lane.b32.xlu0 %v848, 40
      %v962 = vpop.permute.xlu0 %961
      %963 = vrot.lane.b32.xlu0 %v851, 40
      %v964 = vpop.permute.xlu0 %963
      %965 = vrot.lane.b32.xlu0 %v854, 40
      %v966 = vpop.permute.xlu0 %965
      %967 = vrot.lane.b32.xlu0 %v871, 40
      %v968 = vpop.permute.xlu0 %967
      %969 = vrot.lane.b32.xlu0 %v699, 48
      %v970 = vpop.permute.xlu0 %969
      %971 = vrot.lane.b32.xlu0 %v700, 48
      %v972 = vpop.permute.xlu0 %971
      %973 = vrot.lane.b32.xlu0 %v701, 48
      %v974 = vpop.permute.xlu0 %973
      %975 = vrot.lane.b32.xlu0 %v702, 48
      %v976 = vpop.permute.xlu0 %975
      %977 = vrot.lane.b32.xlu0 %v703, 48
      %v978 = vpop.permute.xlu0 %977
      %979 = vrot.lane.b32.xlu0 %v704, 48
      %v980 = vpop.permute.xlu0 %979
      %981 = vrot.lane.b32.xlu0 %v705, 48
      %v982 = vpop.permute.xlu0 %981
      %983 = vrot.lane.b32.xlu0 %v706, 48
      %v984 = vpop.permute.xlu0 %983
      %985 = vrot.lane.b32.xlu0 %v753, 56
      %v986 = vpop.permute.xlu0 %985
      %987 = vrot.lane.b32.xlu0 %v765, 56
      %v988 = vpop.permute.xlu0 %987
      %989 = vrot.lane.b32.xlu0 %v777, 56
      %v990 = vpop.permute.xlu0 %989
      %991 = vrot.lane.b32.xlu0 %v789, 56
      %v992 = vpop.permute.xlu0 %991
      %993 = vrot.lane.b32.xlu0 %v801, 56
      %v994 = vpop.permute.xlu0 %993
      %995 = vrot.lane.b32.xlu0 %v813, 56
      %v996 = vpop.permute.xlu0 %995
      %997 = vrot.lane.b32.xlu0 %v866, 56
      %v998 = vpop.permute.xlu0 %997
      %999 = vrot.lane.b32.xlu0 %v883, 56
      %v1000 = vpop.permute.xlu0 %999
      %1001 = vrot.lane.b32.xlu0 %v839, 64
      %v1002 = vpop.permute.xlu0 %1001
      %1003 = vrot.lane.b32.xlu0 %v842, 64
      %v1004 = vpop.permute.xlu0 %1003
      %1005 = vrot.lane.b32.xlu0 %v845, 64
      %v1006 = vpop.permute.xlu0 %1005
      %1007 = vrot.lane.b32.xlu0 %v848, 64
      %v1008 = vpop.permute.xlu0 %1007
      %1009 = vrot.lane.b32.xlu0 %v851, 64
      %v1010 = vpop.permute.xlu0 %1009
      %1011 = vrot.lane.b32.xlu0 %v854, 64
      %v1012 = vpop.permute.xlu0 %1011
      %1013 = vrot.lane.b32.xlu0 %v871, 64
      %v1014 = vpop.permute.xlu0 %1013
      %1015 = vrot.lane.b32.xlu0 %v888, 64
      %v1016 = vpop.permute.xlu0 %1015
      %vm1017 = vcmask 64512
      %v1019 = vsel %vm1017, %v697, %v890
      %v1021 = vsel %vm1017, %v698, %v892
      %v1023 = vsel %vm1017, %v699, %v894
      %v1025 = vsel %vm1017, %v700, %v896
      %v1027 = vsel %vm1017, %v701, %v898
      %v1029 = vsel %vm1017, %v702, %v900
      %v1031 = vsel %vm1017, %v703, %v902
      %v1033 = vsel %vm1017, %v704, %v904
      %vm1034 = vcmask 130048
      %v1036 = vsel %vm1034, %v1019, %v906
      %v1038 = vsel %vm1034, %v1021, %v908
      %v1040 = vsel %vm1034, %v1023, %v910
      %v1042 = vsel %vm1034, %v1025, %v912
      %v1044 = vsel %vm1034, %v1027, %v914
      %v1046 = vsel %vm1034, %v1029, %v916
      %v1048 = vsel %vm1034, %v1031, %v918
      %v1050 = vsel %vm1034, %v1033, %v920
      %vm1051 = vcmask 195584
      %v1053 = vsel %vm1051, %v1036, %v922
      %v1055 = vsel %vm1051, %v1038, %v924
      %v1057 = vsel %vm1051, %v1040, %v926
      %v1059 = vsel %vm1051, %v1042, %v928
      %v1061 = vsel %vm1051, %v1044, %v930
      %v1063 = vsel %vm1051, %v1046, %v932
      %v1065 = vsel %vm1051, %v1048, %v934
      %v1067 = vsel %vm1051, %v1050, %v936
      %vm1068 = vcmask 261120
      %v1070 = vsel %vm1068, %v1053, %v938
      %v1072 = vsel %vm1068, %v1055, %v940
      %v1074 = vsel %vm1068, %v1057, %v942
      %v1076 = vsel %vm1068, %v1059, %v944
      %v1078 = vsel %vm1068, %v1061, %v946
      %v1080 = vsel %vm1068, %v1063, %v948
      %v1082 = vsel %vm1068, %v1065, %v950
      %v1084 = vsel %vm1068, %v1067, %v952
      %vm1085 = vcmask 326656
      %v1087 = vsel %vm1085, %v1070, %v954
      %v1089 = vsel %vm1085, %v1072, %v956
      %v1091 = vsel %vm1085, %v1074, %v958
      %v1093 = vsel %vm1085, %v1076, %v960
      %v1095 = vsel %vm1085, %v1078, %v962
      %v1097 = vsel %vm1085, %v1080, %v964
      %v1099 = vsel %vm1085, %v1082, %v966
      %v1101 = vsel %vm1085, %v1084, %v968
      %vm1102 = vcmask 392192
      %v1104 = vsel %vm1102, %v1087, %v970
      %v1106 = vsel %vm1102, %v1089, %v972
      %v1108 = vsel %vm1102, %v1091, %v974
      %v1110 = vsel %vm1102, %v1093, %v976
      %v1112 = vsel %vm1102, %v1095, %v978
      %v1114 = vsel %vm1102, %v1097, %v980
      %v1116 = vsel %vm1102, %v1099, %v982
      %v1118 = vsel %vm1102, %v1101, %v984
      %vm1119 = vcmask 457728
      %v1121 = vsel %vm1119, %v1104, %v986
      %v1123 = vsel %vm1119, %v1106, %v988
      %v1125 = vsel %vm1119, %v1108, %v990
      %v1127 = vsel %vm1119, %v1110, %v992
      %v1129 = vsel %vm1119, %v1112, %v994
      %v1131 = vsel %vm1119, %v1114, %v996
      %v1133 = vsel %vm1119, %v1116, %v998
      %v1135 = vsel %vm1119, %v1118, %v1000
      %vm1136 = vcmask 523264
      %v1138 = vsel %vm1136, %v1121, %v1002
      %v1140 = vsel %vm1136, %v1123, %v1004
      %v1142 = vsel %vm1136, %v1125, %v1006
      %v1144 = vsel %vm1136, %v1127, %v1008
      %v1146 = vsel %vm1136, %v1129, %v1010
      %v1148 = vsel %vm1136, %v1131, %v1012
      %v1150 = vsel %vm1136, %v1133, %v1014
      %v1152 = vsel %vm1136, %v1135, %v1016
      %v1153 = vld [vmem:[%s5] sm:$0xf]
      %v1154 = vld [vmem:[%s5 + $0x4] sm:$0xf]
      %v1155 = vld [vmem:[%s5 + $0x8] sm:$0xf]
      %v1156 = vld [vmem:[%s5 + $0xc] sm:$0xf]
      %v1157 = vld [vmem:[%s5 + $0x10] sm:$0xf]
      %v1158 = vld [vmem:[%s5 + $0x14] sm:$0xf]
      %v1159 = vld [vmem:[%s5 + $0x18] sm:$0xf]
      %v1160 = vld [vmem:[%s5 + $0x1c] sm:$0xf]
      %v1161 = vld [vmem:[%s5 + $0x20] sm:$0xf]
      %v1171 = vunpack.c.l.b16 %v1153
      %v1172 = vunpack.c.l.b16 %v1154
      %v1173 = vunpack.c.l.b16 %v1155
      %v1174 = vunpack.c.l.b16 %v1156
      %v1175 = vunpack.c.l.b16 %v1157
      %v1176 = vunpack.c.l.b16 %v1158
      %v1177 = vunpack.c.l.b16 %v1159
      %v1178 = vunpack.c.l.b16 %v1160
      %v1179 = vunpack.c.l.b16 %v1161
      %v1180 = vpack.c.b16 %v1172, %v1171
      %v1181 = vpack.c.b16 %v1174, %v1173
      %v1182 = vpack.c.b16 %v1176, %v1175
      %v1183 = vpack.c.b16 %v1178, %v1177
      %v1184 = vpack.c.b16 %v1179, %v1179
      %vm1189 = vcmask 588800
      %v1190 = vsel %vm1189, %v1138, 0
      %v1192 = vsel %vm1189, %v1140, 0
      %v1194 = vsel %vm1189, %v1142, 0
      %v1196 = vsel %vm1189, %v1144, 0
      %v1198 = vsel %vm1189, %v1146, 0
      %v1200 = vsel %vm1189, %v1148, 0
      %v1202 = vsel %vm1189, %v1150, 0
      %v1204 = vsel %vm1189, %v1152, 0
      %vm1206 = vcmask 1043456
      %v1208 = vsel %vm1206, %v1184, 0
      %1210 = vmatprep.subr.bf16.mxu0 0
      %1211 = vmatpush1.bf16.msra.mxu0 0
      %1212 = vmatprep.subr.bf16.mxu0 0
      %1213 = vmatpush1.bf16.msra.mxu0 0
      %1214 = vmatprep.subr.bf16.mxu0 0
      %1215 = vmatpush1.bf16.msra.mxu0 0
      %1216 = vmatprep.subr.bf16.mxu0 0
      %1217 = vmatpush1.bf16.msra.mxu0 %v1208
      %1218 = vmatprep.subr.bf16.mxu0 0
      %1219 = vmatpush1.bf16.msra.mxu0 %v1183
      %1220 = vmatprep.subr.bf16.mxu0 0
      %1221 = vmatpush1.bf16.msra.mxu0 %v1182
      %1222 = vmatprep.subr.bf16.mxu0 0
      %1223 = vmatpush1.bf16.msra.mxu0 %v1181
      %1224 = vmatprep.subr.bf16.mxu0 0
      %1225 = vmatpush1.bf16.msra.mxu0 %v1180
      %1226 = vmatprep.subr.bf16.mxu0 0
      %1227 = vmatpush2.bf16.msra.mxu0 0
      %1228 = vmatprep.subr.bf16.mxu0 0
      %1229 = vmatpush2.bf16.msra.mxu0 0
      %1230 = vmatprep.subr.bf16.mxu0 0
      %1231 = vmatpush2.bf16.msra.mxu0 0
      %1232 = vmatprep.subr.bf16.mxu0 0
      %1233 = vmatpush2.bf16.msra.mxu0 0
      %1234 = vmatprep.subr.bf16.mxu0 0
      %1235 = vmatpush2.bf16.msra.mxu0 0
      %1236 = vmatprep.subr.bf16.mxu0 0
      %1237 = vmatpush2.bf16.msra.mxu0 0
      %1238 = vmatprep.subr.bf16.mxu0 0
      %1239 = vmatpush2.bf16.msra.mxu0 0
      %1240 = vmatprep.subr.bf16.mxu0 0
      %1241 = vmatpush2.bf16.msra.mxu0 0
      %1242 = vmatprep.mubr.bf16.mxu0 0
      %1243 = vmatmul.mubr.bf16.gmra.mxu0 %v1190
      %v1244 = vpop.f32.mrf.mxu0
      %v1245 = vadd.f32 0.0, %v1244
      %v1246 = vpop.f32.mrf.mxu0
      %v1247 = vpop.f32.mrf.mxu0
      %v1248 = vadd.f32 0.0, %v1247
      %v1249 = vpop.f32.mrf.mxu0
      %1250 = vmatprep.mubr.bf16.mxu0 0
      %1251 = vmatmul.mubr.bf16.gmra.mxu0 %v1192
      %v1252 = vpop.f32.mrf.mxu0
      %v1253 = vadd.f32 0.0, %v1252
      %v1254 = vpop.f32.mrf.mxu0
      %v1255 = vpop.f32.mrf.mxu0
      %v1256 = vadd.f32 0.0, %v1255
      %v1257 = vpop.f32.mrf.mxu0
      %1258 = vmatprep.mubr.bf16.mxu0 0
      %1259 = vmatmul.mubr.bf16.gmra.mxu0 %v1194
      %v1260 = vpop.f32.mrf.mxu0
      %v1261 = vadd.f32 0.0, %v1260
      %v1262 = vpop.f32.mrf.mxu0
      %v1263 = vpop.f32.mrf.mxu0
      %v1264 = vadd.f32 0.0, %v1263
      %v1265 = vpop.f32.mrf.mxu0
      %1266 = vmatprep.mubr.bf16.mxu0 0
      %1267 = vmatmul.mubr.bf16.gmra.mxu0 %v1196
      %v1268 = vpop.f32.mrf.mxu0
      %v1269 = vadd.f32 0.0, %v1268
      %v1270 = vpop.f32.mrf.mxu0
      %v1271 = vpop.f32.mrf.mxu0
      %v1272 = vadd.f32 0.0, %v1271
      %v1273 = vpop.f32.mrf.mxu0
      %1274 = vmatprep.mubr.bf16.mxu0 0
      %1275 = vmatmul.mubr.bf16.gmra.mxu0 %v1198
      %v1276 = vpop.f32.mrf.mxu0
      %v1277 = vadd.f32 0.0, %v1276
      %v1278 = vpop.f32.mrf.mxu0
      %v1279 = vpop.f32.mrf.mxu0
      %v1280 = vadd.f32 0.0, %v1279
      %v1281 = vpop.f32.mrf.mxu0
      %1282 = vmatprep.mubr.bf16.mxu0 0
      %1283 = vmatmul.mubr.bf16.gmra.mxu0 %v1200
      %v1284 = vpop.f32.mrf.mxu0
      %v1285 = vadd.f32 0.0, %v1284
      %v1286 = vpop.f32.mrf.mxu0
      %v1287 = vpop.f32.mrf.mxu0
      %v1288 = vadd.f32 0.0, %v1287
      %v1289 = vpop.f32.mrf.mxu0
      %1290 = vmatprep.mubr.bf16.mxu0 0
      %1291 = vmatmul.mubr.bf16.gmra.mxu0 %v1202
      %v1292 = vpop.f32.mrf.mxu0
      %v1293 = vadd.f32 0.0, %v1292
      %v1294 = vpop.f32.mrf.mxu0
      %v1295 = vpop.f32.mrf.mxu0
      %v1296 = vadd.f32 0.0, %v1295
      %v1297 = vpop.f32.mrf.mxu0
      %1298 = vmatprep.mubr.bf16.mxu0 0
      %1299 = vmatmul.mubr.bf16.gmra.mxu0 %v1204
      %v1300 = vpop.f32.mrf.mxu0
      %v1301 = vadd.f32 0.0, %v1300
      %v1302 = vpop.f32.mrf.mxu0
      %v1303 = vpop.f32.mrf.mxu0
      %v1304 = vadd.f32 0.0, %v1303
      %v1305 = vpop.f32.mrf.mxu0
      %1306 = vdwg.mxu0
      %v1307 = vpack.c.bf16 %v1248, %v1245
      %v1308 = vpack.c.bf16 %v1256, %v1253
      %v1309 = vpack.c.bf16 %v1264, %v1261
      %v1310 = vpack.c.bf16 %v1272, %v1269
      %v1311 = vpack.c.bf16 %v1280, %v1277
      %v1312 = vpack.c.bf16 %v1288, %v1285
      %v1313 = vpack.c.bf16 %v1296, %v1293
      %v1314 = vpack.c.bf16 %v1304, %v1301
      %v1323 = vunpack.c.l.b16 %v1307
      %v1324 = vunpack.c.h.b16 %v1307
      %v1325 = vunpack.c.l.b16 %v1308
      %v1326 = vunpack.c.h.b16 %v1308
      %v1327 = vunpack.c.l.b16 %v1309
      %v1328 = vunpack.c.h.b16 %v1309
      %v1329 = vunpack.c.l.b16 %v1310
      %v1330 = vunpack.c.h.b16 %v1310
      %v1331 = vunpack.c.l.b16 %v1311
      %v1332 = vunpack.c.h.b16 %v1311
      %v1333 = vunpack.c.l.b16 %v1312
      %v1334 = vunpack.c.h.b16 %v1312
      %v1335 = vunpack.c.l.b16 %v1313
      %v1336 = vunpack.c.h.b16 %v1313
      %v1337 = vunpack.c.l.b16 %v1314
      %v1338 = vunpack.c.h.b16 %v1314
      %v1339 = vpack.c.b16 %v1323, %v1323
      %v1340 = vpack.c.b16 %v1324, %v1324
      %v1341 = vpack.c.b16 %v1325, %v1325
      %v1342 = vpack.c.b16 %v1326, %v1326
      %v1343 = vpack.c.b16 %v1327, %v1327
      %v1344 = vpack.c.b16 %v1328, %v1328
      %v1345 = vpack.c.b16 %v1329, %v1329
      %v1346 = vpack.c.b16 %v1330, %v1330
      %v1347 = vpack.c.b16 %v1331, %v1331
      %v1348 = vpack.c.b16 %v1332, %v1332
      %v1349 = vpack.c.b16 %v1333, %v1333
      %v1350 = vpack.c.b16 %v1334, %v1334
      %v1351 = vpack.c.b16 %v1335, %v1335
      %v1352 = vpack.c.b16 %v1336, %v1336
      %v1353 = vpack.c.b16 %v1337, %v1337
      %v1354 = vpack.c.b16 %v1338, %v1338
      %vm1371 = vcmask 60416
      %1372 = vst.msk [vmem:[%s439] sm:$0xf] %vm1371, %v1339
      %1373 = vst.msk [vmem:[%s439 + $0x4] sm:$0xf] %vm1371, %v1340
      %1374 = vst.msk [vmem:[%s439 + $0x8] sm:$0xf] %vm1371, %v1341
      %1375 = vst.msk [vmem:[%s439 + $0xc] sm:$0xf] %vm1371, %v1342
      %1376 = vst.msk [vmem:[%s439 + $0x10] sm:$0xf] %vm1371, %v1343
      %1377 = vst.msk [vmem:[%s439 + $0x14] sm:$0xf] %vm1371, %v1344
      %1378 = vst.msk [vmem:[%s439 + $0x18] sm:$0xf] %vm1371, %v1345
      %1379 = vst.msk [vmem:[%s439 + $0x1c] sm:$0xf] %vm1371, %v1346
      %1380 = vst.msk [vmem:[%s439 + $0x20] sm:$0xf] %vm1371, %v1347
      %1381 = vst.msk [vmem:[%s439 + $0x24] sm:$0xf] %vm1371, %v1348
      %1382 = vst.msk [vmem:[%s439 + $0x28] sm:$0xf] %vm1371, %v1349
      %1383 = vst.msk [vmem:[%s439 + $0x2c] sm:$0xf] %vm1371, %v1350
      %1384 = vst.msk [vmem:[%s439 + $0x30] sm:$0xf] %vm1371, %v1351
      %1385 = vst.msk [vmem:[%s439 + $0x34] sm:$0xf] %vm1371, %v1352
      %1386 = vst.msk [vmem:[%s439 + $0x38] sm:$0xf] %vm1371, %v1353
      %1387 = vst.msk [vmem:[%s439 + $0x3c] sm:$0xf] %vm1371, %v1354
      %v1388 = vsel %vm1017, %v1245, 0.0
      %v1389 = vsel %vm1017, %v1248, 0.0
      %v1390 = vadd.f32 %v1388, %v1389
      %v1391 = vsel %vm1017, %v1253, 0.0
      %v1392 = vadd.f32 %v1390, %v1391
      %v1393 = vsel %vm1017, %v1256, 0.0
      %v1394 = vadd.f32 %v1392, %v1393
      %v1395 = vsel %vm1017, %v1261, 0.0
      %v1396 = vadd.f32 %v1394, %v1395
      %v1397 = vsel %vm1017, %v1264, 0.0
      %v1398 = vadd.f32 %v1396, %v1397
      %v1399 = vsel %vm1017, %v1269, 0.0
      %v1400 = vadd.f32 %v1398, %v1399
      %v1401 = vsel %vm1017, %v1272, 0.0
      %v1402 = vadd.f32 %v1400, %v1401
      %v1403 = vsel %vm1017, %v1277, 0.0
      %v1404 = vadd.f32 %v1402, %v1403
      %v1405 = vsel %vm1017, %v1280, 0.0
      %v1406 = vadd.f32 %v1404, %v1405
      %v1407 = vsel %vm1017, %v1285, 0.0
      %v1408 = vadd.f32 %v1406, %v1407
      %v1409 = vsel %vm1017, %v1288, 0.0
      %v1410 = vadd.f32 %v1408, %v1409
      %v1411 = vsel %vm1017, %v1293, 0.0
      %v1412 = vadd.f32 %v1410, %v1411
      %v1413 = vsel %vm1017, %v1296, 0.0
      %v1414 = vadd.f32 %v1412, %v1413
      %v1415 = vsel %vm1017, %v1301, 0.0
      %v1416 = vadd.f32 %v1414, %v1415
      %v1417 = vsel %vm1017, %v1304, 0.0
      %v1418 = vadd.f32 %v1416, %v1417
      %v1419 = vrot.slane %v1418, 4
      %v1420 = vadd.f32 %v1418, %v1419
      %v1421 = vrot.slane %v1420, 2
      %v1422 = vadd.f32 %v1420, %v1421
      %v1423 = vrot.slane %v1422, 1
      %v1424 = vadd.f32 %v1422, %v1423
      %vm1425 = vcmask 57344
      %1426 = vst.msk [vmem:[%s447] sm:$0x1] %vm1425, %v1424
      %v1427 = vmul.f32 %v1245, %v1245
      %v1428 = vmul.f32 %v1248, %v1248
      %v1429 = vmul.f32 %v1253, %v1253
      %v1430 = vmul.f32 %v1256, %v1256
      %v1431 = vmul.f32 %v1261, %v1261
      %v1432 = vmul.f32 %v1264, %v1264
      %v1433 = vmul.f32 %v1269, %v1269
      %v1434 = vmul.f32 %v1272, %v1272
      %v1435 = vmul.f32 %v1277, %v1277
      %v1436 = vmul.f32 %v1280, %v1280
      %v1437 = vmul.f32 %v1285, %v1285
      %v1438 = vmul.f32 %v1288, %v1288
      %v1439 = vmul.f32 %v1293, %v1293
      %v1440 = vmul.f32 %v1296, %v1296
      %v1441 = vmul.f32 %v1301, %v1301
      %v1442 = vmul.f32 %v1304, %v1304
      %v1443 = vsel %vm1017, %v1427, 0.0
      %v1444 = vsel %vm1017, %v1428, 0.0
      %v1445 = vadd.f32 %v1443, %v1444
      %v1446 = vsel %vm1017, %v1429, 0.0
      %v1447 = vadd.f32 %v1445, %v1446
      %v1448 = vsel %vm1017, %v1430, 0.0
      %v1449 = vadd.f32 %v1447, %v1448
      %v1450 = vsel %vm1017, %v1431, 0.0
      %v1451 = vadd.f32 %v1449, %v1450
      %v1452 = vsel %vm1017, %v1432, 0.0
      %v1453 = vadd.f32 %v1451, %v1452
      %v1454 = vsel %vm1017, %v1433, 0.0
      %v1455 = vadd.f32 %v1453, %v1454
      %v1456 = vsel %vm1017, %v1434, 0.0
      %v1457 = vadd.f32 %v1455, %v1456
      %v1458 = vsel %vm1017, %v1435, 0.0
      %v1459 = vadd.f32 %v1457, %v1458
      %v1460 = vsel %vm1017, %v1436, 0.0
      %v1461 = vadd.f32 %v1459, %v1460
      %v1462 = vsel %vm1017, %v1437, 0.0
      %v1463 = vadd.f32 %v1461, %v1462
      %v1464 = vsel %vm1017, %v1438, 0.0
      %v1465 = vadd.f32 %v1463, %v1464
      %v1466 = vsel %vm1017, %v1439, 0.0
      %v1467 = vadd.f32 %v1465, %v1466
      %v1468 = vsel %vm1017, %v1440, 0.0
      %v1469 = vadd.f32 %v1467, %v1468
      %v1470 = vsel %vm1017, %v1441, 0.0
      %v1471 = vadd.f32 %v1469, %v1470
      %v1472 = vsel %vm1017, %v1442, 0.0
      %v1473 = vadd.f32 %v1471, %v1472
      %v1474 = vrot.slane %v1473, 4
      %v1475 = vadd.f32 %v1473, %v1474
      %v1476 = vrot.slane %v1475, 2
      %v1477 = vadd.f32 %v1475, %v1476
      %v1478 = vrot.slane %v1477, 1
      %v1479 = vadd.f32 %v1477, %v1478
      %1480 = vst.msk [vmem:[%s454] sm:$0x1] %vm1425, %v1479
      %s1481 = smul.u32 8, %s25
      %p1482 = scmp.lt.s32.totalorder %s24, 1
      %s1483 = scalar_select %p1482, %s24, 1
      %p1484 = scmp.lt.s32.totalorder %s1481, 15
      %s1485 = scalar_select %p1484, %s1481, 15
      %s1486 = smul.addr %s1485, 2
      %s1487 = smul.addr %s1483, 32
      %s1488 = sadd.s32 %s1486, %s1487
      %s1489 = smul.addr %s1488, 4
      %s1490 = scalar_lea.vmem %s6, %s1489
      %p1491 = scmp.lt.s32.totalorder %s24, 1
      %s1492 = scalar_select %p1491, %s24, 1
      %p1493 = scmp.lt.s32.totalorder %s25, 1
      %s1494 = scalar_select %p1493, %s25, 1
      %s1495 = smul.addr %s1492, 2
      %s1496 = sadd.s32 %s1494, %s1495
      %s1497 = scalar_lea.vmem %s7, %s1496
      %p1498 = scmp.lt.s32.totalorder %s24, 1
      %s1499 = scalar_select %p1498, %s24, 1
      %p1500 = scmp.lt.s32.totalorder %s25, 1
      %s1501 = scalar_select %p1500, %s25, 1
      %s1502 = smul.addr %s1499, 2
      %s1503 = sadd.s32 %s1501, %s1502
      %s1504 = scalar_lea.vmem %s8, %s1503
      // Predicated region
      $region45: #{decoder_block_forward.6} parent=43 // pred_check
        %p1505 = pneg %p199
      $region46: #{decoder_block_forward.6} parent=43 // pred_check_branch
        %1507 = sbr.rel (%p1505) target = $region48
      $region47: #{decoder_block_forward.6} parent=43 // pred_region
        %s1508 = smul.u32 8, %s25
      $region48: #{decoder_block_forward.6} parent=43 // pred_fallthru
        _
      // Predicated region
      $region49: #{decoder_block_forward.6} parent=43 // pred_check
        %p1509 = pneg %p227
      $region50: #{decoder_block_forward.6} parent=43 // pred_check_branch
        %1511 = sbr.rel (%p1509) target = $region52
      $region51: #{decoder_block_forward.6} parent=43 // pred_region
        _
      $region52: #{decoder_block_forward.6} parent=43 // pred_fallthru
        _
      // Predicated region
      $region53: #{decoder_block_forward.6} parent=43 // pred_check
        %p1512 = pneg %p255
      $region54: #{decoder_block_forward.6} parent=43 // pred_check_branch
        %1514 = sbr.rel (%p1512) target = $region56
      $region55: #{decoder_block_forward.6} parent=43 // pred_region
        _
      $region56: #{decoder_block_forward.6} parent=43 // pred_fallthru
        _
    $region44: #{decoder_block_forward.6} parent=5 // pred_fallthru
      _
    %p1515 = scmp.le.s32.totalorder 2, %s15
    // Predicated region
    $region57: #{decoder_block_forward.6} parent=5 // pred_check
      %p1516 = pneg %p1515
    $region58: #{decoder_block_forward.6} parent=5 // pred_check_branch
      %1518 = sbr.rel (%p1516) target = $region60
    $region59: #{decoder_block_forward.6} parent=5 // pred_region
      %s1519 = ssub.s32 %s15, 2
      // Predicated region
      $region61: #{decoder_block_forward.6} parent=59 // pred_check
        %p1520 = pneg %p205
      $region62: #{decoder_block_forward.6} parent=59 // pred_check_branch
        %1522 = sbr.rel (%p1520) target = $region64
      $region63: #{decoder_block_forward.6} parent=59 // pred_region
        %s1523 = smul.u32 8, %s27
        %p1524 = scmp.lt.s32.totalorder %s26, 1
        %s1525 = scalar_select %p1524, %s26, 1
        %p1526 = scmp.lt.s32.totalorder %s1523, 15
        %s1527 = scalar_select %p1526, %s1523, 15
        %s1528 = smul.addr %s1527, 2
        %s1529 = smul.addr %s1525, 32
        %s1530 = sadd.s32 %s1528, %s1529
        %s1531 = smul.addr %s1530, 4
        %s1532 = scalar_lea.vmem %s6, %s1531
      $region64: #{decoder_block_forward.6} parent=59 // pred_fallthru
        _
      // Predicated region
      $region65: #{decoder_block_forward.6} parent=59 // pred_check
        %p1533 = pneg %p233
      $region66: #{decoder_block_forward.6} parent=59 // pred_check_branch
        %1535 = sbr.rel (%p1533) target = $region68
      $region67: #{decoder_block_forward.6} parent=59 // pred_region
        %p1536 = scmp.lt.s32.totalorder %s26, 1
        %s1537 = scalar_select %p1536, %s26, 1
        %p1538 = scmp.lt.s32.totalorder %s27, 1
        %s1539 = scalar_select %p1538, %s27, 1
        %s1540 = smul.addr %s1537, 2
        %s1541 = sadd.s32 %s1539, %s1540
        %s1542 = scalar_lea.vmem %s7, %s1541
      $region68: #{decoder_block_forward.6} parent=59 // pred_fallthru
        _
      // Predicated region
      $region69: #{decoder_block_forward.6} parent=59 // pred_check
        %p1543 = pneg %p261
      $region70: #{decoder_block_forward.6} parent=59 // pred_check_branch
        %1545 = sbr.rel (%p1543) target = $region72
      $region71: #{decoder_block_forward.6} parent=59 // pred_region
        %p1546 = scmp.lt.s32.totalorder %s26, 1
        %s1547 = scalar_select %p1546, %s26, 1
        %p1548 = scmp.lt.s32.totalorder %s27, 1
        %s1549 = scalar_select %p1548, %s27, 1
        %s1550 = smul.addr %s1547, 2
        %s1551 = sadd.s32 %s1549, %s1550
        %s1552 = scalar_lea.vmem %s8, %s1551
      $region72: #{decoder_block_forward.6} parent=59 // pred_fallthru
        _
    $region60: #{decoder_block_forward.6} parent=5 // pred_fallthru
      _
  $region6: #{decoder_block_forward.6} parent=0 // loop_footer
    %s19 = sadd.s32 1, %s15
  $region7: #{decoder_block_forward.6} parent=0 // loop_footer_branch
    %14 = sbr.rel target = $region3
  $region8: #{decoder_block_forward.6} parent=0 // loop_exit
    _

</llo_original>
